<compile_context>
chip_gen: v7x
topology: tpu7x:2x2x1
jax: 0.10.0
libtpu: 0.0.40
codegen_flags: <defaults>
</compile_context>

<pallas_src>
import jax
import jax.numpy as jnp
from jax.experimental import pallas as pl
from jax.experimental.pallas import tpu as pltpu

# ---- small, module-consistent hyperparameters -------------------------------
MAX_FEATURES  = 100   # vocab size
EMBED_SIZE    = 32
LSTM_UNITS    = 32
GRU_UNITS     = 32
HIDDEN_UNITS  = 32
NUM_AUX       = 6
FEATURES_SIZE = 0     # forward() never concatenates `features`; linear_out only
                      # type-checks when features_size == 0, so we reproduce that.
BATCH = 2
SEQ   = 8
# TODO(synk): `features` is accepted but unused, exactly as in the PyTorch forward.


# ------------------------------ Pallas kernel --------------------------------
def lstm_gru_kernel(
    emb_ref,                                   # [T*B, 2E]  [emb(s) | emb(T-1-s)]
    lwih_ref, lwhh_ref, lb_ref,                # LSTM packed (g-gate cols pre-scaled by 2)
    gwih_ref, gwhh_ref, gbih_ref, gbhhn_ref,   # GRU packed (r/z b_hh folded into b_ih)
    w1_ref, b1_ref, wout_ref, bout_ref,        # dense head ([linear_out|linear_aux])
    out_ref,                                   # [B, 1+NUM_AUX]
    gi_l_sc, gi_g_sc,                          # VMEM scratch: hoisted input-gate slabs
):
    H, G, T, B = LSTM_UNITS, GRU_UNITS, SEQ, BATCH

    # ---- hoisted LSTM input gates: one [T*B,2E]@[2E,8H] MXU pass (both dirs) --
    gi_l_sc[...] = (jnp.dot(emb_ref[...], lwih_ref[...],
                            preferred_element_type=jnp.float32) + lb_ref[...])

    # ---- fused bidirectional LSTM, fully unrolled, state carried in vregs -----
    # hidden/cell lane layout: [fwd | bwd]; gate columns [i_f i_b f_f f_b o_f o_b g_f g_b]
    h = jnp.zeros((B, 2 * H), jnp.float32)
    c = jnp.zeros((B, 2 * H), jnp.float32)
    hs = []                                    # per-step outputs stay in vregs
    for s in range(T):                         # fwd at time s, bwd at time T-1-s
        gates = gi_l_sc[s * B:(s + 1) * B, :] + jnp.dot(
            h, lwhh_ref[...], preferred_element_type=jnp.float32)
        sig = jax.nn.sigmoid(gates)            # ONE EUP pass over all 8H lanes
        g_t = 2.0 * sig[:, 6 * H:8 * H] - 1.0  # tanh(x)=2*sigmoid(2x)-1 (cols pre-scaled)
        c = sig[:, 2 * H:4 * H] * c + sig[:, 0:2 * H] * g_t
        h = sig[:, 4 * H:6 * H] * jnp.tanh(c)
        hs.append(h)

    # ---- GRU input slab built AFTER the loop with full-lane writes ------------
    # row block s = [h(step s) | h(step T-1-s)]
    #             = [h_f(s) | h_b(T-1-s) | h_f(T-1-s) | h_b(s)]  (matches gwih rows)
    x_full = jnp.concatenate(
        [jnp.concatenate([hs[s], hs[T - 1 - s]], axis=1) for s in range(T)], axis=0)

    # ---- hoisted GRU input gates: one [T*B,4H]@[4H,6G] MXU pass (both dirs) ---
    gi_g_sc[...] = (jnp.dot(x_full, gwih_ref[...],
                            preferred_element_type=jnp.float32) + gbih_ref[...])

    # ---- fused bidirectional GRU; avg/max pooling accumulated in-loop ---------
    # gate columns [r_f r_b z_f z_b n_f n_b]; hidden lane layout [fwd | bwd]
    bhh_n = jnp.broadcast_to(gbhhn_ref[...], (B, 2 * G))   # hoisted, broadcast once
    hg = jnp.zeros((B, 2 * G), jnp.float32)
    sum_acc = jnp.zeros((B, 2 * G), jnp.float32)
    max_acc = jnp.full((B, 2 * G), -jnp.inf, jnp.float32)
    for s in range(T):                         # fwd at time s, bwd at time T-1-s
        gi = gi_g_sc[s * B:(s + 1) * B, :]
        gh = jnp.dot(hg, gwhh_ref[...], preferred_element_type=jnp.float32)
        rz = jax.nn.sigmoid(gi[:, 0:4 * G] + gh[:, 0:4 * G])   # r, z in one EUP pass
        n = jnp.tanh(gi[:, 4 * G:6 * G] + rz[:, 0:2 * G] * (gh[:, 4 * G:6 * G] + bhh_n))
        z = rz[:, 2 * G:4 * G]
        hg = (1.0 - z) * n + z * hg
        sum_acc = sum_acc + hg
        max_acc = jnp.maximum(max_acc, hg)

    # ---- head: h_conc = [hn.view(-1, 2G) | avg_pool | max_pool], all in vregs -
    # hg == [hn_fwd | hn_bwd]; reproduce torch's batch-mixing .view on [2, B, G].
    rows = []
    for k in range(B):
        parts = []
        for half in range(2):
            p = 2 * k + half                   # flat (dir, batch) pair index
            d, b = p // B, p % B
            parts.append(hg[b:b + 1, d * G:(d + 1) * G])
        rows.append(jnp.concatenate(parts, axis=1))
    hn_mixed = jnp.concatenate(rows, axis=0)                    # [B, 2G]
    h_conc = jnp.concatenate([hn_mixed, sum_acc * (1.0 / T), max_acc], axis=1)

    h1 = jnp.maximum(
        jnp.dot(h_conc, w1_ref[...], preferred_element_type=jnp.float32)
        + b1_ref[...], 0.0)                                     # F.relu(linear1)
    out_ref[...] = (jnp.dot(h1, wout_ref[...], preferred_element_type=jnp.float32)
                    + bout_ref[...])                            # [linear_out|linear_aux]


# ------------------------------ parameters -----------------------------------
def init_params(key):
    ks = iter(jax.random.split(key, 40))

    def nrm(shape, scale):
        return scale * jax.random.normal(next(ks), shape, dtype=jnp.float32)

    H, G, E = LSTM_UNITS, GRU_UNITS, EMBED_SIZE
    P = {"emb": nrm((MAX_FEATURES, E), 0.5)}
    for d in ("f", "b"):
        P[f"lstm_wih_{d}"] = nrm((4 * H, E), 0.15)
        P[f"lstm_whh_{d}"] = nrm((4 * H, H), 0.15)
        P[f"lstm_bih_{d}"] = nrm((4 * H,), 0.1)
        P[f"lstm_bhh_{d}"] = nrm((4 * H,), 0.1)
        P[f"gru_wih_{d}"] = nrm((3 * G, 2 * H), 0.15)
        P[f"gru_whh_{d}"] = nrm((3 * G, G), 0.15)
        P[f"gru_bih_{d}"] = nrm((3 * G,), 0.1)
        P[f"gru_bhh_{d}"] = nrm((3 * G,), 0.1)
    P["w1"] = nrm((HIDDEN_UNITS, 6 * G), 0.15)
    P["b1"] = nrm((HIDDEN_UNITS,), 0.1)
    P["w_out"] = nrm((1, HIDDEN_UNITS + FEATURES_SIZE), 0.15)
    P["b_out"] = nrm((1,), 0.1)
    P["w_aux"] = nrm((NUM_AUX, HIDDEN_UNITS + FEATURES_SIZE), 0.15)
    P["b_aux"] = nrm((NUM_AUX,), 0.1)
    return P


# -------------- host-side weight packing (done ONCE, not per call) ------------
def pack_weights(P):
    H, G = LSTM_UNITS, GRU_UNITS

    def interleave_cols(W, which, n_gates, width):
        # Place W's per-gate column blocks into the fwd (which=0) or bwd (which=1)
        # interleaved slots, zeros elsewhere.
        z = jnp.zeros((W.shape[0], width), W.dtype)
        blocks = []
        for g in range(n_gates):
            gb = W[:, g * width:(g + 1) * width]
            blocks.extend([gb, z] if which == 0 else [z, gb])
        return jnp.concatenate(blocks, axis=1)

    def reorder_ifog(Wt):                     # [rows, 4H] (i,f,g,o) -> (i,f,o,g)
        return jnp.concatenate([Wt[:, 0:H], Wt[:, H:2 * H],
                                Wt[:, 3 * H:4 * H], Wt[:, 2 * H:3 * H]], axis=1)

    # LSTM: block-diag over [emb_fwd | emb_rev] rows, interleaved gate columns.
    lwih = jnp.concatenate([
        interleave_cols(reorder_ifog(P["lstm_wih_f"].T), 0, 4, H),
        interleave_cols(reorder_ifog(P["lstm_wih_b"].T), 1, 4, H)], axis=0)   # [2E, 8H]
    lwhh = jnp.concatenate([
        interleave_cols(reorder_ifog(P["lstm_whh_f"].T), 0, 4, H),
        interleave_cols(reorder_ifog(P["lstm_whh_b"].T), 1, 4, H)], axis=0)   # [2H, 8H]
    lb = (interleave_cols(reorder_ifog((P["lstm_bih_f"] + P["lstm_bhh_f"])[None, :]), 0, 4, H)
          + interleave_cols(reorder_ifog((P["lstm_bih_b"] + P["lstm_bhh_b"])[None, :]), 1, 4, H))

    # Pre-scale g-gate columns by 2 so the kernel can recover tanh(x)=2*sigmoid(2x)-1
    # with a single sigmoid pass over the whole gate slab.
    gate_scale = jnp.concatenate([jnp.ones((1, 6 * H), jnp.float32),
                                  jnp.full((1, 2 * H), 2.0, jnp.float32)], axis=1)
    lwih = lwih * gate_scale
    lwhh = lwhh * gate_scale
    lb = lb * gate_scale

    # GRU: rows match x slab columns [h_f(s) | h_b(T-1-s) | h_f(T-1-s) | h_b(s)].
    wf_t, wb_t = P["gru_wih_f"].T, P["gru_wih_b"].T           # [2H, 3G]
    gwih = jnp.concatenate([
        interleave_cols(wf_t[0:H], 0, 3, G),
        interleave_cols(wb_t[H:2 * H], 1, 3, G),
        interleave_cols(wb_t[0:H], 1, 3, G),
        interleave_cols(wf_t[H:2 * H], 0, 3, G)], axis=0)     # [4H, 6G]
    gwhh = jnp.concatenate([
        interleave_cols(P["gru_whh_f"].T, 0, 3, G),
        interleave_cols(P["gru_whh_b"].T, 1, 3, G)], axis=0)  # [2G, 6G]
    gbih_i = (interleave_cols(P["gru_bih_f"][None, :], 0, 3, G)
              + interleave_cols(P["gru_bih_b"][None, :], 1, 3, G))            # [1, 6G]
    gbhh_i = (interleave_cols(P["gru_bhh_f"][None, :], 0, 3, G)
              + interleave_cols(P["gru_bhh_b"][None, :], 1, 3, G))            # [1, 6G]
    # Fold the r/z lanes of b_hh into b_ih (they enter the same sigmoid); keep only
    # the n-gate lanes of b_hh (they sit inside the r* multiply).
    gbih = gbih_i.at[:, 0:4 * G].add(gbhh_i[:, 0:4 * G])
    gbhh_n = gbhh_i[:, 4 * G:6 * G]                                           # [1, 2G]

    w1 = P["w1"].T                                            # [6G, hidden]
    b1 = P["b1"][None, :]
    wout = jnp.concatenate([P["w_out"].T, P["w_aux"].T], axis=1)   # [hidden, 1+NUM_AUX]
    bout = jnp.concatenate([P["b_out"], P["b_aux"]])[None, :]

    return {
        "emb": P["emb"].astype(jnp.float32),
        "lwih": lwih, "lwhh": lwhh, "lb": lb,
        "gwih": gwih, "gwhh": gwhh, "gbih": gbih, "gbhh_n": gbhh_n,
        "w1": w1, "b1": b1, "wout": wout, "bout": bout,
    }


# ------------------------------ wrapper (jitted) -------------------------------
def lstm_gru_forward(x_ids, features, W):
    del features  # unused by the PyTorch forward (FEATURES_SIZE == 0)
    B, T = x_ids.shape
    H, G, E = LSTM_UNITS, GRU_UNITS, EMBED_SIZE

    emb = jnp.take(W["emb"], x_ids, axis=0)                       # [B, T, E] (frozen embedding)
    emb_t = jnp.transpose(emb, (1, 0, 2))                         # time-major [T, B, E]
    emb_cat = jnp.concatenate([emb_t.reshape(T * B, E),
                               emb_t[::-1].reshape(T * B, E)], axis=1)   # [T*B, 2E]

    ins = [emb_cat, W["lwih"], W["lwhh"], W["lb"],
           W["gwih"], W["gwhh"], W["gbih"], W["gbhh_n"],
           W["w1"], W["b1"], W["wout"], W["bout"]]

    return pl.pallas_call(
        lstm_gru_kernel,
        out_shape=jax.ShapeDtypeStruct((B, 1 + NUM_AUX), jnp.float32),
        in_specs=[pl.BlockSpec(memory_space=pltpu.MemorySpace.VMEM)] * len(ins),
        out_specs=pl.BlockSpec(memory_space=pltpu.MemorySpace.VMEM),
        scratch_shapes=[
            pltpu.VMEM((T * B, 8 * H), jnp.float32),   # hoisted LSTM input gates
            pltpu.VMEM((T * B, 6 * G), jnp.float32),   # hoisted GRU input gates
        ],
        compiler_params=pltpu.CompilerParams(vmem_limit_bytes=32 * 1024 * 1024),
    )(*ins)


# ------------------------------ pure-JAX reference ----------------------------
def reference_forward(x_ids, P):
    H, G = LSTM_UNITS, GRU_UNITS
    emb = P["emb"][x_ids]                               # [B, T, E]
    B = emb.shape[0]

    def run_lstm(xs, wih, whh, bih, bhh):
        def step(carry, x):
            h, c = carry
            g = x @ wih.T + bih + h @ whh.T + bhh
            i = jax.nn.sigmoid(g[:, 0:H])
            f = jax.nn.sigmoid(g[:, H:2 * H])
            gg = jnp.tanh(g[:, 2 * H:3 * H])
            o = jax.nn.sigmoid(g[:, 3 * H:4 * H])
            c = f * c + i * gg
            h = o * jnp.tanh(c)
            return (h, c), h
        init = (jnp.zeros((B, H), jnp.float32), jnp.zeros((B, H), jnp.float32))
        _, hs = jax.lax.scan(step, init, jnp.swapaxes(xs, 0, 1))
        return jnp.swapaxes(hs, 0, 1)

    h_f = run_lstm(emb, P["lstm_wih_f"], P["lstm_whh_f"], P["lstm_bih_f"], P["lstm_bhh_f"])
    h_b = run_lstm(emb[:, ::-1], P["lstm_wih_b"], P["lstm_whh_b"],
                   P["lstm_bih_b"], P["lstm_bhh_b"])[:, ::-1]
    h_lstm = jnp.concatenate([h_f, h_b], axis=2)

    def run_gru(xs, wih, whh, bih, bhh):
        def step(h, x):
            gi = x @ wih.T + bih
            gh = h @ whh.T + bhh
            r = jax.nn.sigmoid(gi[:, 0:G] + gh[:, 0:G])
            z = jax.nn.sigmoid(gi[:, G:2 * G] + gh[:, G:2 * G])
            n = jnp.tanh(gi[:, 2 * G:3 * G] + r * gh[:, 2 * G:3 * G])
            h = (1.0 - z) * n + z * h
            return h, h
        hT, hs = jax.lax.scan(step, jnp.zeros((B, G), jnp.float32), jnp.swapaxes(xs, 0, 1))
        return jnp.swapaxes(hs, 0, 1), hT

    g_f, hn_f = run_gru(h_lstm, P["gru_wih_f"], P["gru_whh_f"], P["gru_bih_f"], P["gru_bhh_f"])
    g_b_r, hn_b = run_gru(h_lstm[:, ::-1], P["gru_wih_b"], P["gru_whh_b"],
                          P["gru_bih_b"], P["gru_bhh_b"])
    g_b = g_b_r[:, ::-1]
    h_gru = jnp.concatenate([g_f, g_b], axis=2)

    avg = jnp.mean(h_gru, axis=1)
    mx = jnp.max(h_gru, axis=1)
    hn = jnp.stack([hn_f, hn_b], axis=0).reshape(-1, 2 * G)   # torch .view(-1, 2G)
    h_conc = jnp.concatenate([hn, avg, mx], axis=1)
    h1 = jax.nn.relu(h_conc @ P["w1"].T + P["b1"])
    res = h1 @ P["w_out"].T + P["b_out"]
    aux = h1 @ P["w_aux"].T + P["b_aux"]
    return jnp.concatenate([res, aux], axis=1)


# ------------------------------ main ------------------------------------------
if __name__ == "__main__":
    key = jax.random.PRNGKey(0)
    kp, kx = jax.random.split(key)
    P = init_params(kp)
    W = pack_weights(P)            # heavy packing done once, outside the call path
    x = jax.random.randint(kx, (BATCH, SEQ), 0, MAX_FEATURES, dtype=jnp.int32)
    features = jnp.zeros((BATCH, FEATURES_SIZE), jnp.float32)  # unused (as in torch)

    fwd = jax.jit(lstm_gru_forward)
    out = jax.block_until_ready(fwd(x, features, W))

    ref = reference_forward(x, P)
    assert out.shape == (BATCH, 1 + NUM_AUX)
    assert bool(jnp.allclose(out, ref, rtol=5e-3, atol=5e-3)), (out, ref)

    print("KERNEL_OK")
</pallas_src>

<mosaic_0001>
module attributes {stable_mosaic.version = 11 : i64} {
  func.func @lstm_gru_kernel(%arg0: memref<16x64xf32, #tpu.memory_space<vmem>>, %arg1: memref<64x256xf32, #tpu.memory_space<vmem>>, %arg2: memref<64x256xf32, #tpu.memory_space<vmem>>, %arg3: memref<1x256xf32, #tpu.memory_space<vmem>>, %arg4: memref<128x192xf32, #tpu.memory_space<vmem>>, %arg5: memref<64x192xf32, #tpu.memory_space<vmem>>, %arg6: memref<1x192xf32, #tpu.memory_space<vmem>>, %arg7: memref<1x64xf32, #tpu.memory_space<vmem>>, %arg8: memref<192x32xf32, #tpu.memory_space<vmem>>, %arg9: memref<1x32xf32, #tpu.memory_space<vmem>>, %arg10: memref<32x7xf32, #tpu.memory_space<vmem>>, %arg11: memref<1x7xf32, #tpu.memory_space<vmem>>, %arg12: memref<2x7xf32, #tpu.memory_space<vmem>>, %arg13: memref<16x256xf32, #tpu.memory_space<vmem>>, %arg14: memref<16x192xf32, #tpu.memory_space<vmem>>) attributes {dimension_semantics = [], scalar_prefetch = 0 : i64, scratch_operands = 2 : i64, tpu.core_type = #tpu.core_type<tc>} {
    %c0 = arith.constant 0 : index
    %c0_0 = arith.constant 0 : index
    %0 = vector.load %arg0[%c0, %c0_0] : memref<16x64xf32, #tpu.memory_space<vmem>>, vector<16x64xf32>
    %c0_1 = arith.constant 0 : index
    %c0_2 = arith.constant 0 : index
    %1 = vector.load %arg1[%c0_1, %c0_2] : memref<64x256xf32, #tpu.memory_space<vmem>>, vector<64x256xf32>
    %cst = arith.constant dense<0.000000e+00> : vector<16x256xf32>
    %2 = tpu.matmul %0, %1, %cst {dimension_numbers = #tpu.dot_dimension_numbers<[1], [0], [0], [1], [0, 0, 1, 1], [], []>} : vector<16x64xf32>, vector<64x256xf32>, vector<16x256xf32> -> vector<16x256xf32>
    %c0_3 = arith.constant 0 : index
    %c0_4 = arith.constant 0 : index
    %3 = vector.load %arg3[%c0_3, %c0_4] : memref<1x256xf32, #tpu.memory_space<vmem>>, vector<1x256xf32>
    %4 = vector.broadcast %3 : vector<1x256xf32> to vector<16x256xf32>
    %5 = arith.addf %2, %4 : vector<16x256xf32>
    %c0_5 = arith.constant 0 : index
    %c0_6 = arith.constant 0 : index
    %6 = vector.load %arg13[%c0_5, %c0_6] : memref<16x256xf32, #tpu.memory_space<vmem>>, vector<16x256xf32>
    tpu.vector_store %arg13[%c0_5, %c0_6], %5 {strides = array<i32>} : memref<16x256xf32, #tpu.memory_space<vmem>>, vector<16x256xf32>,
    %cst_7 = arith.constant 0.000000e+00 : f32
    %7 = vector.broadcast %cst_7 : f32 to vector<2x64xf32>
    %cst_8 = arith.constant 0.000000e+00 : f32
    %8 = vector.broadcast %cst_8 : f32 to vector<2x64xf32>
    %c0_9 = arith.constant 0 : index
    %c0_10 = arith.constant 0 : index
    %9 = vector.load %arg13[%c0_9, %c0_10] : memref<16x256xf32, #tpu.memory_space<vmem>>, vector<2x256xf32>
    %c0_11 = arith.constant 0 : index
    %c0_12 = arith.constant 0 : index
    %10 = vector.load %arg2[%c0_11, %c0_12] : memref<64x256xf32, #tpu.memory_space<vmem>>, vector<64x256xf32>
    %cst_13 = arith.constant dense<0.000000e+00> : vector<2x256xf32>
    %11 = tpu.matmul %7, %10, %cst_13 {dimension_numbers = #tpu.dot_dimension_numbers<[1], [0], [0], [1], [0, 0, 1, 1], [], []>} : vector<2x64xf32>, vector<64x256xf32>, vector<2x256xf32> -> vector<2x256xf32>
    %12 = arith.addf %9, %11 : vector<2x256xf32>
    %13 = arith.negf %12 : vector<2x256xf32>
    %14 = math.exp %13 : vector<2x256xf32>
    %cst_14 = arith.constant 1.000000e+00 : f32
    %15 = vector.broadcast %cst_14 : f32 to vector<2x256xf32>
    %16 = arith.addf %15, %14 : vector<2x256xf32>
    %17 = arith.divf %15, %16 : vector<2x256xf32>
    %18 = vector.extract_strided_slice %17 {offsets = [0, 192], sizes = [2, 64], strides = [1, 1]} : vector<2x256xf32> to vector<2x64xf32>
    %cst_15 = arith.constant 2.000000e+00 : f32
    %19 = vector.broadcast %cst_15 : f32 to vector<2x64xf32>
    %20 = arith.mulf %19, %18 : vector<2x64xf32>
    %cst_16 = arith.constant 1.000000e+00 : f32
    %21 = vector.broadcast %cst_16 : f32 to vector<2x64xf32>
    %22 = arith.subf %20, %21 : vector<2x64xf32>
    %23 = vector.extract_strided_slice %17 {offsets = [0, 64], sizes = [2, 64], strides = [1, 1]} : vector<2x256xf32> to vector<2x64xf32>
    %24 = arith.mulf %23, %8 : vector<2x64xf32>
    %25 = vector.extract_strided_slice %17 {offsets = [0, 0], sizes = [2, 64], strides = [1, 1]} : vector<2x256xf32> to vector<2x64xf32>
    %26 = arith.mulf %25, %22 : vector<2x64xf32>
    %27 = arith.addf %24, %26 : vector<2x64xf32>
    %28 = vector.extract_strided_slice %17 {offsets = [0, 128], sizes = [2, 64], strides = [1, 1]} : vector<2x256xf32> to vector<2x64xf32>
    %29 = math.tanh %27 : vector<2x64xf32>
    %30 = arith.mulf %28, %29 : vector<2x64xf32>
    %c2 = arith.constant 2 : index
    %c0_17 = arith.constant 0 : index
    %31 = vector.load %arg13[%c2, %c0_17] : memref<16x256xf32, #tpu.memory_space<vmem>>, vector<2x256xf32>
    %c0_18 = arith.constant 0 : index
    %c0_19 = arith.constant 0 : index
    %32 = vector.load %arg2[%c0_18, %c0_19] : memref<64x256xf32, #tpu.memory_space<vmem>>, vector<64x256xf32>
    %cst_20 = arith.constant dense<0.000000e+00> : vector<2x256xf32>
    %33 = tpu.matmul %30, %32, %cst_20 {dimension_numbers = #tpu.dot_dimension_numbers<[1], [0], [0], [1], [0, 0, 1, 1], [], []>} : vector<2x64xf32>, vector<64x256xf32>, vector<2x256xf32> -> vector<2x256xf32>
    %34 = arith.addf %31, %33 : vector<2x256xf32>
    %35 = arith.negf %34 : vector<2x256xf32>
    %36 = math.exp %35 : vector<2x256xf32>
    %cst_21 = arith.constant 1.000000e+00 : f32
    %37 = vector.broadcast %cst_21 : f32 to vector<2x256xf32>
    %38 = arith.addf %37, %36 : vector<2x256xf32>
    %39 = arith.divf %37, %38 : vector<2x256xf32>
    %40 = vector.extract_strided_slice %39 {offsets = [0, 192], sizes = [2, 64], strides = [1, 1]} : vector<2x256xf32> to vector<2x64xf32>
    %cst_22 = arith.constant 2.000000e+00 : f32
    %41 = vector.broadcast %cst_22 : f32 to vector<2x64xf32>
    %42 = arith.mulf %41, %40 : vector<2x64xf32>
    %cst_23 = arith.constant 1.000000e+00 : f32
    %43 = vector.broadcast %cst_23 : f32 to vector<2x64xf32>
    %44 = arith.subf %42, %43 : vector<2x64xf32>
    %45 = vector.extract_strided_slice %39 {offsets = [0, 64], sizes = [2, 64], strides = [1, 1]} : vector<2x256xf32> to vector<2x64xf32>
    %46 = arith.mulf %45, %27 : vector<2x64xf32>
    %47 = vector.extract_strided_slice %39 {offsets = [0, 0], sizes = [2, 64], strides = [1, 1]} : vector<2x256xf32> to vector<2x64xf32>
    %48 = arith.mulf %47, %44 : vector<2x64xf32>
    %49 = arith.addf %46, %48 : vector<2x64xf32>
    %50 = vector.extract_strided_slice %39 {offsets = [0, 128], sizes = [2, 64], strides = [1, 1]} : vector<2x256xf32> to vector<2x64xf32>
    %51 = math.tanh %49 : vector<2x64xf32>
    %52 = arith.mulf %50, %51 : vector<2x64xf32>
    %c4 = arith.constant 4 : index
    %c0_24 = arith.constant 0 : index
    %53 = vector.load %arg13[%c4, %c0_24] : memref<16x256xf32, #tpu.memory_space<vmem>>, vector<2x256xf32>
    %c0_25 = arith.constant 0 : index
    %c0_26 = arith.constant 0 : index
    %54 = vector.load %arg2[%c0_25, %c0_26] : memref<64x256xf32, #tpu.memory_space<vmem>>, vector<64x256xf32>
    %cst_27 = arith.constant dense<0.000000e+00> : vector<2x256xf32>
    %55 = tpu.matmul %52, %54, %cst_27 {dimension_numbers = #tpu.dot_dimension_numbers<[1], [0], [0], [1], [0, 0, 1, 1], [], []>} : vector<2x64xf32>, vector<64x256xf32>, vector<2x256xf32> -> vector<2x256xf32>
    %56 = arith.addf %53, %55 : vector<2x256xf32>
    %57 = arith.negf %56 : vector<2x256xf32>
    %58 = math.exp %57 : vector<2x256xf32>
    %cst_28 = arith.constant 1.000000e+00 : f32
    %59 = vector.broadcast %cst_28 : f32 to vector<2x256xf32>
    %60 = arith.addf %59, %58 : vector<2x256xf32>
    %61 = arith.divf %59, %60 : vector<2x256xf32>
    %62 = vector.extract_strided_slice %61 {offsets = [0, 192], sizes = [2, 64], strides = [1, 1]} : vector<2x256xf32> to vector<2x64xf32>
    %cst_29 = arith.constant 2.000000e+00 : f32
    %63 = vector.broadcast %cst_29 : f32 to vector<2x64xf32>
    %64 = arith.mulf %63, %62 : vector<2x64xf32>
    %cst_30 = arith.constant 1.000000e+00 : f32
    %65 = vector.broadcast %cst_30 : f32 to vector<2x64xf32>
    %66 = arith.subf %64, %65 : vector<2x64xf32>
    %67 = vector.extract_strided_slice %61 {offsets = [0, 64], sizes = [2, 64], strides = [1, 1]} : vector<2x256xf32> to vector<2x64xf32>
    %68 = arith.mulf %67, %49 : vector<2x64xf32>
    %69 = vector.extract_strided_slice %61 {offsets = [0, 0], sizes = [2, 64], strides = [1, 1]} : vector<2x256xf32> to vector<2x64xf32>
    %70 = arith.mulf %69, %66 : vector<2x64xf32>
    %71 = arith.addf %68, %70 : vector<2x64xf32>
    %72 = vector.extract_strided_slice %61 {offsets = [0, 128], sizes = [2, 64], strides = [1, 1]} : vector<2x256xf32> to vector<2x64xf32>
    %73 = math.tanh %71 : vector<2x64xf32>
    %74 = arith.mulf %72, %73 : vector<2x64xf32>
    %c6 = arith.constant 6 : index
    %c0_31 = arith.constant 0 : index
    %75 = vector.load %arg13[%c6, %c0_31] : memref<16x256xf32, #tpu.memory_space<vmem>>, vector<2x256xf32>
    %c0_32 = arith.constant 0 : index
    %c0_33 = arith.constant 0 : index
    %76 = vector.load %arg2[%c0_32, %c0_33] : memref<64x256xf32, #tpu.memory_space<vmem>>, vector<64x256xf32>
    %cst_34 = arith.constant dense<0.000000e+00> : vector<2x256xf32>
    %77 = tpu.matmul %74, %76, %cst_34 {dimension_numbers = #tpu.dot_dimension_numbers<[1], [0], [0], [1], [0, 0, 1, 1], [], []>} : vector<2x64xf32>, vector<64x256xf32>, vector<2x256xf32> -> vector<2x256xf32>
    %78 = arith.addf %75, %77 : vector<2x256xf32>
    %79 = arith.negf %78 : vector<2x256xf32>
    %80 = math.exp %79 : vector<2x256xf32>
    %cst_35 = arith.constant 1.000000e+00 : f32
    %81 = vector.broadcast %cst_35 : f32 to vector<2x256xf32>
    %82 = arith.addf %81, %80 : vector<2x256xf32>
    %83 = arith.divf %81, %82 : vector<2x256xf32>
    %84 = vector.extract_strided_slice %83 {offsets = [0, 192], sizes = [2, 64], strides = [1, 1]} : vector<2x256xf32> to vector<2x64xf32>
    %cst_36 = arith.constant 2.000000e+00 : f32
    %85 = vector.broadcast %cst_36 : f32 to vector<2x64xf32>
    %86 = arith.mulf %85, %84 : vector<2x64xf32>
    %cst_37 = arith.constant 1.000000e+00 : f32
    %87 = vector.broadcast %cst_37 : f32 to vector<2x64xf32>
    %88 = arith.subf %86, %87 : vector<2x64xf32>
    %89 = vector.extract_strided_slice %83 {offsets = [0, 64], sizes = [2, 64], strides = [1, 1]} : vector<2x256xf32> to vector<2x64xf32>
    %90 = arith.mulf %89, %71 : vector<2x64xf32>
    %91 = vector.extract_strided_slice %83 {offsets = [0, 0], sizes = [2, 64], strides = [1, 1]} : vector<2x256xf32> to vector<2x64xf32>
    %92 = arith.mulf %91, %88 : vector<2x64xf32>
    %93 = arith.addf %90, %92 : vector<2x64xf32>
    %94 = vector.extract_strided_slice %83 {offsets = [0, 128], sizes = [2, 64], strides = [1, 1]} : vector<2x256xf32> to vector<2x64xf32>
    %95 = math.tanh %93 : vector<2x64xf32>
    %96 = arith.mulf %94, %95 : vector<2x64xf32>
    %c8 = arith.constant 8 : index
    %c0_38 = arith.constant 0 : index
    %97 = vector.load %arg13[%c8, %c0_38] : memref<16x256xf32, #tpu.memory_space<vmem>>, vector<2x256xf32>
    %c0_39 = arith.constant 0 : index
    %c0_40 = arith.constant 0 : index
    %98 = vector.load %arg2[%c0_39, %c0_40] : memref<64x256xf32, #tpu.memory_space<vmem>>, vector<64x256xf32>
    %cst_41 = arith.constant dense<0.000000e+00> : vector<2x256xf32>
    %99 = tpu.matmul %96, %98, %cst_41 {dimension_numbers = #tpu.dot_dimension_numbers<[1], [0], [0], [1], [0, 0, 1, 1], [], []>} : vector<2x64xf32>, vector<64x256xf32>, vector<2x256xf32> -> vector<2x256xf32>
    %100 = arith.addf %97, %99 : vector<2x256xf32>
    %101 = arith.negf %100 : vector<2x256xf32>
    %102 = math.exp %101 : vector<2x256xf32>
    %cst_42 = arith.constant 1.000000e+00 : f32
    %103 = vector.broadcast %cst_42 : f32 to vector<2x256xf32>
    %104 = arith.addf %103, %102 : vector<2x256xf32>
    %105 = arith.divf %103, %104 : vector<2x256xf32>
    %106 = vector.extract_strided_slice %105 {offsets = [0, 192], sizes = [2, 64], strides = [1, 1]} : vector<2x256xf32> to vector<2x64xf32>
    %cst_43 = arith.constant 2.000000e+00 : f32
    %107 = vector.broadcast %cst_43 : f32 to vector<2x64xf32>
    %108 = arith.mulf %107, %106 : vector<2x64xf32>
    %cst_44 = arith.constant 1.000000e+00 : f32
    %109 = vector.broadcast %cst_44 : f32 to vector<2x64xf32>
    %110 = arith.subf %108, %109 : vector<2x64xf32>
    %111 = vector.extract_strided_slice %105 {offsets = [0, 64], sizes = [2, 64], strides = [1, 1]} : vector<2x256xf32> to vector<2x64xf32>
    %112 = arith.mulf %111, %93 : vector<2x64xf32>
    %113 = vector.extract_strided_slice %105 {offsets = [0, 0], sizes = [2, 64], strides = [1, 1]} : vector<2x256xf32> to vector<2x64xf32>
    %114 = arith.mulf %113, %110 : vector<2x64xf32>
    %115 = arith.addf %112, %114 : vector<2x64xf32>
    %116 = vector.extract_strided_slice %105 {offsets = [0, 128], sizes = [2, 64], strides = [1, 1]} : vector<2x256xf32> to vector<2x64xf32>
    %117 = math.tanh %115 : vector<2x64xf32>
    %118 = arith.mulf %116, %117 : vector<2x64xf32>
    %c10 = arith.constant 10 : index
    %c0_45 = arith.constant 0 : index
    %119 = vector.load %arg13[%c10, %c0_45] : memref<16x256xf32, #tpu.memory_space<vmem>>, vector<2x256xf32>
    %c0_46 = arith.constant 0 : index
    %c0_47 = arith.constant 0 : index
    %120 = vector.load %arg2[%c0_46, %c0_47] : memref<64x256xf32, #tpu.memory_space<vmem>>, vector<64x256xf32>
    %cst_48 = arith.constant dense<0.000000e+00> : vector<2x256xf32>
    %121 = tpu.matmul %118, %120, %cst_48 {dimension_numbers = #tpu.dot_dimension_numbers<[1], [0], [0], [1], [0, 0, 1, 1], [], []>} : vector<2x64xf32>, vector<64x256xf32>, vector<2x256xf32> -> vector<2x256xf32>
    %122 = arith.addf %119, %121 : vector<2x256xf32>
    %123 = arith.negf %122 : vector<2x256xf32>
    %124 = math.exp %123 : vector<2x256xf32>
    %cst_49 = arith.constant 1.000000e+00 : f32
    %125 = vector.broadcast %cst_49 : f32 to vector<2x256xf32>
    %126 = arith.addf %125, %124 : vector<2x256xf32>
    %127 = arith.divf %125, %126 : vector<2x256xf32>
    %128 = vector.extract_strided_slice %127 {offsets = [0, 192], sizes = [2, 64], strides = [1, 1]} : vector<2x256xf32> to vector<2x64xf32>
    %cst_50 = arith.constant 2.000000e+00 : f32
    %129 = vector.broadcast %cst_50 : f32 to vector<2x64xf32>
    %130 = arith.mulf %129, %128 : vector<2x64xf32>
    %cst_51 = arith.constant 1.000000e+00 : f32
    %131 = vector.broadcast %cst_51 : f32 to vector<2x64xf32>
    %132 = arith.subf %130, %131 : vector<2x64xf32>
    %133 = vector.extract_strided_slice %127 {offsets = [0, 64], sizes = [2, 64], strides = [1, 1]} : vector<2x256xf32> to vector<2x64xf32>
    %134 = arith.mulf %133, %115 : vector<2x64xf32>
    %135 = vector.extract_strided_slice %127 {offsets = [0, 0], sizes = [2, 64], strides = [1, 1]} : vector<2x256xf32> to vector<2x64xf32>
    %136 = arith.mulf %135, %132 : vector<2x64xf32>
    %137 = arith.addf %134, %136 : vector<2x64xf32>
    %138 = vector.extract_strided_slice %127 {offsets = [0, 128], sizes = [2, 64], strides = [1, 1]} : vector<2x256xf32> to vector<2x64xf32>
    %139 = math.tanh %137 : vector<2x64xf32>
    %140 = arith.mulf %138, %139 : vector<2x64xf32>
    %c12 = arith.constant 12 : index
    %c0_52 = arith.constant 0 : index
    %141 = vector.load %arg13[%c12, %c0_52] : memref<16x256xf32, #tpu.memory_space<vmem>>, vector<2x256xf32>
    %c0_53 = arith.constant 0 : index
    %c0_54 = arith.constant 0 : index
    %142 = vector.load %arg2[%c0_53, %c0_54] : memref<64x256xf32, #tpu.memory_space<vmem>>, vector<64x256xf32>
    %cst_55 = arith.constant dense<0.000000e+00> : vector<2x256xf32>
    %143 = tpu.matmul %140, %142, %cst_55 {dimension_numbers = #tpu.dot_dimension_numbers<[1], [0], [0], [1], [0, 0, 1, 1], [], []>} : vector<2x64xf32>, vector<64x256xf32>, vector<2x256xf32> -> vector<2x256xf32>
    %144 = arith.addf %141, %143 : vector<2x256xf32>
    %145 = arith.negf %144 : vector<2x256xf32>
    %146 = math.exp %145 : vector<2x256xf32>
    %cst_56 = arith.constant 1.000000e+00 : f32
    %147 = vector.broadcast %cst_56 : f32 to vector<2x256xf32>
    %148 = arith.addf %147, %146 : vector<2x256xf32>
    %149 = arith.divf %147, %148 : vector<2x256xf32>
    %150 = vector.extract_strided_slice %149 {offsets = [0, 192], sizes = [2, 64], strides = [1, 1]} : vector<2x256xf32> to vector<2x64xf32>
    %cst_57 = arith.constant 2.000000e+00 : f32
    %151 = vector.broadcast %cst_57 : f32 to vector<2x64xf32>
    %152 = arith.mulf %151, %150 : vector<2x64xf32>
    %cst_58 = arith.constant 1.000000e+00 : f32
    %153 = vector.broadcast %cst_58 : f32 to vector<2x64xf32>
    %154 = arith.subf %152, %153 : vector<2x64xf32>
    %155 = vector.extract_strided_slice %149 {offsets = [0, 64], sizes = [2, 64], strides = [1, 1]} : vector<2x256xf32> to vector<2x64xf32>
    %156 = arith.mulf %155, %137 : vector<2x64xf32>
    %157 = vector.extract_strided_slice %149 {offsets = [0, 0], sizes = [2, 64], strides = [1, 1]} : vector<2x256xf32> to vector<2x64xf32>
    %158 = arith.mulf %157, %154 : vector<2x64xf32>
    %159 = arith.addf %156, %158 : vector<2x64xf32>
    %160 = vector.extract_strided_slice %149 {offsets = [0, 128], sizes = [2, 64], strides = [1, 1]} : vector<2x256xf32> to vector<2x64xf32>
    %161 = math.tanh %159 : vector<2x64xf32>
    %162 = arith.mulf %160, %161 : vector<2x64xf32>
    %c14 = arith.constant 14 : index
    %c0_59 = arith.constant 0 : index
    %163 = vector.load %arg13[%c14, %c0_59] : memref<16x256xf32, #tpu.memory_space<vmem>>, vector<2x256xf32>
    %c0_60 = arith.constant 0 : index
    %c0_61 = arith.constant 0 : index
    %164 = vector.load %arg2[%c0_60, %c0_61] : memref<64x256xf32, #tpu.memory_space<vmem>>, vector<64x256xf32>
    %cst_62 = arith.constant dense<0.000000e+00> : vector<2x256xf32>
    %165 = tpu.matmul %162, %164, %cst_62 {dimension_numbers = #tpu.dot_dimension_numbers<[1], [0], [0], [1], [0, 0, 1, 1], [], []>} : vector<2x64xf32>, vector<64x256xf32>, vector<2x256xf32> -> vector<2x256xf32>
    %166 = arith.addf %163, %165 : vector<2x256xf32>
    %167 = arith.negf %166 : vector<2x256xf32>
    %168 = math.exp %167 : vector<2x256xf32>
    %cst_63 = arith.constant 1.000000e+00 : f32
    %169 = vector.broadcast %cst_63 : f32 to vector<2x256xf32>
    %170 = arith.addf %169, %168 : vector<2x256xf32>
    %171 = arith.divf %169, %170 : vector<2x256xf32>
    %172 = vector.extract_strided_slice %171 {offsets = [0, 192], sizes = [2, 64], strides = [1, 1]} : vector<2x256xf32> to vector<2x64xf32>
    %cst_64 = arith.constant 2.000000e+00 : f32
    %173 = vector.broadcast %cst_64 : f32 to vector<2x64xf32>
    %174 = arith.mulf %173, %172 : vector<2x64xf32>
    %cst_65 = arith.constant 1.000000e+00 : f32
    %175 = vector.broadcast %cst_65 : f32 to vector<2x64xf32>
    %176 = arith.subf %174, %175 : vector<2x64xf32>
    %177 = vector.extract_strided_slice %171 {offsets = [0, 64], sizes = [2, 64], strides = [1, 1]} : vector<2x256xf32> to vector<2x64xf32>
    %178 = arith.mulf %177, %159 : vector<2x64xf32>
    %179 = vector.extract_strided_slice %171 {offsets = [0, 0], sizes = [2, 64], strides = [1, 1]} : vector<2x256xf32> to vector<2x64xf32>
    %180 = arith.mulf %179, %176 : vector<2x64xf32>
    %181 = arith.addf %178, %180 : vector<2x64xf32>
    %182 = vector.extract_strided_slice %171 {offsets = [0, 128], sizes = [2, 64], strides = [1, 1]} : vector<2x256xf32> to vector<2x64xf32>
    %183 = math.tanh %181 : vector<2x64xf32>
    %184 = arith.mulf %182, %183 : vector<2x64xf32>
    %185 = tpu.concatenate %30, %184 in 1 : vector<2x64xf32>, vector<2x64xf32> -> vector<2x128xf32>
    %186 = tpu.concatenate %52, %162 in 1 : vector<2x64xf32>, vector<2x64xf32> -> vector<2x128xf32>
    %187 = tpu.concatenate %74, %140 in 1 : vector<2x64xf32>, vector<2x64xf32> -> vector<2x128xf32>
    %188 = tpu.concatenate %96, %118 in 1 : vector<2x64xf32>, vector<2x64xf32> -> vector<2x128xf32>
    %189 = tpu.concatenate %118, %96 in 1 : vector<2x64xf32>, vector<2x64xf32> -> vector<2x128xf32>
    %190 = tpu.concatenate %140, %74 in 1 : vector<2x64xf32>, vector<2x64xf32> -> vector<2x128xf32>
    %191 = tpu.concatenate %162, %52 in 1 : vector<2x64xf32>, vector<2x64xf32> -> vector<2x128xf32>
    %192 = tpu.concatenate %184, %30 in 1 : vector<2x64xf32>, vector<2x64xf32> -> vector<2x128xf32>
    %193 = tpu.concatenate %185, %186, %187, %188, %189, %190, %191, %192 in 0 : vector<2x128xf32>, vector<2x128xf32>, vector<2x128xf32>, vector<2x128xf32>, vector<2x128xf32>, vector<2x128xf32>, vector<2x128xf32>, vector<2x128xf32> -> vector<16x128xf32>
    %c0_66 = arith.constant 0 : index
    %c0_67 = arith.constant 0 : index
    %194 = vector.load %arg4[%c0_66, %c0_67] : memref<128x192xf32, #tpu.memory_space<vmem>>, vector<128x192xf32>
    %cst_68 = arith.constant dense<0.000000e+00> : vector<16x192xf32>
    %195 = tpu.matmul %193, %194, %cst_68 {dimension_numbers = #tpu.dot_dimension_numbers<[1], [0], [0], [1], [0, 0, 1, 1], [], []>} : vector<16x128xf32>, vector<128x192xf32>, vector<16x192xf32> -> vector<16x192xf32>
    %c0_69 = arith.constant 0 : index
    %c0_70 = arith.constant 0 : index
    %196 = vector.load %arg6[%c0_69, %c0_70] : memref<1x192xf32, #tpu.memory_space<vmem>>, vector<1x192xf32>
    %197 = vector.broadcast %196 : vector<1x192xf32> to vector<16x192xf32>
    %198 = arith.addf %195, %197 : vector<16x192xf32>
    %c0_71 = arith.constant 0 : index
    %c0_72 = arith.constant 0 : index
    %199 = vector.load %arg14[%c0_71, %c0_72] : memref<16x192xf32, #tpu.memory_space<vmem>>, vector<16x192xf32>
    tpu.vector_store %arg14[%c0_71, %c0_72], %198 {strides = array<i32>} : memref<16x192xf32, #tpu.memory_space<vmem>>, vector<16x192xf32>,
    %c0_73 = arith.constant 0 : index
    %c0_74 = arith.constant 0 : index
    %200 = vector.load %arg7[%c0_73, %c0_74] : memref<1x64xf32, #tpu.memory_space<vmem>>, vector<1x64xf32>
    %201 = vector.shape_cast %200 : vector<1x64xf32> to vector<1x64xf32>
    %202 = vector.broadcast %201 : vector<1x64xf32> to vector<2x64xf32>
    %cst_75 = arith.constant 0.000000e+00 : f32
    %203 = vector.broadcast %cst_75 : f32 to vector<2x64xf32>
    %cst_76 = arith.constant 0.000000e+00 : f32
    %204 = vector.broadcast %cst_76 : f32 to vector<2x64xf32>
    %cst_77 = arith.constant 0xFF800000 : f32
    %205 = vector.broadcast %cst_77 : f32 to vector<2x64xf32>
    %c0_78 = arith.constant 0 : index
    %c0_79 = arith.constant 0 : index
    %206 = vector.load %arg14[%c0_78, %c0_79] : memref<16x192xf32, #tpu.memory_space<vmem>>, vector<2x192xf32>
    %c0_80 = arith.constant 0 : index
    %c0_81 = arith.constant 0 : index
    %207 = vector.load %arg5[%c0_80, %c0_81] : memref<64x192xf32, #tpu.memory_space<vmem>>, vector<64x192xf32>
    %cst_82 = arith.constant dense<0.000000e+00> : vector<2x192xf32>
    %208 = tpu.matmul %203, %207, %cst_82 {dimension_numbers = #tpu.dot_dimension_numbers<[1], [0], [0], [1], [0, 0, 1, 1], [], []>} : vector<2x64xf32>, vector<64x192xf32>, vector<2x192xf32> -> vector<2x192xf32>
    %209 = vector.extract_strided_slice %206 {offsets = [0, 0], sizes = [2, 128], strides = [1, 1]} : vector<2x192xf32> to vector<2x128xf32>
    %210 = vector.extract_strided_slice %208 {offsets = [0, 0], sizes = [2, 128], strides = [1, 1]} : vector<2x192xf32> to vector<2x128xf32>
    %211 = arith.addf %209, %210 : vector<2x128xf32>
    %212 = arith.negf %211 : vector<2x128xf32>
    %213 = math.exp %212 : vector<2x128xf32>
    %cst_83 = arith.constant 1.000000e+00 : f32
    %214 = vector.broadcast %cst_83 : f32 to vector<2x128xf32>
    %215 = arith.addf %214, %213 : vector<2x128xf32>
    %216 = arith.divf %214, %215 : vector<2x128xf32>
    %217 = vector.extract_strided_slice %206 {offsets = [0, 128], sizes = [2, 64], strides = [1, 1]} : vector<2x192xf32> to vector<2x64xf32>
    %218 = vector.extract_strided_slice %216 {offsets = [0, 0], sizes = [2, 64], strides = [1, 1]} : vector<2x128xf32> to vector<2x64xf32>
    %219 = vector.extract_strided_slice %208 {offsets = [0, 128], sizes = [2, 64], strides = [1, 1]} : vector<2x192xf32> to vector<2x64xf32>
    %220 = arith.addf %219, %202 : vector<2x64xf32>
    %221 = arith.mulf %218, %220 : vector<2x64xf32>
    %222 = arith.addf %217, %221 : vector<2x64xf32>
    %223 = math.tanh %222 : vector<2x64xf32>
    %224 = vector.extract_strided_slice %216 {offsets = [0, 64], sizes = [2, 64], strides = [1, 1]} : vector<2x128xf32> to vector<2x64xf32>
    %cst_84 = arith.constant 1.000000e+00 : f32
    %225 = vector.broadcast %cst_84 : f32 to vector<2x64xf32>
    %226 = arith.subf %225, %224 : vector<2x64xf32>
    %227 = arith.mulf %226, %223 : vector<2x64xf32>
    %228 = arith.mulf %224, %203 : vector<2x64xf32>
    %229 = arith.addf %227, %228 : vector<2x64xf32>
    %230 = arith.addf %204, %229 : vector<2x64xf32>
    %231 = arith.maximumf %205, %229 : vector<2x64xf32>
    %c2_85 = arith.constant 2 : index
    %c0_86 = arith.constant 0 : index
    %232 = vector.load %arg14[%c2_85, %c0_86] : memref<16x192xf32, #tpu.memory_space<vmem>>, vector<2x192xf32>
    %c0_87 = arith.constant 0 : index
    %c0_88 = arith.constant 0 : index
    %233 = vector.load %arg5[%c0_87, %c0_88] : memref<64x192xf32, #tpu.memory_space<vmem>>, vector<64x192xf32>
    %cst_89 = arith.constant dense<0.000000e+00> : vector<2x192xf32>
    %234 = tpu.matmul %229, %233, %cst_89 {dimension_numbers = #tpu.dot_dimension_numbers<[1], [0], [0], [1], [0, 0, 1, 1], [], []>} : vector<2x64xf32>, vector<64x192xf32>, vector<2x192xf32> -> vector<2x192xf32>
    %235 = vector.extract_strided_slice %232 {offsets = [0, 0], sizes = [2, 128], strides = [1, 1]} : vector<2x192xf32> to vector<2x128xf32>
    %236 = vector.extract_strided_slice %234 {offsets = [0, 0], sizes = [2, 128], strides = [1, 1]} : vector<2x192xf32> to vector<2x128xf32>
    %237 = arith.addf %235, %236 : vector<2x128xf32>
    %238 = arith.negf %237 : vector<2x128xf32>
    %239 = math.exp %238 : vector<2x128xf32>
    %cst_90 = arith.constant 1.000000e+00 : f32
    %240 = vector.broadcast %cst_90 : f32 to vector<2x128xf32>
    %241 = arith.addf %240, %239 : vector<2x128xf32>
    %242 = arith.divf %240, %241 : vector<2x128xf32>
    %243 = vector.extract_strided_slice %232 {offsets = [0, 128], sizes = [2, 64], strides = [1, 1]} : vector<2x192xf32> to vector<2x64xf32>
    %244 = vector.extract_strided_slice %242 {offsets = [0, 0], sizes = [2, 64], strides = [1, 1]} : vector<2x128xf32> to vector<2x64xf32>
    %245 = vector.extract_strided_slice %234 {offsets = [0, 128], sizes = [2, 64], strides = [1, 1]} : vector<2x192xf32> to vector<2x64xf32>
    %246 = arith.addf %245, %202 : vector<2x64xf32>
    %247 = arith.mulf %244, %246 : vector<2x64xf32>
    %248 = arith.addf %243, %247 : vector<2x64xf32>
    %249 = math.tanh %248 : vector<2x64xf32>
    %250 = vector.extract_strided_slice %242 {offsets = [0, 64], sizes = [2, 64], strides = [1, 1]} : vector<2x128xf32> to vector<2x64xf32>
    %cst_91 = arith.constant 1.000000e+00 : f32
    %251 = vector.broadcast %cst_91 : f32 to vector<2x64xf32>
    %252 = arith.subf %251, %250 : vector<2x64xf32>
    %253 = arith.mulf %252, %249 : vector<2x64xf32>
    %254 = arith.mulf %250, %229 : vector<2x64xf32>
    %255 = arith.addf %253, %254 : vector<2x64xf32>
    %256 = arith.addf %230, %255 : vector<2x64xf32>
    %257 = arith.maximumf %231, %255 : vector<2x64xf32>
    %c4_92 = arith.constant 4 : index
    %c0_93 = arith.constant 0 : index
    %258 = vector.load %arg14[%c4_92, %c0_93] : memref<16x192xf32, #tpu.memory_space<vmem>>, vector<2x192xf32>
    %c0_94 = arith.constant 0 : index
    %c0_95 = arith.constant 0 : index
    %259 = vector.load %arg5[%c0_94, %c0_95] : memref<64x192xf32, #tpu.memory_space<vmem>>, vector<64x192xf32>
    %cst_96 = arith.constant dense<0.000000e+00> : vector<2x192xf32>
    %260 = tpu.matmul %255, %259, %cst_96 {dimension_numbers = #tpu.dot_dimension_numbers<[1], [0], [0], [1], [0, 0, 1, 1], [], []>} : vector<2x64xf32>, vector<64x192xf32>, vector<2x192xf32> -> vector<2x192xf32>
    %261 = vector.extract_strided_slice %258 {offsets = [0, 0], sizes = [2, 128], strides = [1, 1]} : vector<2x192xf32> to vector<2x128xf32>
    %262 = vector.extract_strided_slice %260 {offsets = [0, 0], sizes = [2, 128], strides = [1, 1]} : vector<2x192xf32> to vector<2x128xf32>
    %263 = arith.addf %261, %262 : vector<2x128xf32>
    %264 = arith.negf %263 : vector<2x128xf32>
    %265 = math.exp %264 : vector<2x128xf32>
    %cst_97 = arith.constant 1.000000e+00 : f32
    %266 = vector.broadcast %cst_97 : f32 to vector<2x128xf32>
    %267 = arith.addf %266, %265 : vector<2x128xf32>
    %268 = arith.divf %266, %267 : vector<2x128xf32>
    %269 = vector.extract_strided_slice %258 {offsets = [0, 128], sizes = [2, 64], strides = [1, 1]} : vector<2x192xf32> to vector<2x64xf32>
    %270 = vector.extract_strided_slice %268 {offsets = [0, 0], sizes = [2, 64], strides = [1, 1]} : vector<2x128xf32> to vector<2x64xf32>
    %271 = vector.extract_strided_slice %260 {offsets = [0, 128], sizes = [2, 64], strides = [1, 1]} : vector<2x192xf32> to vector<2x64xf32>
    %272 = arith.addf %271, %202 : vector<2x64xf32>
    %273 = arith.mulf %270, %272 : vector<2x64xf32>
    %274 = arith.addf %269, %273 : vector<2x64xf32>
    %275 = math.tanh %274 : vector<2x64xf32>
    %276 = vector.extract_strided_slice %268 {offsets = [0, 64], sizes = [2, 64], strides = [1, 1]} : vector<2x128xf32> to vector<2x64xf32>
    %cst_98 = arith.constant 1.000000e+00 : f32
    %277 = vector.broadcast %cst_98 : f32 to vector<2x64xf32>
    %278 = arith.subf %277, %276 : vector<2x64xf32>
    %279 = arith.mulf %278, %275 : vector<2x64xf32>
    %280 = arith.mulf %276, %255 : vector<2x64xf32>
    %281 = arith.addf %279, %280 : vector<2x64xf32>
    %282 = arith.addf %256, %281 : vector<2x64xf32>
    %283 = arith.maximumf %257, %281 : vector<2x64xf32>
    %c6_99 = arith.constant 6 : index
    %c0_100 = arith.constant 0 : index
    %284 = vector.load %arg14[%c6_99, %c0_100] : memref<16x192xf32, #tpu.memory_space<vmem>>, vector<2x192xf32>
    %c0_101 = arith.constant 0 : index
    %c0_102 = arith.constant 0 : index
    %285 = vector.load %arg5[%c0_101, %c0_102] : memref<64x192xf32, #tpu.memory_space<vmem>>, vector<64x192xf32>
    %cst_103 = arith.constant dense<0.000000e+00> : vector<2x192xf32>
    %286 = tpu.matmul %281, %285, %cst_103 {dimension_numbers = #tpu.dot_dimension_numbers<[1], [0], [0], [1], [0, 0, 1, 1], [], []>} : vector<2x64xf32>, vector<64x192xf32>, vector<2x192xf32> -> vector<2x192xf32>
    %287 = vector.extract_strided_slice %284 {offsets = [0, 0], sizes = [2, 128], strides = [1, 1]} : vector<2x192xf32> to vector<2x128xf32>
    %288 = vector.extract_strided_slice %286 {offsets = [0, 0], sizes = [2, 128], strides = [1, 1]} : vector<2x192xf32> to vector<2x128xf32>
    %289 = arith.addf %287, %288 : vector<2x128xf32>
    %290 = arith.negf %289 : vector<2x128xf32>
    %291 = math.exp %290 : vector<2x128xf32>
    %cst_104 = arith.constant 1.000000e+00 : f32
    %292 = vector.broadcast %cst_104 : f32 to vector<2x128xf32>
    %293 = arith.addf %292, %291 : vector<2x128xf32>
    %294 = arith.divf %292, %293 : vector<2x128xf32>
    %295 = vector.extract_strided_slice %284 {offsets = [0, 128], sizes = [2, 64], strides = [1, 1]} : vector<2x192xf32> to vector<2x64xf32>
    %296 = vector.extract_strided_slice %294 {offsets = [0, 0], sizes = [2, 64], strides = [1, 1]} : vector<2x128xf32> to vector<2x64xf32>
    %297 = vector.extract_strided_slice %286 {offsets = [0, 128], sizes = [2, 64], strides = [1, 1]} : vector<2x192xf32> to vector<2x64xf32>
    %298 = arith.addf %297, %202 : vector<2x64xf32>
    %299 = arith.mulf %296, %298 : vector<2x64xf32>
    %300 = arith.addf %295, %299 : vector<2x64xf32>
    %301 = math.tanh %300 : vector<2x64xf32>
    %302 = vector.extract_strided_slice %294 {offsets = [0, 64], sizes = [2, 64], strides = [1, 1]} : vector<2x128xf32> to vector<2x64xf32>
    %cst_105 = arith.constant 1.000000e+00 : f32
    %303 = vector.broadcast %cst_105 : f32 to vector<2x64xf32>
    %304 = arith.subf %303, %302 : vector<2x64xf32>
    %305 = arith.mulf %304, %301 : vector<2x64xf32>
    %306 = arith.mulf %302, %281 : vector<2x64xf32>
    %307 = arith.addf %305, %306 : vector<2x64xf32>
    %308 = arith.addf %282, %307 : vector<2x64xf32>
    %309 = arith.maximumf %283, %307 : vector<2x64xf32>
    %c8_106 = arith.constant 8 : index
    %c0_107 = arith.constant 0 : index
    %310 = vector.load %arg14[%c8_106, %c0_107] : memref<16x192xf32, #tpu.memory_space<vmem>>, vector<2x192xf32>
    %c0_108 = arith.constant 0 : index
    %c0_109 = arith.constant 0 : index
    %311 = vector.load %arg5[%c0_108, %c0_109] : memref<64x192xf32, #tpu.memory_space<vmem>>, vector<64x192xf32>
    %cst_110 = arith.constant dense<0.000000e+00> : vector<2x192xf32>
    %312 = tpu.matmul %307, %311, %cst_110 {dimension_numbers = #tpu.dot_dimension_numbers<[1], [0], [0], [1], [0, 0, 1, 1], [], []>} : vector<2x64xf32>, vector<64x192xf32>, vector<2x192xf32> -> vector<2x192xf32>
    %313 = vector.extract_strided_slice %310 {offsets = [0, 0], sizes = [2, 128], strides = [1, 1]} : vector<2x192xf32> to vector<2x128xf32>
    %314 = vector.extract_strided_slice %312 {offsets = [0, 0], sizes = [2, 128], strides = [1, 1]} : vector<2x192xf32> to vector<2x128xf32>
    %315 = arith.addf %313, %314 : vector<2x128xf32>
    %316 = arith.negf %315 : vector<2x128xf32>
    %317 = math.exp %316 : vector<2x128xf32>
    %cst_111 = arith.constant 1.000000e+00 : f32
    %318 = vector.broadcast %cst_111 : f32 to vector<2x128xf32>
    %319 = arith.addf %318, %317 : vector<2x128xf32>
    %320 = arith.divf %318, %319 : vector<2x128xf32>
    %321 = vector.extract_strided_slice %310 {offsets = [0, 128], sizes = [2, 64], strides = [1, 1]} : vector<2x192xf32> to vector<2x64xf32>
    %322 = vector.extract_strided_slice %320 {offsets = [0, 0], sizes = [2, 64], strides = [1, 1]} : vector<2x128xf32> to vector<2x64xf32>
    %323 = vector.extract_strided_slice %312 {offsets = [0, 128], sizes = [2, 64], strides = [1, 1]} : vector<2x192xf32> to vector<2x64xf32>
    %324 = arith.addf %323, %202 : vector<2x64xf32>
    %325 = arith.mulf %322, %324 : vector<2x64xf32>
    %326 = arith.addf %321, %325 : vector<2x64xf32>
    %327 = math.tanh %326 : vector<2x64xf32>
    %328 = vector.extract_strided_slice %320 {offsets = [0, 64], sizes = [2, 64], strides = [1, 1]} : vector<2x128xf32> to vector<2x64xf32>
    %cst_112 = arith.constant 1.000000e+00 : f32
    %329 = vector.broadcast %cst_112 : f32 to vector<2x64xf32>
    %330 = arith.subf %329, %328 : vector<2x64xf32>
    %331 = arith.mulf %330, %327 : vector<2x64xf32>
    %332 = arith.mulf %328, %307 : vector<2x64xf32>
    %333 = arith.addf %331, %332 : vector<2x64xf32>
    %334 = arith.addf %308, %333 : vector<2x64xf32>
    %335 = arith.maximumf %309, %333 : vector<2x64xf32>
    %c10_113 = arith.constant 10 : index
    %c0_114 = arith.constant 0 : index
    %336 = vector.load %arg14[%c10_113, %c0_114] : memref<16x192xf32, #tpu.memory_space<vmem>>, vector<2x192xf32>
    %c0_115 = arith.constant 0 : index
    %c0_116 = arith.constant 0 : index
    %337 = vector.load %arg5[%c0_115, %c0_116] : memref<64x192xf32, #tpu.memory_space<vmem>>, vector<64x192xf32>
    %cst_117 = arith.constant dense<0.000000e+00> : vector<2x192xf32>
    %338 = tpu.matmul %333, %337, %cst_117 {dimension_numbers = #tpu.dot_dimension_numbers<[1], [0], [0], [1], [0, 0, 1, 1], [], []>} : vector<2x64xf32>, vector<64x192xf32>, vector<2x192xf32> -> vector<2x192xf32>
    %339 = vector.extract_strided_slice %336 {offsets = [0, 0], sizes = [2, 128], strides = [1, 1]} : vector<2x192xf32> to vector<2x128xf32>
    %340 = vector.extract_strided_slice %338 {offsets = [0, 0], sizes = [2, 128], strides = [1, 1]} : vector<2x192xf32> to vector<2x128xf32>
    %341 = arith.addf %339, %340 : vector<2x128xf32>
    %342 = arith.negf %341 : vector<2x128xf32>
    %343 = math.exp %342 : vector<2x128xf32>
    %cst_118 = arith.constant 1.000000e+00 : f32
    %344 = vector.broadcast %cst_118 : f32 to vector<2x128xf32>
    %345 = arith.addf %344, %343 : vector<2x128xf32>
    %346 = arith.divf %344, %345 : vector<2x128xf32>
    %347 = vector.extract_strided_slice %336 {offsets = [0, 128], sizes = [2, 64], strides = [1, 1]} : vector<2x192xf32> to vector<2x64xf32>
    %348 = vector.extract_strided_slice %346 {offsets = [0, 0], sizes = [2, 64], strides = [1, 1]} : vector<2x128xf32> to vector<2x64xf32>
    %349 = vector.extract_strided_slice %338 {offsets = [0, 128], sizes = [2, 64], strides = [1, 1]} : vector<2x192xf32> to vector<2x64xf32>
    %350 = arith.addf %349, %202 : vector<2x64xf32>
    %351 = arith.mulf %348, %350 : vector<2x64xf32>
    %352 = arith.addf %347, %351 : vector<2x64xf32>
    %353 = math.tanh %352 : vector<2x64xf32>
    %354 = vector.extract_strided_slice %346 {offsets = [0, 64], sizes = [2, 64], strides = [1, 1]} : vector<2x128xf32> to vector<2x64xf32>
    %cst_119 = arith.constant 1.000000e+00 : f32
    %355 = vector.broadcast %cst_119 : f32 to vector<2x64xf32>
    %356 = arith.subf %355, %354 : vector<2x64xf32>
    %357 = arith.mulf %356, %353 : vector<2x64xf32>
    %358 = arith.mulf %354, %333 : vector<2x64xf32>
    %359 = arith.addf %357, %358 : vector<2x64xf32>
    %360 = arith.addf %334, %359 : vector<2x64xf32>
    %361 = arith.maximumf %335, %359 : vector<2x64xf32>
    %c12_120 = arith.constant 12 : index
    %c0_121 = arith.constant 0 : index
    %362 = vector.load %arg14[%c12_120, %c0_121] : memref<16x192xf32, #tpu.memory_space<vmem>>, vector<2x192xf32>
    %c0_122 = arith.constant 0 : index
    %c0_123 = arith.constant 0 : index
    %363 = vector.load %arg5[%c0_122, %c0_123] : memref<64x192xf32, #tpu.memory_space<vmem>>, vector<64x192xf32>
    %cst_124 = arith.constant dense<0.000000e+00> : vector<2x192xf32>
    %364 = tpu.matmul %359, %363, %cst_124 {dimension_numbers = #tpu.dot_dimension_numbers<[1], [0], [0], [1], [0, 0, 1, 1], [], []>} : vector<2x64xf32>, vector<64x192xf32>, vector<2x192xf32> -> vector<2x192xf32>
    %365 = vector.extract_strided_slice %362 {offsets = [0, 0], sizes = [2, 128], strides = [1, 1]} : vector<2x192xf32> to vector<2x128xf32>
    %366 = vector.extract_strided_slice %364 {offsets = [0, 0], sizes = [2, 128], strides = [1, 1]} : vector<2x192xf32> to vector<2x128xf32>
    %367 = arith.addf %365, %366 : vector<2x128xf32>
    %368 = arith.negf %367 : vector<2x128xf32>
    %369 = math.exp %368 : vector<2x128xf32>
    %cst_125 = arith.constant 1.000000e+00 : f32
    %370 = vector.broadcast %cst_125 : f32 to vector<2x128xf32>
    %371 = arith.addf %370, %369 : vector<2x128xf32>
    %372 = arith.divf %370, %371 : vector<2x128xf32>
    %373 = vector.extract_strided_slice %362 {offsets = [0, 128], sizes = [2, 64], strides = [1, 1]} : vector<2x192xf32> to vector<2x64xf32>
    %374 = vector.extract_strided_slice %372 {offsets = [0, 0], sizes = [2, 64], strides = [1, 1]} : vector<2x128xf32> to vector<2x64xf32>
    %375 = vector.extract_strided_slice %364 {offsets = [0, 128], sizes = [2, 64], strides = [1, 1]} : vector<2x192xf32> to vector<2x64xf32>
    %376 = arith.addf %375, %202 : vector<2x64xf32>
    %377 = arith.mulf %374, %376 : vector<2x64xf32>
    %378 = arith.addf %373, %377 : vector<2x64xf32>
    %379 = math.tanh %378 : vector<2x64xf32>
    %380 = vector.extract_strided_slice %372 {offsets = [0, 64], sizes = [2, 64], strides = [1, 1]} : vector<2x128xf32> to vector<2x64xf32>
    %cst_126 = arith.constant 1.000000e+00 : f32
    %381 = vector.broadcast %cst_126 : f32 to vector<2x64xf32>
    %382 = arith.subf %381, %380 : vector<2x64xf32>
    %383 = arith.mulf %382, %379 : vector<2x64xf32>
    %384 = arith.mulf %380, %359 : vector<2x64xf32>
    %385 = arith.addf %383, %384 : vector<2x64xf32>
    %386 = arith.addf %360, %385 : vector<2x64xf32>
    %387 = arith.maximumf %361, %385 : vector<2x64xf32>
    %c14_127 = arith.constant 14 : index
    %c0_128 = arith.constant 0 : index
    %388 = vector.load %arg14[%c14_127, %c0_128] : memref<16x192xf32, #tpu.memory_space<vmem>>, vector<2x192xf32>
    %c0_129 = arith.constant 0 : index
    %c0_130 = arith.constant 0 : index
    %389 = vector.load %arg5[%c0_129, %c0_130] : memref<64x192xf32, #tpu.memory_space<vmem>>, vector<64x192xf32>
    %cst_131 = arith.constant dense<0.000000e+00> : vector<2x192xf32>
    %390 = tpu.matmul %385, %389, %cst_131 {dimension_numbers = #tpu.dot_dimension_numbers<[1], [0], [0], [1], [0, 0, 1, 1], [], []>} : vector<2x64xf32>, vector<64x192xf32>, vector<2x192xf32> -> vector<2x192xf32>
    %391 = vector.extract_strided_slice %388 {offsets = [0, 0], sizes = [2, 128], strides = [1, 1]} : vector<2x192xf32> to vector<2x128xf32>
    %392 = vector.extract_strided_slice %390 {offsets = [0, 0], sizes = [2, 128], strides = [1, 1]} : vector<2x192xf32> to vector<2x128xf32>
    %393 = arith.addf %391, %392 : vector<2x128xf32>
    %394 = arith.negf %393 : vector<2x128xf32>
    %395 = math.exp %394 : vector<2x128xf32>
    %cst_132 = arith.constant 1.000000e+00 : f32
    %396 = vector.broadcast %cst_132 : f32 to vector<2x128xf32>
    %397 = arith.addf %396, %395 : vector<2x128xf32>
    %398 = arith.divf %396, %397 : vector<2x128xf32>
    %399 = vector.extract_strided_slice %388 {offsets = [0, 128], sizes = [2, 64], strides = [1, 1]} : vector<2x192xf32> to vector<2x64xf32>
    %400 = vector.extract_strided_slice %398 {offsets = [0, 0], sizes = [2, 64], strides = [1, 1]} : vector<2x128xf32> to vector<2x64xf32>
    %401 = vector.extract_strided_slice %390 {offsets = [0, 128], sizes = [2, 64], strides = [1, 1]} : vector<2x192xf32> to vector<2x64xf32>
    %402 = arith.addf %401, %202 : vector<2x64xf32>
    %403 = arith.mulf %400, %402 : vector<2x64xf32>
    %404 = arith.addf %399, %403 : vector<2x64xf32>
    %405 = math.tanh %404 : vector<2x64xf32>
    %406 = vector.extract_strided_slice %398 {offsets = [0, 64], sizes = [2, 64], strides = [1, 1]} : vector<2x128xf32> to vector<2x64xf32>
    %cst_133 = arith.constant 1.000000e+00 : f32
    %407 = vector.broadcast %cst_133 : f32 to vector<2x64xf32>
    %408 = arith.subf %407, %406 : vector<2x64xf32>
    %409 = arith.mulf %408, %405 : vector<2x64xf32>
    %410 = arith.mulf %406, %385 : vector<2x64xf32>
    %411 = arith.addf %409, %410 : vector<2x64xf32>
    %412 = arith.addf %386, %411 : vector<2x64xf32>
    %413 = arith.maximumf %387, %411 : vector<2x64xf32>
    %414 = vector.extract_strided_slice %411 {offsets = [0, 0], sizes = [1, 32], strides = [1, 1]} : vector<2x64xf32> to vector<1x32xf32>
    %415 = vector.extract_strided_slice %411 {offsets = [1, 0], sizes = [1, 32], strides = [1, 1]} : vector<2x64xf32> to vector<1x32xf32>
    %416 = tpu.concatenate %414, %415 in 1 : vector<1x32xf32>, vector<1x32xf32> -> vector<1x64xf32>
    %417 = vector.extract_strided_slice %411 {offsets = [0, 32], sizes = [1, 32], strides = [1, 1]} : vector<2x64xf32> to vector<1x32xf32>
    %418 = vector.extract_strided_slice %411 {offsets = [1, 32], sizes = [1, 32], strides = [1, 1]} : vector<2x64xf32> to vector<1x32xf32>
    %419 = tpu.concatenate %417, %418 in 1 : vector<1x32xf32>, vector<1x32xf32> -> vector<1x64xf32>
    %420 = tpu.concatenate %416, %419 in 0 : vector<1x64xf32>, vector<1x64xf32> -> vector<2x64xf32>
    %cst_134 = arith.constant 1.250000e-01 : f32
    %421 = vector.broadcast %cst_134 : f32 to vector<2x64xf32>
    %422 = arith.mulf %412, %421 : vector<2x64xf32>
    %423 = tpu.concatenate %420, %422, %413 in 1 : vector<2x64xf32>, vector<2x64xf32>, vector<2x64xf32> -> vector<2x192xf32>
    %c0_135 = arith.constant 0 : index
    %c0_136 = arith.constant 0 : index
    %424 = vector.load %arg8[%c0_135, %c0_136] : memref<192x32xf32, #tpu.memory_space<vmem>>, vector<192x32xf32>
    %cst_137 = arith.constant dense<0.000000e+00> : vector<2x32xf32>
    %425 = tpu.matmul %423, %424, %cst_137 {dimension_numbers = #tpu.dot_dimension_numbers<[1], [0], [0], [1], [0, 0, 1, 1], [], []>} : vector<2x192xf32>, vector<192x32xf32>, vector<2x32xf32> -> vector<2x32xf32>
    %c0_138 = arith.constant 0 : index
    %c0_139 = arith.constant 0 : index
    %426 = vector.load %arg9[%c0_138, %c0_139] : memref<1x32xf32, #tpu.memory_space<vmem>>, vector<1x32xf32>
    %427 = vector.broadcast %426 : vector<1x32xf32> to vector<2x32xf32>
    %428 = arith.addf %425, %427 : vector<2x32xf32>
    %cst_140 = arith.constant 0.000000e+00 : f32
    %429 = vector.broadcast %cst_140 : f32 to vector<2x32xf32>
    %430 = arith.maximumf %428, %429 : vector<2x32xf32>
    %c0_141 = arith.constant 0 : index
    %c0_142 = arith.constant 0 : index
    %431 = vector.load %arg10[%c0_141, %c0_142] : memref<32x7xf32, #tpu.memory_space<vmem>>, vector<32x7xf32>
    %cst_143 = arith.constant dense<0.000000e+00> : vector<2x7xf32>
    %432 = tpu.matmul %430, %431, %cst_143 {dimension_numbers = #tpu.dot_dimension_numbers<[1], [0], [0], [1], [0, 0, 1, 1], [], []>} : vector<2x32xf32>, vector<32x7xf32>, vector<2x7xf32> -> vector<2x7xf32>
    %c0_144 = arith.constant 0 : index
    %c0_145 = arith.constant 0 : index
    %433 = vector.load %arg11[%c0_144, %c0_145] : memref<1x7xf32, #tpu.memory_space<vmem>>, vector<1x7xf32>
    %434 = vector.broadcast %433 : vector<1x7xf32> to vector<2x7xf32>
    %435 = arith.addf %432, %434 : vector<2x7xf32>
    %c0_146 = arith.constant 0 : index
    %c0_147 = arith.constant 0 : index
    %436 = vector.load %arg12[%c0_146, %c0_147] : memref<2x7xf32, #tpu.memory_space<vmem>>, vector<2x7xf32>
    tpu.vector_store %arg12[%c0_146, %c0_147], %435 {strides = array<i32>} : memref<2x7xf32, #tpu.memory_space<vmem>>, vector<2x7xf32>,
    return
  }
}

</mosaic_0001>

<llo_original>
// kernel: lstm_gru_forward.1
$region0: #{lstm_gru_forward.1}
  #allocation0 [shape = 'u32[]', space=smem, size = 0x4, offset = 0x4, fixed_abs, tag = 'smem constant byte address 0x4 - core index']
  #allocation1 [shape = 'u32[144,128]{1,0:T(1,128)}', space=vmem, size = 0x12000, scoped, tag = 'internal scratch']
  #allocation2 [shape = 'f32[16,256]{1,0:T(8,128)}', space=vmem, size = 0x4000, scoped, tag = 'scratch operand']
  #allocation3 [shape = 'f32[16,192]{1,0:T(8,128)}', space=vmem, size = 0x4000, scoped, tag = 'scratch operand']
  %s0 = inlined_call_operand.vmem [shape: f32[16,64], index: 0, kind: input, shape index: {}]
  %s1 = inlined_call_operand.vmem [shape: f32[64,256], index: 1, kind: input, shape index: {}]
  %s2 = inlined_call_operand.vmem [shape: f32[64,256], index: 2, kind: input, shape index: {}]
  %s3 = inlined_call_operand.vmem [shape: f32[1,256], index: 3, kind: input, shape index: {}]
  %s4 = inlined_call_operand.vmem [shape: f32[128,192], index: 4, kind: input, shape index: {}]
  %s5 = inlined_call_operand.vmem [shape: f32[64,192], index: 5, kind: input, shape index: {}]
  %s6 = inlined_call_operand.vmem [shape: f32[1,192], index: 6, kind: input, shape index: {}]
  %s7 = inlined_call_operand.vmem [shape: f32[1,64], index: 7, kind: input, shape index: {}]
  %s8 = inlined_call_operand.vmem [shape: f32[192,32], index: 8, kind: input, shape index: {}]
  %s9 = inlined_call_operand.vmem [shape: f32[1,32], index: 9, kind: input, shape index: {}]
  %s10 = inlined_call_operand.vmem [shape: f32[32,7], index: 10, kind: input, shape index: {}]
  %s11 = inlined_call_operand.vmem [shape: f32[1,7], index: 11, kind: input, shape index: {}]
  %s12 = inlined_call_operand.hbm [shape: f32[2,7], index: 12, kind: output, shape index: {}]
  %s13 = sld [smem:[#allocation0]]
  $region58: #{lstm_gru_forward.1} parent=0
    _
  %s15 = ssub.s32 1, %s13
  %s16 = scalar_select 0, %s15, %s13
  $region1: #{lstm_gru_forward.1} parent=0
    #allocation4 [shape = 'u8[1024]{0}', space=vmem, size = 0x400, scoped, tag = 'output window, operand 0, single buffered']
    #allocation5 [shape = 's32[1]{0}', space=sflag, size = 0x4, scoped, tag = 'scoped memory for lstm_gru_forward.1']
    %17 = vsyncpa [#allocation5], 0
    // Predicated region
    $region2: #{lstm_gru_forward.1} parent=1 // pred_check
      _
    $region3: #{lstm_gru_forward.1} parent=1 // pred_check_branch
      %19 = sbr.rel (0) target = $region5
    $region4: #{lstm_gru_forward.1} parent=1 // pred_region
      _
    $region5: #{lstm_gru_forward.1} parent=1 // pred_fallthru
      _
    // Predicated region
    $region6: #{lstm_gru_forward.1} parent=1 // pred_check
      _
    $region7: #{lstm_gru_forward.1} parent=1 // pred_check_branch
      %21 = sbr.rel (0) target = $region9
    $region8: #{lstm_gru_forward.1} parent=1 // pred_region
      _
    $region9: #{lstm_gru_forward.1} parent=1 // pred_fallthru
      _
    // Predicated region
    $region10: #{lstm_gru_forward.1} parent=1 // pred_check
      _
    $region11: #{lstm_gru_forward.1} parent=1 // pred_check_branch
      %23 = sbr.rel (0) target = $region13
    $region12: #{lstm_gru_forward.1} parent=1 // pred_region
      _
    $region13: #{lstm_gru_forward.1} parent=1 // pred_fallthru
      _
    // Predicated region
    $region14: #{lstm_gru_forward.1} parent=1 // pred_check
      _
    $region15: #{lstm_gru_forward.1} parent=1 // pred_check_branch
      %25 = sbr.rel (0) target = $region17
    $region16: #{lstm_gru_forward.1} parent=1 // pred_region
      _
    $region17: #{lstm_gru_forward.1} parent=1 // pred_fallthru
      _
    // Predicated region
    $region18: #{lstm_gru_forward.1} parent=1 // pred_check
      _
    $region19: #{lstm_gru_forward.1} parent=1 // pred_check_branch
      %27 = sbr.rel (0) target = $region21
    $region20: #{lstm_gru_forward.1} parent=1 // pred_region
      _
    $region21: #{lstm_gru_forward.1} parent=1 // pred_fallthru
      _
    // Predicated region
    $region22: #{lstm_gru_forward.1} parent=1 // pred_check
      _
    $region23: #{lstm_gru_forward.1} parent=1 // pred_check_branch
      %29 = sbr.rel (0) target = $region25
    $region24: #{lstm_gru_forward.1} parent=1 // pred_region
      _
    $region25: #{lstm_gru_forward.1} parent=1 // pred_fallthru
      _
    // Predicated region
    $region26: #{lstm_gru_forward.1} parent=1 // pred_check
      _
    $region27: #{lstm_gru_forward.1} parent=1 // pred_check_branch
      %31 = sbr.rel (0) target = $region29
    $region28: #{lstm_gru_forward.1} parent=1 // pred_region
      _
    $region29: #{lstm_gru_forward.1} parent=1 // pred_fallthru
      _
    // Predicated region
    $region30: #{lstm_gru_forward.1} parent=1 // pred_check
      _
    $region31: #{lstm_gru_forward.1} parent=1 // pred_check_branch
      %33 = sbr.rel (0) target = $region33
    $region32: #{lstm_gru_forward.1} parent=1 // pred_region
      _
    $region33: #{lstm_gru_forward.1} parent=1 // pred_fallthru
      _
    // Predicated region
    $region34: #{lstm_gru_forward.1} parent=1 // pred_check
      _
    $region35: #{lstm_gru_forward.1} parent=1 // pred_check_branch
      %35 = sbr.rel (0) target = $region37
    $region36: #{lstm_gru_forward.1} parent=1 // pred_region
      _
    $region37: #{lstm_gru_forward.1} parent=1 // pred_fallthru
      _
    // Predicated region
    $region38: #{lstm_gru_forward.1} parent=1 // pred_check
      _
    $region39: #{lstm_gru_forward.1} parent=1 // pred_check_branch
      %37 = sbr.rel (0) target = $region41
    $region40: #{lstm_gru_forward.1} parent=1 // pred_region
      _
    $region41: #{lstm_gru_forward.1} parent=1 // pred_fallthru
      _
    // Predicated region
    $region42: #{lstm_gru_forward.1} parent=1 // pred_check
      _
    $region43: #{lstm_gru_forward.1} parent=1 // pred_check_branch
      %39 = sbr.rel (0) target = $region45
    $region44: #{lstm_gru_forward.1} parent=1 // pred_region
      _
    $region45: #{lstm_gru_forward.1} parent=1 // pred_fallthru
      _
    // Predicated region
    $region46: #{lstm_gru_forward.1} parent=1 // pred_check
      _
    $region47: #{lstm_gru_forward.1} parent=1 // pred_check_branch
      %41 = sbr.rel (0) target = $region49
    $region48: #{lstm_gru_forward.1} parent=1 // pred_region
      _
    $region49: #{lstm_gru_forward.1} parent=1 // pred_fallthru
      _
    %v42 = vld [vmem:[%s0] sm:$0xff]
    %v43 = vld [vmem:[%s0 + $0x8] sm:$0xff]
    %v44 = vld [vmem:[%s1] sm:$0xff]
    %v45 = vld [vmem:[%s1 + $0x8] sm:$0xff]
    %v46 = vld [vmem:[%s1 + $0x10] sm:$0xff]
    %v47 = vld [vmem:[%s1 + $0x18] sm:$0xff]
    %v48 = vld [vmem:[%s1 + $0x20] sm:$0xff]
    %v49 = vld [vmem:[%s1 + $0x28] sm:$0xff]
    %v50 = vld [vmem:[%s1 + $0x30] sm:$0xff]
    %v51 = vld [vmem:[%s1 + $0x38] sm:$0xff]
    %v52 = vld [vmem:[%s1 + $0x40] sm:$0xff]
    %v53 = vld [vmem:[%s1 + $0x48] sm:$0xff]
    %v54 = vld [vmem:[%s1 + $0x50] sm:$0xff]
    %v55 = vld [vmem:[%s1 + $0x58] sm:$0xff]
    %v56 = vld [vmem:[%s1 + $0x60] sm:$0xff]
    %v57 = vld [vmem:[%s1 + $0x68] sm:$0xff]
    %v58 = vld [vmem:[%s1 + $0x70] sm:$0xff]
    %v59 = vld [vmem:[%s1 + $0x78] sm:$0xff]
    %v60 = vld [vmem:[%s3] sm:$0x3]
    %v62 = vlaneseq
    %v63 = vshrl.u32 %v62, 7
    %v64 = vsub.s32 0, %v63
    %v65 = vrot.slane %v60, %v64
    %v66 = vlaneseq
    %v67 = vshrl.u32 %v66, 7
    %v68 = vsub.s32 1, %v67
    %v69 = vrot.slane %v60, %v68
    %vm72 = vcmask 523264
    %v74 = vsel %vm72, %v42, 0
    %v77 = vsel %vm72, %v43, 0
    %79 = vmatprep.subr.mxu0 %v45
    %80 = vmatpush1.msra.mxu0 %v44
    %81 = vmatprep.subr.mxu0 %v47
    %82 = vmatpush1.msra.mxu0 %v46
    %83 = vmatprep.subr.mxu0 %v49
    %84 = vmatpush1.msra.mxu0 %v48
    %85 = vmatprep.subr.mxu0 %v51
    %86 = vmatpush1.msra.mxu0 %v50
    %87 = vmatprep.subr.mxu0 %v53
    %88 = vmatpush1.msra.mxu0 %v52
    %89 = vmatprep.subr.mxu0 %v55
    %90 = vmatpush1.msra.mxu0 %v54
    %91 = vmatprep.subr.mxu0 %v57
    %92 = vmatpush1.msra.mxu0 %v56
    %93 = vmatprep.subr.mxu0 %v59
    %94 = vmatpush1.msra.mxu0 %v58
    %95 = vmatprep.subr.mxu0 0.0
    %96 = vmatpush1.msra.mxu0 0.0
    %97 = vmatprep.subr.mxu0 0.0
    %98 = vmatpush1.msra.mxu0 0.0
    %99 = vmatprep.subr.mxu0 0.0
    %100 = vmatpush1.msra.mxu0 0.0
    %101 = vmatprep.subr.mxu0 0.0
    %102 = vmatpush1.msra.mxu0 0.0
    %103 = vmatprep.subr.mxu0 0.0
    %104 = vmatpush1.msra.mxu0 0.0
    %105 = vmatprep.subr.mxu0 0.0
    %106 = vmatpush1.msra.mxu0 0.0
    %107 = vmatprep.subr.mxu0 0.0
    %108 = vmatpush1.msra.mxu0 0.0
    %109 = vmatprep.subr.mxu0 0.0
    %110 = vmatpush1.msra.mxu0 0.0
    %111 = vmatprep.subr.mxu0 0.0
    %112 = vmatpush1.msra.mxu0 0.0
    %113 = vmatprep.subr.mxu0 0.0
    %114 = vmatpush1.msra.mxu0 0.0
    %115 = vmatprep.subr.mxu0 0.0
    %116 = vmatpush1.msra.mxu0 0.0
    %117 = vmatprep.subr.mxu0 0.0
    %118 = vmatpush1.msra.mxu0 0.0
    %119 = vmatprep.subr.mxu0 0.0
    %120 = vmatpush1.msra.mxu0 0.0
    %121 = vmatprep.subr.mxu0 0.0
    %122 = vmatpush1.msra.mxu0 0.0
    %123 = vmatprep.subr.mxu0 0.0
    %124 = vmatpush1.msra.mxu0 0.0
    %125 = vmatprep.subr.mxu0 0.0
    %126 = vmatpush1.msra.mxu0 0.0
    %127 = vmatprep.subr.mxu0 0.0
    %128 = vmatpush1.msra.mxu0 0.0
    %129 = vmatprep.subr.mxu0 0.0
    %130 = vmatpush1.msra.mxu0 0.0
    %131 = vmatprep.subr.mxu0 0.0
    %132 = vmatpush1.msra.mxu0 0.0
    %133 = vmatprep.subr.mxu0 0.0
    %134 = vmatpush1.msra.mxu0 0.0
    %135 = vmatprep.subr.mxu0 0.0
    %136 = vmatpush1.msra.mxu0 0.0
    %137 = vmatprep.subr.mxu0 0.0
    %138 = vmatpush1.msra.mxu0 0.0
    %139 = vmatprep.subr.mxu0 0.0
    %140 = vmatpush1.msra.mxu0 0.0
    %141 = vmatprep.subr.mxu0 0.0
    %142 = vmatpush1.msra.mxu0 0.0
    %143 = vmatprep.mubr.f32.mxu0 0.0
    %144 = vmatmul.mubr.f32.gmra.mrb[0].mxu0 %v74
    %v145 = vpop.f32.mrb[0].mxu0
    %v146 = vadd.f32 %v65, %v145
    %v147 = vpop.f32.mrb[0].mxu0
    %v148 = vadd.f32 %v69, %v147
    %149 = vmatprep.mubr.f32.mxu0 0.0
    %150 = vmatmul.mubr.f32.gmra.mrb[0].mxu0 %v77
    %v151 = vpop.f32.mrb[0].mxu0
    %v152 = vadd.f32 %v65, %v151
    %v153 = vpop.f32.mrb[0].mxu0
    %v154 = vadd.f32 %v69, %v153
    %155 = vdwg.mxu0
    %156 = vst [vmem:[#allocation2] sm:$0xff] %v146
    %157 = vst [vmem:[#allocation2 + $0x8] sm:$0xff] %v148
    %158 = vst [vmem:[#allocation2 + $0x10] sm:$0xff] %v152
    %159 = vst [vmem:[#allocation2 + $0x18] sm:$0xff] %v154
    %v160 = vld [vmem:[#allocation2] sm:$0x3]
    %v161 = vld [vmem:[#allocation2 + $0x8] sm:$0x3]
    %v162 = vld [vmem:[%s2] sm:$0xff]
    %v163 = vld [vmem:[%s2 + $0x8] sm:$0xff]
    %v164 = vld [vmem:[%s2 + $0x10] sm:$0xff]
    %v165 = vld [vmem:[%s2 + $0x18] sm:$0xff]
    %v166 = vld [vmem:[%s2 + $0x20] sm:$0xff]
    %v167 = vld [vmem:[%s2 + $0x28] sm:$0xff]
    %v168 = vld [vmem:[%s2 + $0x30] sm:$0xff]
    %v169 = vld [vmem:[%s2 + $0x38] sm:$0xff]
    %v170 = vld [vmem:[%s2 + $0x40] sm:$0xff]
    %v171 = vld [vmem:[%s2 + $0x48] sm:$0xff]
    %v172 = vld [vmem:[%s2 + $0x50] sm:$0xff]
    %v173 = vld [vmem:[%s2 + $0x58] sm:$0xff]
    %v174 = vld [vmem:[%s2 + $0x60] sm:$0xff]
    %v175 = vld [vmem:[%s2 + $0x68] sm:$0xff]
    %v176 = vld [vmem:[%s2 + $0x70] sm:$0xff]
    %v177 = vld [vmem:[%s2 + $0x78] sm:$0xff]
    %v179 = vsel %vm72, 0.0, 0
    %181 = vmatprep.subr.mxu0 %v163
    %182 = vmatpush1.msra.mxu0 %v162
    %183 = vmatprep.subr.mxu0 %v165
    %184 = vmatpush1.msra.mxu0 %v164
    %185 = vmatprep.subr.mxu0 %v167
    %186 = vmatpush1.msra.mxu0 %v166
    %187 = vmatprep.subr.mxu0 %v169
    %188 = vmatpush1.msra.mxu0 %v168
    %189 = vmatprep.subr.mxu0 %v171
    %190 = vmatpush1.msra.mxu0 %v170
    %191 = vmatprep.subr.mxu0 %v173
    %192 = vmatpush1.msra.mxu0 %v172
    %193 = vmatprep.subr.mxu0 %v175
    %194 = vmatpush1.msra.mxu0 %v174
    %195 = vmatprep.subr.mxu0 %v177
    %196 = vmatpush1.msra.mxu0 %v176
    %197 = vmatprep.subr.mxu0 0.0
    %198 = vmatpush1.msra.mxu0 0.0
    %199 = vmatprep.subr.mxu0 0.0
    %200 = vmatpush1.msra.mxu0 0.0
    %201 = vmatprep.subr.mxu0 0.0
    %202 = vmatpush1.msra.mxu0 0.0
    %203 = vmatprep.subr.mxu0 0.0
    %204 = vmatpush1.msra.mxu0 0.0
    %205 = vmatprep.subr.mxu0 0.0
    %206 = vmatpush1.msra.mxu0 0.0
    %207 = vmatprep.subr.mxu0 0.0
    %208 = vmatpush1.msra.mxu0 0.0
    %209 = vmatprep.subr.mxu0 0.0
    %210 = vmatpush1.msra.mxu0 0.0
    %211 = vmatprep.subr.mxu0 0.0
    %212 = vmatpush1.msra.mxu0 0.0
    %213 = vmatprep.subr.mxu0 0.0
    %214 = vmatpush1.msra.mxu0 0.0
    %215 = vmatprep.subr.mxu0 0.0
    %216 = vmatpush1.msra.mxu0 0.0
    %217 = vmatprep.subr.mxu0 0.0
    %218 = vmatpush1.msra.mxu0 0.0
    %219 = vmatprep.subr.mxu0 0.0
    %220 = vmatpush1.msra.mxu0 0.0
    %221 = vmatprep.subr.mxu0 0.0
    %222 = vmatpush1.msra.mxu0 0.0
    %223 = vmatprep.subr.mxu0 0.0
    %224 = vmatpush1.msra.mxu0 0.0
    %225 = vmatprep.subr.mxu0 0.0
    %226 = vmatpush1.msra.mxu0 0.0
    %227 = vmatprep.subr.mxu0 0.0
    %228 = vmatpush1.msra.mxu0 0.0
    %229 = vmatprep.subr.mxu0 0.0
    %230 = vmatpush1.msra.mxu0 0.0
    %231 = vmatprep.subr.mxu0 0.0
    %232 = vmatpush1.msra.mxu0 0.0
    %233 = vmatprep.subr.mxu0 0.0
    %234 = vmatpush1.msra.mxu0 0.0
    %235 = vmatprep.subr.mxu0 0.0
    %236 = vmatpush1.msra.mxu0 0.0
    %237 = vmatprep.subr.mxu0 0.0
    %238 = vmatpush1.msra.mxu0 0.0
    %239 = vmatprep.subr.mxu0 0.0
    %240 = vmatpush1.msra.mxu0 0.0
    %241 = vmatprep.subr.mxu0 0.0
    %242 = vmatpush1.msra.mxu0 0.0
    %243 = vmatprep.subr.mxu0 0.0
    %244 = vmatpush1.msra.mxu0 0.0
    %245 = vmatprep.mubr.f32.mxu0 0.0
    %246 = vmatmul.mubr.f32.gmra.mrb[0].mxu0 %v179
    %v247 = vpop.f32.mrb[0].mxu0
    %v248 = vadd.f32 0.0, %v247
    %v249 = vpop.f32.mrb[0].mxu0
    %v250 = vadd.f32 0.0, %v249
    %251 = vdwg.mxu0
    %v252 = vadd.f32 %v160, %v248
    %v253 = vadd.f32 %v161, %v250
    %v254 = vxor.u32 %v252, 2147483648
    %v255 = vxor.u32 %v253, 2147483648
    %v256 = vmul.f32 %v254, 1.442695
    %v257 = vpow.pop %v256
    %v258 = vmul.f32 %v255, 1.442695
    %v259 = vpow.pop %v258
    %v260 = vadd.f32 %v257, 1.0
    %v261 = vadd.f32 %v259, 1.0
    %v262 = vrcp.pop %v260
    %v263 = vmul.f32 1.0, %v262
    %v264 = vrcp.pop %v261
    %v265 = vmul.f32 1.0, %v264
    %v266 = vmul.f32 %v265, 2.0
    %v267 = vsub.f32 %v266, 1.0
    %v268 = vmul.f32 %v263, 0.0
    %270 = vrot.lane.b32.xlu0 %v267, 64
    %v271 = vpop.permute.xlu0 %270
    %v273 = vmul.f32 %v263, %v271
    %275 = vrot.lane.b32.xlu0 %v273, 64
    %v276 = vpop.permute.xlu0 %275
    %v278 = vadd.f32 %v268, %v276
    %v279 = vtanh.pop %v278
    %281 = vrot.lane.b32.xlu0 %v279, 64
    %v282 = vpop.permute.xlu0 %281
    %v284 = vmul.f32 %v265, %v282
    %v285 = vld [vmem:[#allocation2] sm:$0xc]
    %v286 = vld [vmem:[#allocation2 + $0x8] sm:$0xc]
    %v288 = vsel %vm72, %v284, 0
    %290 = vmatprep.subr.mxu0 %v163
    %291 = vmatpush1.msra.mxu0 %v162
    %292 = vmatprep.subr.mxu0 %v165
    %293 = vmatpush1.msra.mxu0 %v164
    %294 = vmatprep.subr.mxu0 %v167
    %295 = vmatpush1.msra.mxu0 %v166
    %296 = vmatprep.subr.mxu0 %v169
    %297 = vmatpush1.msra.mxu0 %v168
    %298 = vmatprep.subr.mxu0 %v171
    %299 = vmatpush1.msra.mxu0 %v170
    %300 = vmatprep.subr.mxu0 %v173
    %301 = vmatpush1.msra.mxu0 %v172
    %302 = vmatprep.subr.mxu0 %v175
    %303 = vmatpush1.msra.mxu0 %v174
    %304 = vmatprep.subr.mxu0 %v177
    %305 = vmatpush1.msra.mxu0 %v176
    %306 = vmatprep.subr.mxu0 0.0
    %307 = vmatpush1.msra.mxu0 0.0
    %308 = vmatprep.subr.mxu0 0.0
    %309 = vmatpush1.msra.mxu0 0.0
    %310 = vmatprep.subr.mxu0 0.0
    %311 = vmatpush1.msra.mxu0 0.0
    %312 = vmatprep.subr.mxu0 0.0
    %313 = vmatpush1.msra.mxu0 0.0
    %314 = vmatprep.subr.mxu0 0.0
    %315 = vmatpush1.msra.mxu0 0.0
    %316 = vmatprep.subr.mxu0 0.0
    %317 = vmatpush1.msra.mxu0 0.0
    %318 = vmatprep.subr.mxu0 0.0
    %319 = vmatpush1.msra.mxu0 0.0
    %320 = vmatprep.subr.mxu0 0.0
    %321 = vmatpush1.msra.mxu0 0.0
    %322 = vmatprep.subr.mxu0 0.0
    %323 = vmatpush1.msra.mxu0 0.0
    %324 = vmatprep.subr.mxu0 0.0
    %325 = vmatpush1.msra.mxu0 0.0
    %326 = vmatprep.subr.mxu0 0.0
    %327 = vmatpush1.msra.mxu0 0.0
    %328 = vmatprep.subr.mxu0 0.0
    %329 = vmatpush1.msra.mxu0 0.0
    %330 = vmatprep.subr.mxu0 0.0
    %331 = vmatpush1.msra.mxu0 0.0
    %332 = vmatprep.subr.mxu0 0.0
    %333 = vmatpush1.msra.mxu0 0.0
    %334 = vmatprep.subr.mxu0 0.0
    %335 = vmatpush1.msra.mxu0 0.0
    %336 = vmatprep.subr.mxu0 0.0
    %337 = vmatpush1.msra.mxu0 0.0
    %338 = vmatprep.subr.mxu0 0.0
    %339 = vmatpush1.msra.mxu0 0.0
    %340 = vmatprep.subr.mxu0 0.0
    %341 = vmatpush1.msra.mxu0 0.0
    %342 = vmatprep.subr.mxu0 0.0
    %343 = vmatpush1.msra.mxu0 0.0
    %344 = vmatprep.subr.mxu0 0.0
    %345 = vmatpush1.msra.mxu0 0.0
    %346 = vmatprep.subr.mxu0 0.0
    %347 = vmatpush1.msra.mxu0 0.0
    %348 = vmatprep.subr.mxu0 0.0
    %349 = vmatpush1.msra.mxu0 0.0
    %350 = vmatprep.subr.mxu0 0.0
    %351 = vmatpush1.msra.mxu0 0.0
    %352 = vmatprep.subr.mxu0 0.0
    %353 = vmatpush1.msra.mxu0 0.0
    %354 = vmatprep.mubr.f32.mxu0 0.0
    %355 = vmatmul.mubr.f32.gmra.mrb[0].mxu0 %v288
    %v356 = vpop.f32.mrb[0].mxu0
    %v357 = vadd.f32 0.0, %v356
    %v358 = vpop.f32.mrb[0].mxu0
    %v359 = vadd.f32 0.0, %v358
    %360 = vdwg.mxu0
    %v363 = vrot.slane %v357, 6
    %v364 = vrot.slane %v359, 6
    %v367 = vadd.f32 %v285, %v363
    %v368 = vadd.f32 %v286, %v364
    %v369 = vxor.u32 %v367, 2147483648
    %v370 = vxor.u32 %v368, 2147483648
    %v371 = vmul.f32 %v369, 1.442695
    %v372 = vpow.pop %v371
    %v373 = vmul.f32 %v370, 1.442695
    %v374 = vpow.pop %v373
    %v375 = vadd.f32 %v372, 1.0
    %v376 = vadd.f32 %v374, 1.0
    %v377 = vrcp.pop %v375
    %v378 = vmul.f32 1.0, %v377
    %v379 = vrcp.pop %v376
    %v380 = vmul.f32 1.0, %v379
    %v381 = vmul.f32 %v380, 2.0
    %v382 = vsub.f32 %v381, 1.0
    %v384 = vrot.slane %v278, 6
    %v386 = vmul.f32 %v378, %v384
    %388 = vrot.lane.b32.xlu0 %v382, 64
    %v389 = vpop.permute.xlu0 %388
    %v391 = vmul.f32 %v378, %v389
    %393 = vrot.lane.b32.xlu0 %v391, 64
    %v394 = vpop.permute.xlu0 %393
    %v396 = vadd.f32 %v386, %v394
    %v397 = vtanh.pop %v396
    %399 = vrot.lane.b32.xlu0 %v397, 64
    %v400 = vpop.permute.xlu0 %399
    %v402 = vmul.f32 %v380, %v400
    %v403 = vld [vmem:[#allocation2] sm:$0x30]
    %v404 = vld [vmem:[#allocation2 + $0x8] sm:$0x30]
    %v406 = vrot.slane %v402, 2
    %v407 = vsel %vm72, %v406, 0
    %409 = vmatprep.subr.mxu0 %v163
    %410 = vmatpush1.msra.mxu0 %v162
    %411 = vmatprep.subr.mxu0 %v165
    %412 = vmatpush1.msra.mxu0 %v164
    %413 = vmatprep.subr.mxu0 %v167
    %414 = vmatpush1.msra.mxu0 %v166
    %415 = vmatprep.subr.mxu0 %v169
    %416 = vmatpush1.msra.mxu0 %v168
    %417 = vmatprep.subr.mxu0 %v171
    %418 = vmatpush1.msra.mxu0 %v170
    %419 = vmatprep.subr.mxu0 %v173
    %420 = vmatpush1.msra.mxu0 %v172
    %421 = vmatprep.subr.mxu0 %v175
    %422 = vmatpush1.msra.mxu0 %v174
    %423 = vmatprep.subr.mxu0 %v177
    %424 = vmatpush1.msra.mxu0 %v176
    %425 = vmatprep.subr.mxu0 0.0
    %426 = vmatpush1.msra.mxu0 0.0
    %427 = vmatprep.subr.mxu0 0.0
    %428 = vmatpush1.msra.mxu0 0.0
    %429 = vmatprep.subr.mxu0 0.0
    %430 = vmatpush1.msra.mxu0 0.0
    %431 = vmatprep.subr.mxu0 0.0
    %432 = vmatpush1.msra.mxu0 0.0
    %433 = vmatprep.subr.mxu0 0.0
    %434 = vmatpush1.msra.mxu0 0.0
    %435 = vmatprep.subr.mxu0 0.0
    %436 = vmatpush1.msra.mxu0 0.0
    %437 = vmatprep.subr.mxu0 0.0
    %438 = vmatpush1.msra.mxu0 0.0
    %439 = vmatprep.subr.mxu0 0.0
    %440 = vmatpush1.msra.mxu0 0.0
    %441 = vmatprep.subr.mxu0 0.0
    %442 = vmatpush1.msra.mxu0 0.0
    %443 = vmatprep.subr.mxu0 0.0
    %444 = vmatpush1.msra.mxu0 0.0
    %445 = vmatprep.subr.mxu0 0.0
    %446 = vmatpush1.msra.mxu0 0.0
    %447 = vmatprep.subr.mxu0 0.0
    %448 = vmatpush1.msra.mxu0 0.0
    %449 = vmatprep.subr.mxu0 0.0
    %450 = vmatpush1.msra.mxu0 0.0
    %451 = vmatprep.subr.mxu0 0.0
    %452 = vmatpush1.msra.mxu0 0.0
    %453 = vmatprep.subr.mxu0 0.0
    %454 = vmatpush1.msra.mxu0 0.0
    %455 = vmatprep.subr.mxu0 0.0
    %456 = vmatpush1.msra.mxu0 0.0
    %457 = vmatprep.subr.mxu0 0.0
    %458 = vmatpush1.msra.mxu0 0.0
    %459 = vmatprep.subr.mxu0 0.0
    %460 = vmatpush1.msra.mxu0 0.0
    %461 = vmatprep.subr.mxu0 0.0
    %462 = vmatpush1.msra.mxu0 0.0
    %463 = vmatprep.subr.mxu0 0.0
    %464 = vmatpush1.msra.mxu0 0.0
    %465 = vmatprep.subr.mxu0 0.0
    %466 = vmatpush1.msra.mxu0 0.0
    %467 = vmatprep.subr.mxu0 0.0
    %468 = vmatpush1.msra.mxu0 0.0
    %469 = vmatprep.subr.mxu0 0.0
    %470 = vmatpush1.msra.mxu0 0.0
    %471 = vmatprep.subr.mxu0 0.0
    %472 = vmatpush1.msra.mxu0 0.0
    %473 = vmatprep.mubr.f32.mxu0 0.0
    %474 = vmatmul.mubr.f32.gmra.mrb[0].mxu0 %v407
    %v475 = vpop.f32.mrb[0].mxu0
    %v476 = vadd.f32 0.0, %v475
    %v477 = vpop.f32.mrb[0].mxu0
    %v478 = vadd.f32 0.0, %v477
    %479 = vdwg.mxu0
    %v482 = vrot.slane %v476, 4
    %v483 = vrot.slane %v478, 4
    %v486 = vadd.f32 %v403, %v482
    %v487 = vadd.f32 %v404, %v483
    %v488 = vxor.u32 %v486, 2147483648
    %v489 = vxor.u32 %v487, 2147483648
    %v490 = vmul.f32 %v488, 1.442695
    %v491 = vpow.pop %v490
    %v492 = vmul.f32 %v489, 1.442695
    %v493 = vpow.pop %v492
    %v494 = vadd.f32 %v491, 1.0
    %v495 = vadd.f32 %v493, 1.0
    %v496 = vrcp.pop %v494
    %v497 = vmul.f32 1.0, %v496
    %v498 = vrcp.pop %v495
    %v499 = vmul.f32 1.0, %v498
    %v500 = vmul.f32 %v499, 2.0
    %v501 = vsub.f32 %v500, 1.0
    %v503 = vrot.slane %v396, 6
    %v505 = vmul.f32 %v497, %v503
    %507 = vrot.lane.b32.xlu0 %v501, 64
    %v508 = vpop.permute.xlu0 %507
    %v510 = vmul.f32 %v497, %v508
    %512 = vrot.lane.b32.xlu0 %v510, 64
    %v513 = vpop.permute.xlu0 %512
    %v515 = vadd.f32 %v505, %v513
    %v516 = vtanh.pop %v515
    %518 = vrot.lane.b32.xlu0 %v516, 64
    %v519 = vpop.permute.xlu0 %518
    %v521 = vmul.f32 %v499, %v519
    %v522 = vld [vmem:[#allocation2] sm:$0xc0]
    %v523 = vld [vmem:[#allocation2 + $0x8] sm:$0xc0]
    %v525 = vrot.slane %v521, 4
    %v526 = vsel %vm72, %v525, 0
    %528 = vmatprep.subr.mxu0 %v163
    %529 = vmatpush1.msra.mxu0 %v162
    %530 = vmatprep.subr.mxu0 %v165
    %531 = vmatpush1.msra.mxu0 %v164
    %532 = vmatprep.subr.mxu0 %v167
    %533 = vmatpush1.msra.mxu0 %v166
    %534 = vmatprep.subr.mxu0 %v169
    %535 = vmatpush1.msra.mxu0 %v168
    %536 = vmatprep.subr.mxu0 %v171
    %537 = vmatpush1.msra.mxu0 %v170
    %538 = vmatprep.subr.mxu0 %v173
    %539 = vmatpush1.msra.mxu0 %v172
    %540 = vmatprep.subr.mxu0 %v175
    %541 = vmatpush1.msra.mxu0 %v174
    %542 = vmatprep.subr.mxu0 %v177
    %543 = vmatpush1.msra.mxu0 %v176
    %544 = vmatprep.subr.mxu0 0.0
    %545 = vmatpush1.msra.mxu0 0.0
    %546 = vmatprep.subr.mxu0 0.0
    %547 = vmatpush1.msra.mxu0 0.0
    %548 = vmatprep.subr.mxu0 0.0
    %549 = vmatpush1.msra.mxu0 0.0
    %550 = vmatprep.subr.mxu0 0.0
    %551 = vmatpush1.msra.mxu0 0.0
    %552 = vmatprep.subr.mxu0 0.0
    %553 = vmatpush1.msra.mxu0 0.0
    %554 = vmatprep.subr.mxu0 0.0
    %555 = vmatpush1.msra.mxu0 0.0
    %556 = vmatprep.subr.mxu0 0.0
    %557 = vmatpush1.msra.mxu0 0.0
    %558 = vmatprep.subr.mxu0 0.0
    %559 = vmatpush1.msra.mxu0 0.0
    %560 = vmatprep.subr.mxu0 0.0
    %561 = vmatpush1.msra.mxu0 0.0
    %562 = vmatprep.subr.mxu0 0.0
    %563 = vmatpush1.msra.mxu0 0.0
    %564 = vmatprep.subr.mxu0 0.0
    %565 = vmatpush1.msra.mxu0 0.0
    %566 = vmatprep.subr.mxu0 0.0
    %567 = vmatpush1.msra.mxu0 0.0
    %568 = vmatprep.subr.mxu0 0.0
    %569 = vmatpush1.msra.mxu0 0.0
    %570 = vmatprep.subr.mxu0 0.0
    %571 = vmatpush1.msra.mxu0 0.0
    %572 = vmatprep.subr.mxu0 0.0
    %573 = vmatpush1.msra.mxu0 0.0
    %574 = vmatprep.subr.mxu0 0.0
    %575 = vmatpush1.msra.mxu0 0.0
    %576 = vmatprep.subr.mxu0 0.0
    %577 = vmatpush1.msra.mxu0 0.0
    %578 = vmatprep.subr.mxu0 0.0
    %579 = vmatpush1.msra.mxu0 0.0
    %580 = vmatprep.subr.mxu0 0.0
    %581 = vmatpush1.msra.mxu0 0.0
    %582 = vmatprep.subr.mxu0 0.0
    %583 = vmatpush1.msra.mxu0 0.0
    %584 = vmatprep.subr.mxu0 0.0
    %585 = vmatpush1.msra.mxu0 0.0
    %586 = vmatprep.subr.mxu0 0.0
    %587 = vmatpush1.msra.mxu0 0.0
    %588 = vmatprep.subr.mxu0 0.0
    %589 = vmatpush1.msra.mxu0 0.0
    %590 = vmatprep.subr.mxu0 0.0
    %591 = vmatpush1.msra.mxu0 0.0
    %592 = vmatprep.mubr.f32.mxu0 0.0
    %593 = vmatmul.mubr.f32.gmra.mrb[0].mxu0 %v526
    %v594 = vpop.f32.mrb[0].mxu0
    %v595 = vadd.f32 0.0, %v594
    %v596 = vpop.f32.mrb[0].mxu0
    %v597 = vadd.f32 0.0, %v596
    %598 = vdwg.mxu0
    %v601 = vrot.slane %v595, 2
    %v602 = vrot.slane %v597, 2
    %v605 = vadd.f32 %v522, %v601
    %v606 = vadd.f32 %v523, %v602
    %v607 = vxor.u32 %v605, 2147483648
    %v608 = vxor.u32 %v606, 2147483648
    %v609 = vmul.f32 %v607, 1.442695
    %v610 = vpow.pop %v609
    %v611 = vmul.f32 %v608, 1.442695
    %v612 = vpow.pop %v611
    %v613 = vadd.f32 %v610, 1.0
    %v614 = vadd.f32 %v612, 1.0
    %v615 = vrcp.pop %v613
    %v616 = vmul.f32 1.0, %v615
    %v617 = vrcp.pop %v614
    %v618 = vmul.f32 1.0, %v617
    %v619 = vmul.f32 %v618, 2.0
    %v620 = vsub.f32 %v619, 1.0
    %v622 = vrot.slane %v515, 6
    %v624 = vmul.f32 %v616, %v622
    %626 = vrot.lane.b32.xlu0 %v620, 64
    %v627 = vpop.permute.xlu0 %626
    %v629 = vmul.f32 %v616, %v627
    %631 = vrot.lane.b32.xlu0 %v629, 64
    %v632 = vpop.permute.xlu0 %631
    %v634 = vadd.f32 %v624, %v632
    %v635 = vtanh.pop %v634
    %637 = vrot.lane.b32.xlu0 %v635, 64
    %v638 = vpop.permute.xlu0 %637
    %v640 = vmul.f32 %v618, %v638
    %v641 = vld [vmem:[#allocation2 + $0x10] sm:$0x3]
    %v642 = vld [vmem:[#allocation2 + $0x18] sm:$0x3]
    %v644 = vrot.slane %v640, 6
    %v645 = vsel %vm72, %v644, 0
    %647 = vmatprep.subr.mxu0 %v163
    %648 = vmatpush1.msra.mxu0 %v162
    %649 = vmatprep.subr.mxu0 %v165
    %650 = vmatpush1.msra.mxu0 %v164
    %651 = vmatprep.subr.mxu0 %v167
    %652 = vmatpush1.msra.mxu0 %v166
    %653 = vmatprep.subr.mxu0 %v169
    %654 = vmatpush1.msra.mxu0 %v168
    %655 = vmatprep.subr.mxu0 %v171
    %656 = vmatpush1.msra.mxu0 %v170
    %657 = vmatprep.subr.mxu0 %v173
    %658 = vmatpush1.msra.mxu0 %v172
    %659 = vmatprep.subr.mxu0 %v175
    %660 = vmatpush1.msra.mxu0 %v174
    %661 = vmatprep.subr.mxu0 %v177
    %662 = vmatpush1.msra.mxu0 %v176
    %663 = vmatprep.subr.mxu0 0.0
    %664 = vmatpush1.msra.mxu0 0.0
    %665 = vmatprep.subr.mxu0 0.0
    %666 = vmatpush1.msra.mxu0 0.0
    %667 = vmatprep.subr.mxu0 0.0
    %668 = vmatpush1.msra.mxu0 0.0
    %669 = vmatprep.subr.mxu0 0.0
    %670 = vmatpush1.msra.mxu0 0.0
    %671 = vmatprep.subr.mxu0 0.0
    %672 = vmatpush1.msra.mxu0 0.0
    %673 = vmatprep.subr.mxu0 0.0
    %674 = vmatpush1.msra.mxu0 0.0
    %675 = vmatprep.subr.mxu0 0.0
    %676 = vmatpush1.msra.mxu0 0.0
    %677 = vmatprep.subr.mxu0 0.0
    %678 = vmatpush1.msra.mxu0 0.0
    %679 = vmatprep.subr.mxu0 0.0
    %680 = vmatpush1.msra.mxu0 0.0
    %681 = vmatprep.subr.mxu0 0.0
    %682 = vmatpush1.msra.mxu0 0.0
    %683 = vmatprep.subr.mxu0 0.0
    %684 = vmatpush1.msra.mxu0 0.0
    %685 = vmatprep.subr.mxu0 0.0
    %686 = vmatpush1.msra.mxu0 0.0
    %687 = vmatprep.subr.mxu0 0.0
    %688 = vmatpush1.msra.mxu0 0.0
    %689 = vmatprep.subr.mxu0 0.0
    %690 = vmatpush1.msra.mxu0 0.0
    %691 = vmatprep.subr.mxu0 0.0
    %692 = vmatpush1.msra.mxu0 0.0
    %693 = vmatprep.subr.mxu0 0.0
    %694 = vmatpush1.msra.mxu0 0.0
    %695 = vmatprep.subr.mxu0 0.0
    %696 = vmatpush1.msra.mxu0 0.0
    %697 = vmatprep.subr.mxu0 0.0
    %698 = vmatpush1.msra.mxu0 0.0
    %699 = vmatprep.subr.mxu0 0.0
    %700 = vmatpush1.msra.mxu0 0.0
    %701 = vmatprep.subr.mxu0 0.0
    %702 = vmatpush1.msra.mxu0 0.0
    %703 = vmatprep.subr.mxu0 0.0
    %704 = vmatpush1.msra.mxu0 0.0
    %705 = vmatprep.subr.mxu0 0.0
    %706 = vmatpush1.msra.mxu0 0.0
    %707 = vmatprep.subr.mxu0 0.0
    %708 = vmatpush1.msra.mxu0 0.0
    %709 = vmatprep.subr.mxu0 0.0
    %710 = vmatpush1.msra.mxu0 0.0
    %711 = vmatprep.mubr.f32.mxu0 0.0
    %712 = vmatmul.mubr.f32.gmra.mrb[0].mxu0 %v645
    %v713 = vpop.f32.mrb[0].mxu0
    %v714 = vadd.f32 0.0, %v713
    %v715 = vpop.f32.mrb[0].mxu0
    %v716 = vadd.f32 0.0, %v715
    %717 = vdwg.mxu0
    %v718 = vadd.f32 %v641, %v714
    %v719 = vadd.f32 %v642, %v716
    %v720 = vxor.u32 %v718, 2147483648
    %v721 = vxor.u32 %v719, 2147483648
    %v722 = vmul.f32 %v720, 1.442695
    %v723 = vpow.pop %v722
    %v724 = vmul.f32 %v721, 1.442695
    %v725 = vpow.pop %v724
    %v726 = vadd.f32 %v723, 1.0
    %v727 = vadd.f32 %v725, 1.0
    %v728 = vrcp.pop %v726
    %v729 = vmul.f32 1.0, %v728
    %v730 = vrcp.pop %v727
    %v731 = vmul.f32 1.0, %v730
    %v732 = vmul.f32 %v731, 2.0
    %v733 = vsub.f32 %v732, 1.0
    %v735 = vrot.slane %v634, 6
    %v737 = vmul.f32 %v729, %v735
    %739 = vrot.lane.b32.xlu0 %v733, 64
    %v740 = vpop.permute.xlu0 %739
    %v742 = vmul.f32 %v729, %v740
    %744 = vrot.lane.b32.xlu0 %v742, 64
    %v745 = vpop.permute.xlu0 %744
    %v747 = vadd.f32 %v737, %v745
    %v748 = vtanh.pop %v747
    %750 = vrot.lane.b32.xlu0 %v748, 64
    %v751 = vpop.permute.xlu0 %750
    %v753 = vmul.f32 %v731, %v751
    %v754 = vld [vmem:[#allocation2 + $0x10] sm:$0xc]
    %v755 = vld [vmem:[#allocation2 + $0x18] sm:$0xc]
    %v757 = vsel %vm72, %v753, 0
    %759 = vmatprep.subr.mxu0 %v163
    %760 = vmatpush1.msra.mxu0 %v162
    %761 = vmatprep.subr.mxu0 %v165
    %762 = vmatpush1.msra.mxu0 %v164
    %763 = vmatprep.subr.mxu0 %v167
    %764 = vmatpush1.msra.mxu0 %v166
    %765 = vmatprep.subr.mxu0 %v169
    %766 = vmatpush1.msra.mxu0 %v168
    %767 = vmatprep.subr.mxu0 %v171
    %768 = vmatpush1.msra.mxu0 %v170
    %769 = vmatprep.subr.mxu0 %v173
    %770 = vmatpush1.msra.mxu0 %v172
    %771 = vmatprep.subr.mxu0 %v175
    %772 = vmatpush1.msra.mxu0 %v174
    %773 = vmatprep.subr.mxu0 %v177
    %774 = vmatpush1.msra.mxu0 %v176
    %775 = vmatprep.subr.mxu0 0.0
    %776 = vmatpush1.msra.mxu0 0.0
    %777 = vmatprep.subr.mxu0 0.0
    %778 = vmatpush1.msra.mxu0 0.0
    %779 = vmatprep.subr.mxu0 0.0
    %780 = vmatpush1.msra.mxu0 0.0
    %781 = vmatprep.subr.mxu0 0.0
    %782 = vmatpush1.msra.mxu0 0.0
    %783 = vmatprep.subr.mxu0 0.0
    %784 = vmatpush1.msra.mxu0 0.0
    %785 = vmatprep.subr.mxu0 0.0
    %786 = vmatpush1.msra.mxu0 0.0
    %787 = vmatprep.subr.mxu0 0.0
    %788 = vmatpush1.msra.mxu0 0.0
    %789 = vmatprep.subr.mxu0 0.0
    %790 = vmatpush1.msra.mxu0 0.0
    %791 = vmatprep.subr.mxu0 0.0
    %792 = vmatpush1.msra.mxu0 0.0
    %793 = vmatprep.subr.mxu0 0.0
    %794 = vmatpush1.msra.mxu0 0.0
    %795 = vmatprep.subr.mxu0 0.0
    %796 = vmatpush1.msra.mxu0 0.0
    %797 = vmatprep.subr.mxu0 0.0
    %798 = vmatpush1.msra.mxu0 0.0
    %799 = vmatprep.subr.mxu0 0.0
    %800 = vmatpush1.msra.mxu0 0.0
    %801 = vmatprep.subr.mxu0 0.0
    %802 = vmatpush1.msra.mxu0 0.0
    %803 = vmatprep.subr.mxu0 0.0
    %804 = vmatpush1.msra.mxu0 0.0
    %805 = vmatprep.subr.mxu0 0.0
    %806 = vmatpush1.msra.mxu0 0.0
    %807 = vmatprep.subr.mxu0 0.0
    %808 = vmatpush1.msra.mxu0 0.0
    %809 = vmatprep.subr.mxu0 0.0
    %810 = vmatpush1.msra.mxu0 0.0
    %811 = vmatprep.subr.mxu0 0.0
    %812 = vmatpush1.msra.mxu0 0.0
    %813 = vmatprep.subr.mxu0 0.0
    %814 = vmatpush1.msra.mxu0 0.0
    %815 = vmatprep.subr.mxu0 0.0
    %816 = vmatpush1.msra.mxu0 0.0
    %817 = vmatprep.subr.mxu0 0.0
    %818 = vmatpush1.msra.mxu0 0.0
    %819 = vmatprep.subr.mxu0 0.0
    %820 = vmatpush1.msra.mxu0 0.0
    %821 = vmatprep.subr.mxu0 0.0
    %822 = vmatpush1.msra.mxu0 0.0
    %823 = vmatprep.mubr.f32.mxu0 0.0
    %824 = vmatmul.mubr.f32.gmra.mrb[0].mxu0 %v757
    %v825 = vpop.f32.mrb[0].mxu0
    %v826 = vadd.f32 0.0, %v825
    %v827 = vpop.f32.mrb[0].mxu0
    %v828 = vadd.f32 0.0, %v827
    %829 = vdwg.mxu0
    %v832 = vrot.slane %v826, 6
    %v833 = vrot.slane %v828, 6
    %v836 = vadd.f32 %v754, %v832
    %v837 = vadd.f32 %v755, %v833
    %v838 = vxor.u32 %v836, 2147483648
    %v839 = vxor.u32 %v837, 2147483648
    %v840 = vmul.f32 %v838, 1.442695
    %v841 = vpow.pop %v840
    %v842 = vmul.f32 %v839, 1.442695
    %v843 = vpow.pop %v842
    %v844 = vadd.f32 %v841, 1.0
    %v845 = vadd.f32 %v843, 1.0
    %v846 = vrcp.pop %v844
    %v847 = vmul.f32 1.0, %v846
    %v848 = vrcp.pop %v845
    %v849 = vmul.f32 1.0, %v848
    %v850 = vmul.f32 %v849, 2.0
    %v851 = vsub.f32 %v850, 1.0
    %v853 = vrot.slane %v747, 6
    %v855 = vmul.f32 %v847, %v853
    %857 = vrot.lane.b32.xlu0 %v851, 64
    %v858 = vpop.permute.xlu0 %857
    %v860 = vmul.f32 %v847, %v858
    %862 = vrot.lane.b32.xlu0 %v860, 64
    %v863 = vpop.permute.xlu0 %862
    %v865 = vadd.f32 %v855, %v863
    %v866 = vtanh.pop %v865
    %868 = vrot.lane.b32.xlu0 %v866, 64
    %v869 = vpop.permute.xlu0 %868
    %v871 = vmul.f32 %v849, %v869
    %v872 = vld [vmem:[#allocation2 + $0x10] sm:$0x30]
    %v873 = vld [vmem:[#allocation2 + $0x18] sm:$0x30]
    %v875 = vrot.slane %v871, 2
    %v876 = vsel %vm72, %v875, 0
    %878 = vmatprep.subr.mxu0 %v163
    %879 = vmatpush1.msra.mxu0 %v162
    %880 = vmatprep.subr.mxu0 %v165
    %881 = vmatpush1.msra.mxu0 %v164
    %882 = vmatprep.subr.mxu0 %v167
    %883 = vmatpush1.msra.mxu0 %v166
    %884 = vmatprep.subr.mxu0 %v169
    %885 = vmatpush1.msra.mxu0 %v168
    %886 = vmatprep.subr.mxu0 %v171
    %887 = vmatpush1.msra.mxu0 %v170
    %888 = vmatprep.subr.mxu0 %v173
    %889 = vmatpush1.msra.mxu0 %v172
    %890 = vmatprep.subr.mxu0 %v175
    %891 = vmatpush1.msra.mxu0 %v174
    %892 = vmatprep.subr.mxu0 %v177
    %893 = vmatpush1.msra.mxu0 %v176
    %894 = vmatprep.subr.mxu0 0.0
    %895 = vmatpush1.msra.mxu0 0.0
    %896 = vmatprep.subr.mxu0 0.0
    %897 = vmatpush1.msra.mxu0 0.0
    %898 = vmatprep.subr.mxu0 0.0
    %899 = vmatpush1.msra.mxu0 0.0
    %900 = vmatprep.subr.mxu0 0.0
    %901 = vmatpush1.msra.mxu0 0.0
    %902 = vmatprep.subr.mxu0 0.0
    %903 = vmatpush1.msra.mxu0 0.0
    %904 = vmatprep.subr.mxu0 0.0
    %905 = vmatpush1.msra.mxu0 0.0
    %906 = vmatprep.subr.mxu0 0.0
    %907 = vmatpush1.msra.mxu0 0.0
    %908 = vmatprep.subr.mxu0 0.0
    %909 = vmatpush1.msra.mxu0 0.0
    %910 = vmatprep.subr.mxu0 0.0
    %911 = vmatpush1.msra.mxu0 0.0
    %912 = vmatprep.subr.mxu0 0.0
    %913 = vmatpush1.msra.mxu0 0.0
    %914 = vmatprep.subr.mxu0 0.0
    %915 = vmatpush1.msra.mxu0 0.0
    %916 = vmatprep.subr.mxu0 0.0
    %917 = vmatpush1.msra.mxu0 0.0
    %918 = vmatprep.subr.mxu0 0.0
    %919 = vmatpush1.msra.mxu0 0.0
    %920 = vmatprep.subr.mxu0 0.0
    %921 = vmatpush1.msra.mxu0 0.0
    %922 = vmatprep.subr.mxu0 0.0
    %923 = vmatpush1.msra.mxu0 0.0
    %924 = vmatprep.subr.mxu0 0.0
    %925 = vmatpush1.msra.mxu0 0.0
    %926 = vmatprep.subr.mxu0 0.0
    %927 = vmatpush1.msra.mxu0 0.0
    %928 = vmatprep.subr.mxu0 0.0
    %929 = vmatpush1.msra.mxu0 0.0
    %930 = vmatprep.subr.mxu0 0.0
    %931 = vmatpush1.msra.mxu0 0.0
    %932 = vmatprep.subr.mxu0 0.0
    %933 = vmatpush1.msra.mxu0 0.0
    %934 = vmatprep.subr.mxu0 0.0
    %935 = vmatpush1.msra.mxu0 0.0
    %936 = vmatprep.subr.mxu0 0.0
    %937 = vmatpush1.msra.mxu0 0.0
    %938 = vmatprep.subr.mxu0 0.0
    %939 = vmatpush1.msra.mxu0 0.0
    %940 = vmatprep.subr.mxu0 0.0
    %941 = vmatpush1.msra.mxu0 0.0
    %942 = vmatprep.mubr.f32.mxu0 0.0
    %943 = vmatmul.mubr.f32.gmra.mrb[0].mxu0 %v876
    %v944 = vpop.f32.mrb[0].mxu0
    %v945 = vadd.f32 0.0, %v944
    %v946 = vpop.f32.mrb[0].mxu0
    %v947 = vadd.f32 0.0, %v946
    %948 = vdwg.mxu0
    %v951 = vrot.slane %v945, 4
    %v952 = vrot.slane %v947, 4
    %v955 = vadd.f32 %v872, %v951
    %v956 = vadd.f32 %v873, %v952
    %v957 = vxor.u32 %v955, 2147483648
    %v958 = vxor.u32 %v956, 2147483648
    %v959 = vmul.f32 %v957, 1.442695
    %v960 = vpow.pop %v959
    %v961 = vmul.f32 %v958, 1.442695
    %v962 = vpow.pop %v961
    %v963 = vadd.f32 %v960, 1.0
    %v964 = vadd.f32 %v962, 1.0
    %v965 = vrcp.pop %v963
    %v966 = vmul.f32 1.0, %v965
    %v967 = vrcp.pop %v964
    %v968 = vmul.f32 1.0, %v967
    %v969 = vmul.f32 %v968, 2.0
    %v970 = vsub.f32 %v969, 1.0
    %v972 = vrot.slane %v865, 6
    %v974 = vmul.f32 %v966, %v972
    %976 = vrot.lane.b32.xlu0 %v970, 64
    %v977 = vpop.permute.xlu0 %976
    %v979 = vmul.f32 %v966, %v977
    %981 = vrot.lane.b32.xlu0 %v979, 64
    %v982 = vpop.permute.xlu0 %981
    %v984 = vadd.f32 %v974, %v982
    %v985 = vtanh.pop %v984
    %987 = vrot.lane.b32.xlu0 %v985, 64
    %v988 = vpop.permute.xlu0 %987
    %v990 = vmul.f32 %v968, %v988
    %v991 = vld [vmem:[#allocation2 + $0x10] sm:$0xc0]
    %v992 = vld [vmem:[#allocation2 + $0x18] sm:$0xc0]
    %v994 = vrot.slane %v990, 4
    %v995 = vsel %vm72, %v994, 0
    %997 = vmatprep.subr.mxu0 %v163
    %998 = vmatpush1.msra.mxu0 %v162
    %999 = vmatprep.subr.mxu0 %v165
    %1000 = vmatpush1.msra.mxu0 %v164
    %1001 = vmatprep.subr.mxu0 %v167
    %1002 = vmatpush1.msra.mxu0 %v166
    %1003 = vmatprep.subr.mxu0 %v169
    %1004 = vmatpush1.msra.mxu0 %v168
    %1005 = vmatprep.subr.mxu0 %v171
    %1006 = vmatpush1.msra.mxu0 %v170
    %1007 = vmatprep.subr.mxu0 %v173
    %1008 = vmatpush1.msra.mxu0 %v172
    %1009 = vmatprep.subr.mxu0 %v175
    %1010 = vmatpush1.msra.mxu0 %v174
    %1011 = vmatprep.subr.mxu0 %v177
    %1012 = vmatpush1.msra.mxu0 %v176
    %1013 = vmatprep.subr.mxu0 0.0
    %1014 = vmatpush1.msra.mxu0 0.0
    %1015 = vmatprep.subr.mxu0 0.0
    %1016 = vmatpush1.msra.mxu0 0.0
    %1017 = vmatprep.subr.mxu0 0.0
    %1018 = vmatpush1.msra.mxu0 0.0
    %1019 = vmatprep.subr.mxu0 0.0
    %1020 = vmatpush1.msra.mxu0 0.0
    %1021 = vmatprep.subr.mxu0 0.0
    %1022 = vmatpush1.msra.mxu0 0.0
    %1023 = vmatprep.subr.mxu0 0.0
    %1024 = vmatpush1.msra.mxu0 0.0
    %1025 = vmatprep.subr.mxu0 0.0
    %1026 = vmatpush1.msra.mxu0 0.0
    %1027 = vmatprep.subr.mxu0 0.0
    %1028 = vmatpush1.msra.mxu0 0.0
    %1029 = vmatprep.subr.mxu0 0.0
    %1030 = vmatpush1.msra.mxu0 0.0
    %1031 = vmatprep.subr.mxu0 0.0
    %1032 = vmatpush1.msra.mxu0 0.0
    %1033 = vmatprep.subr.mxu0 0.0
    %1034 = vmatpush1.msra.mxu0 0.0
    %1035 = vmatprep.subr.mxu0 0.0
    %1036 = vmatpush1.msra.mxu0 0.0
    %1037 = vmatprep.subr.mxu0 0.0
    %1038 = vmatpush1.msra.mxu0 0.0
    %1039 = vmatprep.subr.mxu0 0.0
    %1040 = vmatpush1.msra.mxu0 0.0
    %1041 = vmatprep.subr.mxu0 0.0
    %1042 = vmatpush1.msra.mxu0 0.0
    %1043 = vmatprep.subr.mxu0 0.0
    %1044 = vmatpush1.msra.mxu0 0.0
    %1045 = vmatprep.subr.mxu0 0.0
    %1046 = vmatpush1.msra.mxu0 0.0
    %1047 = vmatprep.subr.mxu0 0.0
    %1048 = vmatpush1.msra.mxu0 0.0
    %1049 = vmatprep.subr.mxu0 0.0
    %1050 = vmatpush1.msra.mxu0 0.0
    %1051 = vmatprep.subr.mxu0 0.0
    %1052 = vmatpush1.msra.mxu0 0.0
    %1053 = vmatprep.subr.mxu0 0.0
    %1054 = vmatpush1.msra.mxu0 0.0
    %1055 = vmatprep.subr.mxu0 0.0
    %1056 = vmatpush1.msra.mxu0 0.0
    %1057 = vmatprep.subr.mxu0 0.0
    %1058 = vmatpush1.msra.mxu0 0.0
    %1059 = vmatprep.subr.mxu0 0.0
    %1060 = vmatpush1.msra.mxu0 0.0
    %1061 = vmatprep.mubr.f32.mxu0 0.0
    %1062 = vmatmul.mubr.f32.gmra.mrb[0].mxu0 %v995
    %v1063 = vpop.f32.mrb[0].mxu0
    %v1064 = vadd.f32 0.0, %v1063
    %v1065 = vpop.f32.mrb[0].mxu0
    %v1066 = vadd.f32 0.0, %v1065
    %1067 = vdwg.mxu0
    %v1070 = vrot.slane %v1064, 2
    %v1071 = vrot.slane %v1066, 2
    %v1074 = vadd.f32 %v991, %v1070
    %v1075 = vadd.f32 %v992, %v1071
    %v1076 = vxor.u32 %v1074, 2147483648
    %v1077 = vxor.u32 %v1075, 2147483648
    %v1078 = vmul.f32 %v1076, 1.442695
    %v1079 = vpow.pop %v1078
    %v1080 = vmul.f32 %v1077, 1.442695
    %v1081 = vpow.pop %v1080
    %v1082 = vadd.f32 %v1079, 1.0
    %v1083 = vadd.f32 %v1081, 1.0
    %v1084 = vrcp.pop %v1082
    %v1085 = vmul.f32 1.0, %v1084
    %v1086 = vrcp.pop %v1083
    %v1087 = vmul.f32 1.0, %v1086
    %v1088 = vmul.f32 %v1087, 2.0
    %v1089 = vsub.f32 %v1088, 1.0
    %v1091 = vrot.slane %v984, 6
    %v1093 = vmul.f32 %v1085, %v1091
    %1095 = vrot.lane.b32.xlu0 %v1089, 64
    %v1096 = vpop.permute.xlu0 %1095
    %v1098 = vmul.f32 %v1085, %v1096
    %1100 = vrot.lane.b32.xlu0 %v1098, 64
    %v1101 = vpop.permute.xlu0 %1100
    %v1103 = vadd.f32 %v1093, %v1101
    %v1104 = vtanh.pop %v1103
    %1106 = vrot.lane.b32.xlu0 %v1104, 64
    %v1107 = vpop.permute.xlu0 %1106
    %v1109 = vmul.f32 %v1087, %v1107
    %v1111 = vrot.slane %v1109, 6
    %1112 = vrot.lane.b32.xlu0 %v1111, 64
    %v1113 = vpop.permute.xlu0 %1112
    %v1115 = vsel %vm72, %v284, %v1113
    %v1116 = vrot.slane %v990, 2
    %1117 = vrot.lane.b32.xlu0 %v1116, 64
    %v1118 = vpop.permute.xlu0 %1117
    %v1120 = vsel %vm72, %v402, %v1118
    %v1121 = vrot.slane %v871, 6
    %1122 = vrot.lane.b32.xlu0 %v1121, 64
    %v1123 = vpop.permute.xlu0 %1122
    %v1125 = vsel %vm72, %v521, %v1123
    %v1126 = vrot.slane %v753, 2
    %1127 = vrot.lane.b32.xlu0 %v1126, 64
    %v1128 = vpop.permute.xlu0 %1127
    %v1130 = vsel %vm72, %v640, %v1128
    %1131 = vrot.lane.b32.xlu0 %v644, 64
    %v1132 = vpop.permute.xlu0 %1131
    %v1134 = vsel %vm72, %v753, %v1132
    %v1135 = vrot.slane %v521, 2
    %1136 = vrot.lane.b32.xlu0 %v1135, 64
    %v1137 = vpop.permute.xlu0 %1136
    %v1139 = vsel %vm72, %v871, %v1137
    %v1140 = vrot.slane %v402, 6
    %1141 = vrot.lane.b32.xlu0 %v1140, 64
    %v1142 = vpop.permute.xlu0 %1141
    %v1144 = vsel %vm72, %v990, %v1142
    %v1145 = vrot.slane %v284, 2
    %1146 = vrot.lane.b32.xlu0 %v1145, 64
    %v1147 = vpop.permute.xlu0 %1146
    %v1149 = vsel %vm72, %v1109, %v1147
    %vm1150 = vcmask 1041408
    %v1151 = vsel %vm1150, %v1115, %v1120
    %vm1152 = vcmask 1043456
    %v1153 = vsel %vm1152, %v1151, %v1125
    %vm1154 = vcmask 1045504
    %v1155 = vsel %vm1154, %v1153, %v1130
    %v1156 = vsel %vm1150, %v1134, %v1139
    %v1157 = vsel %vm1152, %v1156, %v1144
    %v1158 = vsel %vm1154, %v1157, %v1149
    %v1159 = vld [vmem:[%s4] sm:$0xff]
    %v1160 = vld [vmem:[%s4 + $0x8] sm:$0xff]
    %v1161 = vld [vmem:[%s4 + $0x10] sm:$0xff]
    %v1162 = vld [vmem:[%s4 + $0x18] sm:$0xff]
    %v1163 = vld [vmem:[%s4 + $0x20] sm:$0xff]
    %v1164 = vld [vmem:[%s4 + $0x28] sm:$0xff]
    %v1165 = vld [vmem:[%s4 + $0x30] sm:$0xff]
    %v1166 = vld [vmem:[%s4 + $0x38] sm:$0xff]
    %v1167 = vld [vmem:[%s4 + $0x40] sm:$0xff]
    %v1168 = vld [vmem:[%s4 + $0x48] sm:$0xff]
    %v1169 = vld [vmem:[%s4 + $0x50] sm:$0xff]
    %v1170 = vld [vmem:[%s4 + $0x58] sm:$0xff]
    %v1171 = vld [vmem:[%s4 + $0x60] sm:$0xff]
    %v1172 = vld [vmem:[%s4 + $0x68] sm:$0xff]
    %v1173 = vld [vmem:[%s4 + $0x70] sm:$0xff]
    %v1174 = vld [vmem:[%s4 + $0x78] sm:$0xff]
    %v1175 = vld [vmem:[%s4 + $0x80] sm:$0xff]
    %v1176 = vld [vmem:[%s4 + $0x88] sm:$0xff]
    %v1177 = vld [vmem:[%s4 + $0x90] sm:$0xff]
    %v1178 = vld [vmem:[%s4 + $0x98] sm:$0xff]
    %v1179 = vld [vmem:[%s4 + $0xa0] sm:$0xff]
    %v1180 = vld [vmem:[%s4 + $0xa8] sm:$0xff]
    %v1181 = vld [vmem:[%s4 + $0xb0] sm:$0xff]
    %v1182 = vld [vmem:[%s4 + $0xb8] sm:$0xff]
    %v1183 = vld [vmem:[%s4 + $0xc0] sm:$0xff]
    %v1184 = vld [vmem:[%s4 + $0xc8] sm:$0xff]
    %v1185 = vld [vmem:[%s4 + $0xd0] sm:$0xff]
    %v1186 = vld [vmem:[%s4 + $0xd8] sm:$0xff]
    %v1187 = vld [vmem:[%s4 + $0xe0] sm:$0xff]
    %v1188 = vld [vmem:[%s4 + $0xe8] sm:$0xff]
    %v1189 = vld [vmem:[%s4 + $0xf0] sm:$0xff]
    %v1190 = vld [vmem:[%s4 + $0xf8] sm:$0xff]
    %v1191 = vld [vmem:[%s6] sm:$0x3]
    %v1193 = vlaneseq
    %v1194 = vshrl.u32 %v1193, 7
    %v1195 = vsub.s32 0, %v1194
    %v1196 = vrot.slane %v1191, %v1195
    %v1197 = vlaneseq
    %v1198 = vshrl.u32 %v1197, 7
    %v1199 = vsub.s32 1, %v1198
    %v1200 = vrot.slane %v1191, %v1199
    %1203 = vmatprep.subr.mxu0 %v1160
    %1204 = vmatpush1.msra.mxu0 %v1159
    %1205 = vmatprep.subr.mxu0 %v1162
    %1206 = vmatpush1.msra.mxu0 %v1161
    %1207 = vmatprep.subr.mxu0 %v1164
    %1208 = vmatpush1.msra.mxu0 %v1163
    %1209 = vmatprep.subr.mxu0 %v1166
    %1210 = vmatpush1.msra.mxu0 %v1165
    %1211 = vmatprep.subr.mxu0 %v1168
    %1212 = vmatpush1.msra.mxu0 %v1167
    %1213 = vmatprep.subr.mxu0 %v1170
    %1214 = vmatpush1.msra.mxu0 %v1169
    %1215 = vmatprep.subr.mxu0 %v1172
    %1216 = vmatpush1.msra.mxu0 %v1171
    %1217 = vmatprep.subr.mxu0 %v1174
    %1218 = vmatpush1.msra.mxu0 %v1173
    %1219 = vmatprep.subr.mxu0 %v1176
    %1220 = vmatpush1.msra.mxu0 %v1175
    %1221 = vmatprep.subr.mxu0 %v1178
    %1222 = vmatpush1.msra.mxu0 %v1177
    %1223 = vmatprep.subr.mxu0 %v1180
    %1224 = vmatpush1.msra.mxu0 %v1179
    %1225 = vmatprep.subr.mxu0 %v1182
    %1226 = vmatpush1.msra.mxu0 %v1181
    %1227 = vmatprep.subr.mxu0 %v1184
    %1228 = vmatpush1.msra.mxu0 %v1183
    %1229 = vmatprep.subr.mxu0 %v1186
    %1230 = vmatpush1.msra.mxu0 %v1185
    %1231 = vmatprep.subr.mxu0 %v1188
    %1232 = vmatpush1.msra.mxu0 %v1187
    %1233 = vmatprep.subr.mxu0 %v1190
    %1234 = vmatpush1.msra.mxu0 %v1189
    %1235 = vmatprep.subr.mxu0 0.0
    %1236 = vmatpush1.msra.mxu0 0.0
    %1237 = vmatprep.subr.mxu0 0.0
    %1238 = vmatpush1.msra.mxu0 0.0
    %1239 = vmatprep.subr.mxu0 0.0
    %1240 = vmatpush1.msra.mxu0 0.0
    %1241 = vmatprep.subr.mxu0 0.0
    %1242 = vmatpush1.msra.mxu0 0.0
    %1243 = vmatprep.subr.mxu0 0.0
    %1244 = vmatpush1.msra.mxu0 0.0
    %1245 = vmatprep.subr.mxu0 0.0
    %1246 = vmatpush1.msra.mxu0 0.0
    %1247 = vmatprep.subr.mxu0 0.0
    %1248 = vmatpush1.msra.mxu0 0.0
    %1249 = vmatprep.subr.mxu0 0.0
    %1250 = vmatpush1.msra.mxu0 0.0
    %1251 = vmatprep.subr.mxu0 0.0
    %1252 = vmatpush1.msra.mxu0 0.0
    %1253 = vmatprep.subr.mxu0 0.0
    %1254 = vmatpush1.msra.mxu0 0.0
    %1255 = vmatprep.subr.mxu0 0.0
    %1256 = vmatpush1.msra.mxu0 0.0
    %1257 = vmatprep.subr.mxu0 0.0
    %1258 = vmatpush1.msra.mxu0 0.0
    %1259 = vmatprep.subr.mxu0 0.0
    %1260 = vmatpush1.msra.mxu0 0.0
    %1261 = vmatprep.subr.mxu0 0.0
    %1262 = vmatpush1.msra.mxu0 0.0
    %1263 = vmatprep.subr.mxu0 0.0
    %1264 = vmatpush1.msra.mxu0 0.0
    %1265 = vmatprep.subr.mxu0 0.0
    %1266 = vmatpush1.msra.mxu0 0.0
    %1267 = vmatprep.mubr.f32.mxu0 0.0
    %1268 = vmatmul.mubr.f32.gmra.mrb[0].mxu0 %v1155
    %v1269 = vpop.f32.mrb[0].mxu0
    %v1270 = vadd.f32 %v1196, %v1269
    %v1271 = vpop.f32.mrb[0].mxu0
    %v1272 = vadd.f32 %v1200, %v1271
    %1273 = vmatprep.mubr.f32.mxu0 0.0
    %1274 = vmatmul.mubr.f32.gmra.mrb[0].mxu0 %v1158
    %v1275 = vpop.f32.mrb[0].mxu0
    %v1276 = vadd.f32 %v1196, %v1275
    %v1277 = vpop.f32.mrb[0].mxu0
    %v1278 = vadd.f32 %v1200, %v1277
    %1279 = vdwg.mxu0
    %1280 = vst [vmem:[#allocation3] sm:$0xff] %v1270
    %1281 = vst.msk [vmem:[#allocation3 + $0x8] sm:$0xff] %vm72, %v1272
    %1282 = vst [vmem:[#allocation3 + $0x10] sm:$0xff] %v1276
    %1283 = vst.msk [vmem:[#allocation3 + $0x18] sm:$0xff] %vm72, %v1278
    %v1284 = vld [vmem:[%s7] sm:$0x1]
    %v1286 = vlaneseq
    %v1287 = vshrl.u32 %v1286, 7
    %v1288 = vsub.s32 0, %v1287
    %v1289 = vrot.slane %v1284, %v1288
    %v1291 = vld [vmem:[#allocation3] sm:$0x3]
    %v1292 = vld [vmem:[#allocation3 + $0x8] sm:$0x3]
    %v1293 = vld [vmem:[%s5] sm:$0xff]
    %v1294 = vld [vmem:[%s5 + $0x8] sm:$0xff]
    %v1295 = vld [vmem:[%s5 + $0x10] sm:$0xff]
    %v1296 = vld [vmem:[%s5 + $0x18] sm:$0xff]
    %v1297 = vld [vmem:[%s5 + $0x20] sm:$0xff]
    %v1298 = vld [vmem:[%s5 + $0x28] sm:$0xff]
    %v1299 = vld [vmem:[%s5 + $0x30] sm:$0xff]
    %v1300 = vld [vmem:[%s5 + $0x38] sm:$0xff]
    %v1301 = vld [vmem:[%s5 + $0x40] sm:$0xff]
    %v1302 = vld [vmem:[%s5 + $0x48] sm:$0xff]
    %v1303 = vld [vmem:[%s5 + $0x50] sm:$0xff]
    %v1304 = vld [vmem:[%s5 + $0x58] sm:$0xff]
    %v1305 = vld [vmem:[%s5 + $0x60] sm:$0xff]
    %v1306 = vld [vmem:[%s5 + $0x68] sm:$0xff]
    %v1307 = vld [vmem:[%s5 + $0x70] sm:$0xff]
    %v1308 = vld [vmem:[%s5 + $0x78] sm:$0xff]
    %1309 = vmatprep.subr.mxu0 %v1294
    %1310 = vmatpush1.msra.mxu0 %v1293
    %1311 = vmatprep.subr.mxu0 %v1296
    %1312 = vmatpush1.msra.mxu0 %v1295
    %1313 = vmatprep.subr.mxu0 %v1298
    %1314 = vmatpush1.msra.mxu0 %v1297
    %1315 = vmatprep.subr.mxu0 %v1300
    %1316 = vmatpush1.msra.mxu0 %v1299
    %1317 = vmatprep.subr.mxu0 %v1302
    %1318 = vmatpush1.msra.mxu0 %v1301
    %1319 = vmatprep.subr.mxu0 %v1304
    %1320 = vmatpush1.msra.mxu0 %v1303
    %1321 = vmatprep.subr.mxu0 %v1306
    %1322 = vmatpush1.msra.mxu0 %v1305
    %1323 = vmatprep.subr.mxu0 %v1308
    %1324 = vmatpush1.msra.mxu0 %v1307
    %1325 = vmatprep.subr.mxu0 0.0
    %1326 = vmatpush1.msra.mxu0 0.0
    %1327 = vmatprep.subr.mxu0 0.0
    %1328 = vmatpush1.msra.mxu0 0.0
    %1329 = vmatprep.subr.mxu0 0.0
    %1330 = vmatpush1.msra.mxu0 0.0
    %1331 = vmatprep.subr.mxu0 0.0
    %1332 = vmatpush1.msra.mxu0 0.0
    %1333 = vmatprep.subr.mxu0 0.0
    %1334 = vmatpush1.msra.mxu0 0.0
    %1335 = vmatprep.subr.mxu0 0.0
    %1336 = vmatpush1.msra.mxu0 0.0
    %1337 = vmatprep.subr.mxu0 0.0
    %1338 = vmatpush1.msra.mxu0 0.0
    %1339 = vmatprep.subr.mxu0 0.0
    %1340 = vmatpush1.msra.mxu0 0.0
    %1341 = vmatprep.subr.mxu0 0.0
    %1342 = vmatpush1.msra.mxu0 0.0
    %1343 = vmatprep.subr.mxu0 0.0
    %1344 = vmatpush1.msra.mxu0 0.0
    %1345 = vmatprep.subr.mxu0 0.0
    %1346 = vmatpush1.msra.mxu0 0.0
    %1347 = vmatprep.subr.mxu0 0.0
    %1348 = vmatpush1.msra.mxu0 0.0
    %1349 = vmatprep.subr.mxu0 0.0
    %1350 = vmatpush1.msra.mxu0 0.0
    %1351 = vmatprep.subr.mxu0 0.0
    %1352 = vmatpush1.msra.mxu0 0.0
    %1353 = vmatprep.subr.mxu0 0.0
    %1354 = vmatpush1.msra.mxu0 0.0
    %1355 = vmatprep.subr.mxu0 0.0
    %1356 = vmatpush1.msra.mxu0 0.0
    %1357 = vmatprep.subr.mxu0 0.0
    %1358 = vmatpush1.msra.mxu0 0.0
    %1359 = vmatprep.subr.mxu0 0.0
    %1360 = vmatpush1.msra.mxu0 0.0
    %1361 = vmatprep.subr.mxu0 0.0
    %1362 = vmatpush1.msra.mxu0 0.0
    %1363 = vmatprep.subr.mxu0 0.0
    %1364 = vmatpush1.msra.mxu0 0.0
    %1365 = vmatprep.subr.mxu0 0.0
    %1366 = vmatpush1.msra.mxu0 0.0
    %1367 = vmatprep.subr.mxu0 0.0
    %1368 = vmatpush1.msra.mxu0 0.0
    %1369 = vmatprep.subr.mxu0 0.0
    %1370 = vmatpush1.msra.mxu0 0.0
    %1371 = vmatprep.subr.mxu0 0.0
    %1372 = vmatpush1.msra.mxu0 0.0
    %1373 = vmatprep.mubr.f32.mxu0 0.0
    %1374 = vmatmul.mubr.f32.gmra.mrb[0].mxu0 %v179
    %v1375 = vpop.f32.mrb[0].mxu0
    %v1376 = vadd.f32 0.0, %v1375
    %v1377 = vpop.f32.mrb[0].mxu0
    %v1378 = vadd.f32 0.0, %v1377
    %1379 = vdwg.mxu0
    %v1380 = vadd.f32 %v1291, %v1376
    %v1381 = vxor.u32 %v1380, 2147483648
    %v1382 = vmul.f32 %v1381, 1.442695
    %v1383 = vpow.pop %v1382
    %v1384 = vadd.f32 %v1383, 1.0
    %v1385 = vrcp.pop %v1384
    %v1386 = vmul.f32 1.0, %v1385
    %v1387 = vadd.f32 %v1378, %v1289
    %v1388 = vmul.f32 %v1386, %v1387
    %v1389 = vadd.f32 %v1292, %v1388
    %v1390 = vtanh.pop %v1389
    %v1391 = vsub.f32 1.0, %v1386
    %1393 = vrot.lane.b32.xlu0 %v1390, 64
    %v1394 = vpop.permute.xlu0 %1393
    %v1396 = vmul.f32 %v1391, %v1394
    %v1397 = vmul.f32 %v1386, 0.0
    %v1398 = vadd.f32 %v1396, %v1397
    %v1399 = vadd.f32 %v1398, 0.0
    %v1400 = vld [vmem:[#allocation3] sm:$0xc]
    %v1401 = vld [vmem:[#allocation3 + $0x8] sm:$0xc]
    %1403 = vrot.lane.b32.xlu0 %v1398, 64
    %v1404 = vpop.permute.xlu0 %1403
    %v1405 = vsel %vm72, %v1404, 0
    %1407 = vmatprep.subr.mxu0 %v1294
    %1408 = vmatpush1.msra.mxu0 %v1293
    %1409 = vmatprep.subr.mxu0 %v1296
    %1410 = vmatpush1.msra.mxu0 %v1295
    %1411 = vmatprep.subr.mxu0 %v1298
    %1412 = vmatpush1.msra.mxu0 %v1297
    %1413 = vmatprep.subr.mxu0 %v1300
    %1414 = vmatpush1.msra.mxu0 %v1299
    %1415 = vmatprep.subr.mxu0 %v1302
    %1416 = vmatpush1.msra.mxu0 %v1301
    %1417 = vmatprep.subr.mxu0 %v1304
    %1418 = vmatpush1.msra.mxu0 %v1303
    %1419 = vmatprep.subr.mxu0 %v1306
    %1420 = vmatpush1.msra.mxu0 %v1305
    %1421 = vmatprep.subr.mxu0 %v1308
    %1422 = vmatpush1.msra.mxu0 %v1307
    %1423 = vmatprep.subr.mxu0 0.0
    %1424 = vmatpush1.msra.mxu0 0.0
    %1425 = vmatprep.subr.mxu0 0.0
    %1426 = vmatpush1.msra.mxu0 0.0
    %1427 = vmatprep.subr.mxu0 0.0
    %1428 = vmatpush1.msra.mxu0 0.0
    %1429 = vmatprep.subr.mxu0 0.0
    %1430 = vmatpush1.msra.mxu0 0.0
    %1431 = vmatprep.subr.mxu0 0.0
    %1432 = vmatpush1.msra.mxu0 0.0
    %1433 = vmatprep.subr.mxu0 0.0
    %1434 = vmatpush1.msra.mxu0 0.0
    %1435 = vmatprep.subr.mxu0 0.0
    %1436 = vmatpush1.msra.mxu0 0.0
    %1437 = vmatprep.subr.mxu0 0.0
    %1438 = vmatpush1.msra.mxu0 0.0
    %1439 = vmatprep.subr.mxu0 0.0
    %1440 = vmatpush1.msra.mxu0 0.0
    %1441 = vmatprep.subr.mxu0 0.0
    %1442 = vmatpush1.msra.mxu0 0.0
    %1443 = vmatprep.subr.mxu0 0.0
    %1444 = vmatpush1.msra.mxu0 0.0
    %1445 = vmatprep.subr.mxu0 0.0
    %1446 = vmatpush1.msra.mxu0 0.0
    %1447 = vmatprep.subr.mxu0 0.0
    %1448 = vmatpush1.msra.mxu0 0.0
    %1449 = vmatprep.subr.mxu0 0.0
    %1450 = vmatpush1.msra.mxu0 0.0
    %1451 = vmatprep.subr.mxu0 0.0
    %1452 = vmatpush1.msra.mxu0 0.0
    %1453 = vmatprep.subr.mxu0 0.0
    %1454 = vmatpush1.msra.mxu0 0.0
    %1455 = vmatprep.subr.mxu0 0.0
    %1456 = vmatpush1.msra.mxu0 0.0
    %1457 = vmatprep.subr.mxu0 0.0
    %1458 = vmatpush1.msra.mxu0 0.0
    %1459 = vmatprep.subr.mxu0 0.0
    %1460 = vmatpush1.msra.mxu0 0.0
    %1461 = vmatprep.subr.mxu0 0.0
    %1462 = vmatpush1.msra.mxu0 0.0
    %1463 = vmatprep.subr.mxu0 0.0
    %1464 = vmatpush1.msra.mxu0 0.0
    %1465 = vmatprep.subr.mxu0 0.0
    %1466 = vmatpush1.msra.mxu0 0.0
    %1467 = vmatprep.subr.mxu0 0.0
    %1468 = vmatpush1.msra.mxu0 0.0
    %1469 = vmatprep.subr.mxu0 0.0
    %1470 = vmatpush1.msra.mxu0 0.0
    %1471 = vmatprep.mubr.f32.mxu0 0.0
    %1472 = vmatmul.mubr.f32.gmra.mrb[0].mxu0 %v1405
    %v1473 = vpop.f32.mrb[0].mxu0
    %v1474 = vadd.f32 0.0, %v1473
    %v1475 = vpop.f32.mrb[0].mxu0
    %v1476 = vadd.f32 0.0, %v1475
    %1477 = vdwg.mxu0
    %v1479 = vrot.slane %v1474, 6
    %v1481 = vadd.f32 %v1400, %v1479
    %v1482 = vxor.u32 %v1481, 2147483648
    %v1483 = vmul.f32 %v1482, 1.442695
    %v1484 = vpow.pop %v1483
    %v1485 = vadd.f32 %v1484, 1.0
    %v1486 = vrcp.pop %v1485
    %v1487 = vmul.f32 1.0, %v1486
    %v1488 = vadd.f32 %v1476, %v1289
    %v1490 = vrot.slane %v1488, 6
    %v1492 = vmul.f32 %v1487, %v1490
    %v1493 = vadd.f32 %v1401, %v1492
    %v1494 = vtanh.pop %v1493
    %v1495 = vsub.f32 1.0, %v1487
    %1497 = vrot.lane.b32.xlu0 %v1494, 64
    %v1498 = vpop.permute.xlu0 %1497
    %v1500 = vmul.f32 %v1495, %v1498
    %v1501 = vrot.slane %v1398, 6
    %v1503 = vmul.f32 %v1487, %v1501
    %v1504 = vadd.f32 %v1500, %v1503
    %v1506 = vrot.slane %v1504, 2
    %v1508 = vadd.f32 %v1399, %v1506
    %v1509 = vmax.f32 %v1398, %v1506
    %v1510 = vld [vmem:[#allocation3] sm:$0x30]
    %v1511 = vld [vmem:[#allocation3 + $0x8] sm:$0x30]
    %1512 = vrot.lane.b32.xlu0 %v1506, 64
    %v1513 = vpop.permute.xlu0 %1512
    %v1514 = vsel %vm72, %v1513, 0
    %1516 = vmatprep.subr.mxu0 %v1294
    %1517 = vmatpush1.msra.mxu0 %v1293
    %1518 = vmatprep.subr.mxu0 %v1296
    %1519 = vmatpush1.msra.mxu0 %v1295
    %1520 = vmatprep.subr.mxu0 %v1298
    %1521 = vmatpush1.msra.mxu0 %v1297
    %1522 = vmatprep.subr.mxu0 %v1300
    %1523 = vmatpush1.msra.mxu0 %v1299
    %1524 = vmatprep.subr.mxu0 %v1302
    %1525 = vmatpush1.msra.mxu0 %v1301
    %1526 = vmatprep.subr.mxu0 %v1304
    %1527 = vmatpush1.msra.mxu0 %v1303
    %1528 = vmatprep.subr.mxu0 %v1306
    %1529 = vmatpush1.msra.mxu0 %v1305
    %1530 = vmatprep.subr.mxu0 %v1308
    %1531 = vmatpush1.msra.mxu0 %v1307
    %1532 = vmatprep.subr.mxu0 0.0
    %1533 = vmatpush1.msra.mxu0 0.0
    %1534 = vmatprep.subr.mxu0 0.0
    %1535 = vmatpush1.msra.mxu0 0.0
    %1536 = vmatprep.subr.mxu0 0.0
    %1537 = vmatpush1.msra.mxu0 0.0
    %1538 = vmatprep.subr.mxu0 0.0
    %1539 = vmatpush1.msra.mxu0 0.0
    %1540 = vmatprep.subr.mxu0 0.0
    %1541 = vmatpush1.msra.mxu0 0.0
    %1542 = vmatprep.subr.mxu0 0.0
    %1543 = vmatpush1.msra.mxu0 0.0
    %1544 = vmatprep.subr.mxu0 0.0
    %1545 = vmatpush1.msra.mxu0 0.0
    %1546 = vmatprep.subr.mxu0 0.0
    %1547 = vmatpush1.msra.mxu0 0.0
    %1548 = vmatprep.subr.mxu0 0.0
    %1549 = vmatpush1.msra.mxu0 0.0
    %1550 = vmatprep.subr.mxu0 0.0
    %1551 = vmatpush1.msra.mxu0 0.0
    %1552 = vmatprep.subr.mxu0 0.0
    %1553 = vmatpush1.msra.mxu0 0.0
    %1554 = vmatprep.subr.mxu0 0.0
    %1555 = vmatpush1.msra.mxu0 0.0
    %1556 = vmatprep.subr.mxu0 0.0
    %1557 = vmatpush1.msra.mxu0 0.0
    %1558 = vmatprep.subr.mxu0 0.0
    %1559 = vmatpush1.msra.mxu0 0.0
    %1560 = vmatprep.subr.mxu0 0.0
    %1561 = vmatpush1.msra.mxu0 0.0
    %1562 = vmatprep.subr.mxu0 0.0
    %1563 = vmatpush1.msra.mxu0 0.0
    %1564 = vmatprep.subr.mxu0 0.0
    %1565 = vmatpush1.msra.mxu0 0.0
    %1566 = vmatprep.subr.mxu0 0.0
    %1567 = vmatpush1.msra.mxu0 0.0
    %1568 = vmatprep.subr.mxu0 0.0
    %1569 = vmatpush1.msra.mxu0 0.0
    %1570 = vmatprep.subr.mxu0 0.0
    %1571 = vmatpush1.msra.mxu0 0.0
    %1572 = vmatprep.subr.mxu0 0.0
    %1573 = vmatpush1.msra.mxu0 0.0
    %1574 = vmatprep.subr.mxu0 0.0
    %1575 = vmatpush1.msra.mxu0 0.0
    %1576 = vmatprep.subr.mxu0 0.0
    %1577 = vmatpush1.msra.mxu0 0.0
    %1578 = vmatprep.subr.mxu0 0.0
    %1579 = vmatpush1.msra.mxu0 0.0
    %1580 = vmatprep.mubr.f32.mxu0 0.0
    %1581 = vmatmul.mubr.f32.gmra.mrb[0].mxu0 %v1514
    %v1582 = vpop.f32.mrb[0].mxu0
    %v1583 = vadd.f32 0.0, %v1582
    %v1584 = vpop.f32.mrb[0].mxu0
    %v1585 = vadd.f32 0.0, %v1584
    %1586 = vdwg.mxu0
    %v1588 = vrot.slane %v1583, 4
    %v1590 = vadd.f32 %v1510, %v1588
    %v1591 = vxor.u32 %v1590, 2147483648
    %v1592 = vmul.f32 %v1591, 1.442695
    %v1593 = vpow.pop %v1592
    %v1594 = vadd.f32 %v1593, 1.0
    %v1595 = vrcp.pop %v1594
    %v1596 = vmul.f32 1.0, %v1595
    %v1597 = vadd.f32 %v1585, %v1289
    %v1599 = vrot.slane %v1597, 4
    %v1601 = vmul.f32 %v1596, %v1599
    %v1602 = vadd.f32 %v1511, %v1601
    %v1603 = vtanh.pop %v1602
    %v1604 = vsub.f32 1.0, %v1596
    %1606 = vrot.lane.b32.xlu0 %v1603, 64
    %v1607 = vpop.permute.xlu0 %1606
    %v1609 = vmul.f32 %v1604, %v1607
    %v1610 = vrot.slane %v1504, 6
    %v1612 = vmul.f32 %v1596, %v1610
    %v1613 = vadd.f32 %v1609, %v1612
    %v1615 = vrot.slane %v1613, 4
    %v1617 = vadd.f32 %v1508, %v1615
    %v1618 = vmax.f32 %v1509, %v1615
    %v1619 = vld [vmem:[#allocation3] sm:$0xc0]
    %v1620 = vld [vmem:[#allocation3 + $0x8] sm:$0xc0]
    %1621 = vrot.lane.b32.xlu0 %v1615, 64
    %v1622 = vpop.permute.xlu0 %1621
    %v1623 = vsel %vm72, %v1622, 0
    %1625 = vmatprep.subr.mxu0 %v1294
    %1626 = vmatpush1.msra.mxu0 %v1293
    %1627 = vmatprep.subr.mxu0 %v1296
    %1628 = vmatpush1.msra.mxu0 %v1295
    %1629 = vmatprep.subr.mxu0 %v1298
    %1630 = vmatpush1.msra.mxu0 %v1297
    %1631 = vmatprep.subr.mxu0 %v1300
    %1632 = vmatpush1.msra.mxu0 %v1299
    %1633 = vmatprep.subr.mxu0 %v1302
    %1634 = vmatpush1.msra.mxu0 %v1301
    %1635 = vmatprep.subr.mxu0 %v1304
    %1636 = vmatpush1.msra.mxu0 %v1303
    %1637 = vmatprep.subr.mxu0 %v1306
    %1638 = vmatpush1.msra.mxu0 %v1305
    %1639 = vmatprep.subr.mxu0 %v1308
    %1640 = vmatpush1.msra.mxu0 %v1307
    %1641 = vmatprep.subr.mxu0 0.0
    %1642 = vmatpush1.msra.mxu0 0.0
    %1643 = vmatprep.subr.mxu0 0.0
    %1644 = vmatpush1.msra.mxu0 0.0
    %1645 = vmatprep.subr.mxu0 0.0
    %1646 = vmatpush1.msra.mxu0 0.0
    %1647 = vmatprep.subr.mxu0 0.0
    %1648 = vmatpush1.msra.mxu0 0.0
    %1649 = vmatprep.subr.mxu0 0.0
    %1650 = vmatpush1.msra.mxu0 0.0
    %1651 = vmatprep.subr.mxu0 0.0
    %1652 = vmatpush1.msra.mxu0 0.0
    %1653 = vmatprep.subr.mxu0 0.0
    %1654 = vmatpush1.msra.mxu0 0.0
    %1655 = vmatprep.subr.mxu0 0.0
    %1656 = vmatpush1.msra.mxu0 0.0
    %1657 = vmatprep.subr.mxu0 0.0
    %1658 = vmatpush1.msra.mxu0 0.0
    %1659 = vmatprep.subr.mxu0 0.0
    %1660 = vmatpush1.msra.mxu0 0.0
    %1661 = vmatprep.subr.mxu0 0.0
    %1662 = vmatpush1.msra.mxu0 0.0
    %1663 = vmatprep.subr.mxu0 0.0
    %1664 = vmatpush1.msra.mxu0 0.0
    %1665 = vmatprep.subr.mxu0 0.0
    %1666 = vmatpush1.msra.mxu0 0.0
    %1667 = vmatprep.subr.mxu0 0.0
    %1668 = vmatpush1.msra.mxu0 0.0
    %1669 = vmatprep.subr.mxu0 0.0
    %1670 = vmatpush1.msra.mxu0 0.0
    %1671 = vmatprep.subr.mxu0 0.0
    %1672 = vmatpush1.msra.mxu0 0.0
    %1673 = vmatprep.subr.mxu0 0.0
    %1674 = vmatpush1.msra.mxu0 0.0
    %1675 = vmatprep.subr.mxu0 0.0
    %1676 = vmatpush1.msra.mxu0 0.0
    %1677 = vmatprep.subr.mxu0 0.0
    %1678 = vmatpush1.msra.mxu0 0.0
    %1679 = vmatprep.subr.mxu0 0.0
    %1680 = vmatpush1.msra.mxu0 0.0
    %1681 = vmatprep.subr.mxu0 0.0
    %1682 = vmatpush1.msra.mxu0 0.0
    %1683 = vmatprep.subr.mxu0 0.0
    %1684 = vmatpush1.msra.mxu0 0.0
    %1685 = vmatprep.subr.mxu0 0.0
    %1686 = vmatpush1.msra.mxu0 0.0
    %1687 = vmatprep.subr.mxu0 0.0
    %1688 = vmatpush1.msra.mxu0 0.0
    %1689 = vmatprep.mubr.f32.mxu0 0.0
    %1690 = vmatmul.mubr.f32.gmra.mrb[0].mxu0 %v1623
    %v1691 = vpop.f32.mrb[0].mxu0
    %v1692 = vadd.f32 0.0, %v1691
    %v1693 = vpop.f32.mrb[0].mxu0
    %v1694 = vadd.f32 0.0, %v1693
    %1695 = vdwg.mxu0
    %v1697 = vrot.slane %v1692, 2
    %v1699 = vadd.f32 %v1619, %v1697
    %v1700 = vxor.u32 %v1699, 2147483648
    %v1701 = vmul.f32 %v1700, 1.442695
    %v1702 = vpow.pop %v1701
    %v1703 = vadd.f32 %v1702, 1.0
    %v1704 = vrcp.pop %v1703
    %v1705 = vmul.f32 1.0, %v1704
    %v1706 = vadd.f32 %v1694, %v1289
    %v1708 = vrot.slane %v1706, 2
    %v1710 = vmul.f32 %v1705, %v1708
    %v1711 = vadd.f32 %v1620, %v1710
    %v1712 = vtanh.pop %v1711
    %v1713 = vsub.f32 1.0, %v1705
    %1715 = vrot.lane.b32.xlu0 %v1712, 64
    %v1716 = vpop.permute.xlu0 %1715
    %v1718 = vmul.f32 %v1713, %v1716
    %v1719 = vrot.slane %v1613, 6
    %v1721 = vmul.f32 %v1705, %v1719
    %v1722 = vadd.f32 %v1718, %v1721
    %v1724 = vrot.slane %v1722, 6
    %v1726 = vadd.f32 %v1617, %v1724
    %v1727 = vmax.f32 %v1618, %v1724
    %v1728 = vld [vmem:[#allocation3 + $0x10] sm:$0x3]
    %v1729 = vld [vmem:[#allocation3 + $0x18] sm:$0x3]
    %1730 = vrot.lane.b32.xlu0 %v1724, 64
    %v1731 = vpop.permute.xlu0 %1730
    %v1732 = vsel %vm72, %v1731, 0
    %1734 = vmatprep.subr.mxu0 %v1294
    %1735 = vmatpush1.msra.mxu0 %v1293
    %1736 = vmatprep.subr.mxu0 %v1296
    %1737 = vmatpush1.msra.mxu0 %v1295
    %1738 = vmatprep.subr.mxu0 %v1298
    %1739 = vmatpush1.msra.mxu0 %v1297
    %1740 = vmatprep.subr.mxu0 %v1300
    %1741 = vmatpush1.msra.mxu0 %v1299
    %1742 = vmatprep.subr.mxu0 %v1302
    %1743 = vmatpush1.msra.mxu0 %v1301
    %1744 = vmatprep.subr.mxu0 %v1304
    %1745 = vmatpush1.msra.mxu0 %v1303
    %1746 = vmatprep.subr.mxu0 %v1306
    %1747 = vmatpush1.msra.mxu0 %v1305
    %1748 = vmatprep.subr.mxu0 %v1308
    %1749 = vmatpush1.msra.mxu0 %v1307
    %1750 = vmatprep.subr.mxu0 0.0
    %1751 = vmatpush1.msra.mxu0 0.0
    %1752 = vmatprep.subr.mxu0 0.0
    %1753 = vmatpush1.msra.mxu0 0.0
    %1754 = vmatprep.subr.mxu0 0.0
    %1755 = vmatpush1.msra.mxu0 0.0
    %1756 = vmatprep.subr.mxu0 0.0
    %1757 = vmatpush1.msra.mxu0 0.0
    %1758 = vmatprep.subr.mxu0 0.0
    %1759 = vmatpush1.msra.mxu0 0.0
    %1760 = vmatprep.subr.mxu0 0.0
    %1761 = vmatpush1.msra.mxu0 0.0
    %1762 = vmatprep.subr.mxu0 0.0
    %1763 = vmatpush1.msra.mxu0 0.0
    %1764 = vmatprep.subr.mxu0 0.0
    %1765 = vmatpush1.msra.mxu0 0.0
    %1766 = vmatprep.subr.mxu0 0.0
    %1767 = vmatpush1.msra.mxu0 0.0
    %1768 = vmatprep.subr.mxu0 0.0
    %1769 = vmatpush1.msra.mxu0 0.0
    %1770 = vmatprep.subr.mxu0 0.0
    %1771 = vmatpush1.msra.mxu0 0.0
    %1772 = vmatprep.subr.mxu0 0.0
    %1773 = vmatpush1.msra.mxu0 0.0
    %1774 = vmatprep.subr.mxu0 0.0
    %1775 = vmatpush1.msra.mxu0 0.0
    %1776 = vmatprep.subr.mxu0 0.0
    %1777 = vmatpush1.msra.mxu0 0.0
    %1778 = vmatprep.subr.mxu0 0.0
    %1779 = vmatpush1.msra.mxu0 0.0
    %1780 = vmatprep.subr.mxu0 0.0
    %1781 = vmatpush1.msra.mxu0 0.0
    %1782 = vmatprep.subr.mxu0 0.0
    %1783 = vmatpush1.msra.mxu0 0.0
    %1784 = vmatprep.subr.mxu0 0.0
    %1785 = vmatpush1.msra.mxu0 0.0
    %1786 = vmatprep.subr.mxu0 0.0
    %1787 = vmatpush1.msra.mxu0 0.0
    %1788 = vmatprep.subr.mxu0 0.0
    %1789 = vmatpush1.msra.mxu0 0.0
    %1790 = vmatprep.subr.mxu0 0.0
    %1791 = vmatpush1.msra.mxu0 0.0
    %1792 = vmatprep.subr.mxu0 0.0
    %1793 = vmatpush1.msra.mxu0 0.0
    %1794 = vmatprep.subr.mxu0 0.0
    %1795 = vmatpush1.msra.mxu0 0.0
    %1796 = vmatprep.subr.mxu0 0.0
    %1797 = vmatpush1.msra.mxu0 0.0
    %1798 = vmatprep.mubr.f32.mxu0 0.0
    %1799 = vmatmul.mubr.f32.gmra.mrb[0].mxu0 %v1732
    %v1800 = vpop.f32.mrb[0].mxu0
    %v1801 = vadd.f32 0.0, %v1800
    %v1802 = vpop.f32.mrb[0].mxu0
    %v1803 = vadd.f32 0.0, %v1802
    %1804 = vdwg.mxu0
    %v1805 = vadd.f32 %v1728, %v1801
    %v1806 = vxor.u32 %v1805, 2147483648
    %v1807 = vmul.f32 %v1806, 1.442695
    %v1808 = vpow.pop %v1807
    %v1809 = vadd.f32 %v1808, 1.0
    %v1810 = vrcp.pop %v1809
    %v1811 = vmul.f32 1.0, %v1810
    %v1812 = vadd.f32 %v1803, %v1289
    %v1813 = vmul.f32 %v1811, %v1812
    %v1814 = vadd.f32 %v1729, %v1813
    %v1815 = vtanh.pop %v1814
    %v1816 = vsub.f32 1.0, %v1811
    %1818 = vrot.lane.b32.xlu0 %v1815, 64
    %v1819 = vpop.permute.xlu0 %1818
    %v1821 = vmul.f32 %v1816, %v1819
    %v1822 = vmul.f32 %v1811, %v1724
    %v1823 = vadd.f32 %v1821, %v1822
    %v1824 = vadd.f32 %v1726, %v1823
    %v1825 = vmax.f32 %v1727, %v1823
    %v1826 = vld [vmem:[#allocation3 + $0x10] sm:$0xc]
    %v1827 = vld [vmem:[#allocation3 + $0x18] sm:$0xc]
    %1829 = vrot.lane.b32.xlu0 %v1823, 64
    %v1830 = vpop.permute.xlu0 %1829
    %v1831 = vsel %vm72, %v1830, 0
    %1833 = vmatprep.subr.mxu0 %v1294
    %1834 = vmatpush1.msra.mxu0 %v1293
    %1835 = vmatprep.subr.mxu0 %v1296
    %1836 = vmatpush1.msra.mxu0 %v1295
    %1837 = vmatprep.subr.mxu0 %v1298
    %1838 = vmatpush1.msra.mxu0 %v1297
    %1839 = vmatprep.subr.mxu0 %v1300
    %1840 = vmatpush1.msra.mxu0 %v1299
    %1841 = vmatprep.subr.mxu0 %v1302
    %1842 = vmatpush1.msra.mxu0 %v1301
    %1843 = vmatprep.subr.mxu0 %v1304
    %1844 = vmatpush1.msra.mxu0 %v1303
    %1845 = vmatprep.subr.mxu0 %v1306
    %1846 = vmatpush1.msra.mxu0 %v1305
    %1847 = vmatprep.subr.mxu0 %v1308
    %1848 = vmatpush1.msra.mxu0 %v1307
    %1849 = vmatprep.subr.mxu0 0.0
    %1850 = vmatpush1.msra.mxu0 0.0
    %1851 = vmatprep.subr.mxu0 0.0
    %1852 = vmatpush1.msra.mxu0 0.0
    %1853 = vmatprep.subr.mxu0 0.0
    %1854 = vmatpush1.msra.mxu0 0.0
    %1855 = vmatprep.subr.mxu0 0.0
    %1856 = vmatpush1.msra.mxu0 0.0
    %1857 = vmatprep.subr.mxu0 0.0
    %1858 = vmatpush1.msra.mxu0 0.0
    %1859 = vmatprep.subr.mxu0 0.0
    %1860 = vmatpush1.msra.mxu0 0.0
    %1861 = vmatprep.subr.mxu0 0.0
    %1862 = vmatpush1.msra.mxu0 0.0
    %1863 = vmatprep.subr.mxu0 0.0
    %1864 = vmatpush1.msra.mxu0 0.0
    %1865 = vmatprep.subr.mxu0 0.0
    %1866 = vmatpush1.msra.mxu0 0.0
    %1867 = vmatprep.subr.mxu0 0.0
    %1868 = vmatpush1.msra.mxu0 0.0
    %1869 = vmatprep.subr.mxu0 0.0
    %1870 = vmatpush1.msra.mxu0 0.0
    %1871 = vmatprep.subr.mxu0 0.0
    %1872 = vmatpush1.msra.mxu0 0.0
    %1873 = vmatprep.subr.mxu0 0.0
    %1874 = vmatpush1.msra.mxu0 0.0
    %1875 = vmatprep.subr.mxu0 0.0
    %1876 = vmatpush1.msra.mxu0 0.0
    %1877 = vmatprep.subr.mxu0 0.0
    %1878 = vmatpush1.msra.mxu0 0.0
    %1879 = vmatprep.subr.mxu0 0.0
    %1880 = vmatpush1.msra.mxu0 0.0
    %1881 = vmatprep.subr.mxu0 0.0
    %1882 = vmatpush1.msra.mxu0 0.0
    %1883 = vmatprep.subr.mxu0 0.0
    %1884 = vmatpush1.msra.mxu0 0.0
    %1885 = vmatprep.subr.mxu0 0.0
    %1886 = vmatpush1.msra.mxu0 0.0
    %1887 = vmatprep.subr.mxu0 0.0
    %1888 = vmatpush1.msra.mxu0 0.0
    %1889 = vmatprep.subr.mxu0 0.0
    %1890 = vmatpush1.msra.mxu0 0.0
    %1891 = vmatprep.subr.mxu0 0.0
    %1892 = vmatpush1.msra.mxu0 0.0
    %1893 = vmatprep.subr.mxu0 0.0
    %1894 = vmatpush1.msra.mxu0 0.0
    %1895 = vmatprep.subr.mxu0 0.0
    %1896 = vmatpush1.msra.mxu0 0.0
    %1897 = vmatprep.mubr.f32.mxu0 0.0
    %1898 = vmatmul.mubr.f32.gmra.mrb[0].mxu0 %v1831
    %v1899 = vpop.f32.mrb[0].mxu0
    %v1900 = vadd.f32 0.0, %v1899
    %v1901 = vpop.f32.mrb[0].mxu0
    %v1902 = vadd.f32 0.0, %v1901
    %1903 = vdwg.mxu0
    %v1905 = vrot.slane %v1900, 6
    %v1907 = vadd.f32 %v1826, %v1905
    %v1908 = vxor.u32 %v1907, 2147483648
    %v1909 = vmul.f32 %v1908, 1.442695
    %v1910 = vpow.pop %v1909
    %v1911 = vadd.f32 %v1910, 1.0
    %v1912 = vrcp.pop %v1911
    %v1913 = vmul.f32 1.0, %v1912
    %v1914 = vadd.f32 %v1902, %v1289
    %v1916 = vrot.slane %v1914, 6
    %v1918 = vmul.f32 %v1913, %v1916
    %v1919 = vadd.f32 %v1827, %v1918
    %v1920 = vtanh.pop %v1919
    %v1921 = vsub.f32 1.0, %v1913
    %1923 = vrot.lane.b32.xlu0 %v1920, 64
    %v1924 = vpop.permute.xlu0 %1923
    %v1926 = vmul.f32 %v1921, %v1924
    %v1927 = vrot.slane %v1823, 6
    %v1929 = vmul.f32 %v1913, %v1927
    %v1930 = vadd.f32 %v1926, %v1929
    %v1932 = vrot.slane %v1930, 2
    %v1934 = vadd.f32 %v1824, %v1932
    %v1935 = vmax.f32 %v1825, %v1932
    %v1936 = vld [vmem:[#allocation3 + $0x10] sm:$0x30]
    %v1937 = vld [vmem:[#allocation3 + $0x18] sm:$0x30]
    %1938 = vrot.lane.b32.xlu0 %v1932, 64
    %v1939 = vpop.permute.xlu0 %1938
    %v1940 = vsel %vm72, %v1939, 0
    %1942 = vmatprep.subr.mxu0 %v1294
    %1943 = vmatpush1.msra.mxu0 %v1293
    %1944 = vmatprep.subr.mxu0 %v1296
    %1945 = vmatpush1.msra.mxu0 %v1295
    %1946 = vmatprep.subr.mxu0 %v1298
    %1947 = vmatpush1.msra.mxu0 %v1297
    %1948 = vmatprep.subr.mxu0 %v1300
    %1949 = vmatpush1.msra.mxu0 %v1299
    %1950 = vmatprep.subr.mxu0 %v1302
    %1951 = vmatpush1.msra.mxu0 %v1301
    %1952 = vmatprep.subr.mxu0 %v1304
    %1953 = vmatpush1.msra.mxu0 %v1303
    %1954 = vmatprep.subr.mxu0 %v1306
    %1955 = vmatpush1.msra.mxu0 %v1305
    %1956 = vmatprep.subr.mxu0 %v1308
    %1957 = vmatpush1.msra.mxu0 %v1307
    %1958 = vmatprep.subr.mxu0 0.0
    %1959 = vmatpush1.msra.mxu0 0.0
    %1960 = vmatprep.subr.mxu0 0.0
    %1961 = vmatpush1.msra.mxu0 0.0
    %1962 = vmatprep.subr.mxu0 0.0
    %1963 = vmatpush1.msra.mxu0 0.0
    %1964 = vmatprep.subr.mxu0 0.0
    %1965 = vmatpush1.msra.mxu0 0.0
    %1966 = vmatprep.subr.mxu0 0.0
    %1967 = vmatpush1.msra.mxu0 0.0
    %1968 = vmatprep.subr.mxu0 0.0
    %1969 = vmatpush1.msra.mxu0 0.0
    %1970 = vmatprep.subr.mxu0 0.0
    %1971 = vmatpush1.msra.mxu0 0.0
    %1972 = vmatprep.subr.mxu0 0.0
    %1973 = vmatpush1.msra.mxu0 0.0
    %1974 = vmatprep.subr.mxu0 0.0
    %1975 = vmatpush1.msra.mxu0 0.0
    %1976 = vmatprep.subr.mxu0 0.0
    %1977 = vmatpush1.msra.mxu0 0.0
    %1978 = vmatprep.subr.mxu0 0.0
    %1979 = vmatpush1.msra.mxu0 0.0
    %1980 = vmatprep.subr.mxu0 0.0
    %1981 = vmatpush1.msra.mxu0 0.0
    %1982 = vmatprep.subr.mxu0 0.0
    %1983 = vmatpush1.msra.mxu0 0.0
    %1984 = vmatprep.subr.mxu0 0.0
    %1985 = vmatpush1.msra.mxu0 0.0
    %1986 = vmatprep.subr.mxu0 0.0
    %1987 = vmatpush1.msra.mxu0 0.0
    %1988 = vmatprep.subr.mxu0 0.0
    %1989 = vmatpush1.msra.mxu0 0.0
    %1990 = vmatprep.subr.mxu0 0.0
    %1991 = vmatpush1.msra.mxu0 0.0
    %1992 = vmatprep.subr.mxu0 0.0
    %1993 = vmatpush1.msra.mxu0 0.0
    %1994 = vmatprep.subr.mxu0 0.0
    %1995 = vmatpush1.msra.mxu0 0.0
    %1996 = vmatprep.subr.mxu0 0.0
    %1997 = vmatpush1.msra.mxu0 0.0
    %1998 = vmatprep.subr.mxu0 0.0
    %1999 = vmatpush1.msra.mxu0 0.0
    %2000 = vmatprep.subr.mxu0 0.0
    %2001 = vmatpush1.msra.mxu0 0.0
    %2002 = vmatprep.subr.mxu0 0.0
    %2003 = vmatpush1.msra.mxu0 0.0
    %2004 = vmatprep.subr.mxu0 0.0
    %2005 = vmatpush1.msra.mxu0 0.0
    %2006 = vmatprep.mubr.f32.mxu0 0.0
    %2007 = vmatmul.mubr.f32.gmra.mrb[0].mxu0 %v1940
    %v2008 = vpop.f32.mrb[0].mxu0
    %v2009 = vadd.f32 0.0, %v2008
    %v2010 = vpop.f32.mrb[0].mxu0
    %v2011 = vadd.f32 0.0, %v2010
    %2012 = vdwg.mxu0
    %v2014 = vrot.slane %v2009, 4
    %v2016 = vadd.f32 %v1936, %v2014
    %v2017 = vxor.u32 %v2016, 2147483648
    %v2018 = vmul.f32 %v2017, 1.442695
    %v2019 = vpow.pop %v2018
    %v2020 = vadd.f32 %v2019, 1.0
    %v2021 = vrcp.pop %v2020
    %v2022 = vmul.f32 1.0, %v2021
    %v2023 = vadd.f32 %v2011, %v1289
    %v2025 = vrot.slane %v2023, 4
    %v2027 = vmul.f32 %v2022, %v2025
    %v2028 = vadd.f32 %v1937, %v2027
    %v2029 = vtanh.pop %v2028
    %v2030 = vsub.f32 1.0, %v2022
    %2032 = vrot.lane.b32.xlu0 %v2029, 64
    %v2033 = vpop.permute.xlu0 %2032
    %v2035 = vmul.f32 %v2030, %v2033
    %v2036 = vrot.slane %v1930, 6
    %v2038 = vmul.f32 %v2022, %v2036
    %v2039 = vadd.f32 %v2035, %v2038
    %v2041 = vrot.slane %v2039, 4
    %v2043 = vadd.f32 %v1934, %v2041
    %v2044 = vmax.f32 %v1935, %v2041
    %v2045 = vld [vmem:[#allocation3 + $0x10] sm:$0xc0]
    %v2046 = vld [vmem:[#allocation3 + $0x18] sm:$0xc0]
    %2047 = vrot.lane.b32.xlu0 %v2041, 64
    %v2048 = vpop.permute.xlu0 %2047
    %v2049 = vsel %vm72, %v2048, 0
    %2051 = vmatprep.subr.mxu0 %v1294
    %2052 = vmatpush1.msra.mxu0 %v1293
    %2053 = vmatprep.subr.mxu0 %v1296
    %2054 = vmatpush1.msra.mxu0 %v1295
    %2055 = vmatprep.subr.mxu0 %v1298
    %2056 = vmatpush1.msra.mxu0 %v1297
    %2057 = vmatprep.subr.mxu0 %v1300
    %2058 = vmatpush1.msra.mxu0 %v1299
    %2059 = vmatprep.subr.mxu0 %v1302
    %2060 = vmatpush1.msra.mxu0 %v1301
    %2061 = vmatprep.subr.mxu0 %v1304
    %2062 = vmatpush1.msra.mxu0 %v1303
    %2063 = vmatprep.subr.mxu0 %v1306
    %2064 = vmatpush1.msra.mxu0 %v1305
    %2065 = vmatprep.subr.mxu0 %v1308
    %2066 = vmatpush1.msra.mxu0 %v1307
    %2067 = vmatprep.subr.mxu0 0.0
    %2068 = vmatpush1.msra.mxu0 0.0
    %2069 = vmatprep.subr.mxu0 0.0
    %2070 = vmatpush1.msra.mxu0 0.0
    %2071 = vmatprep.subr.mxu0 0.0
    %2072 = vmatpush1.msra.mxu0 0.0
    %2073 = vmatprep.subr.mxu0 0.0
    %2074 = vmatpush1.msra.mxu0 0.0
    %2075 = vmatprep.subr.mxu0 0.0
    %2076 = vmatpush1.msra.mxu0 0.0
    %2077 = vmatprep.subr.mxu0 0.0
    %2078 = vmatpush1.msra.mxu0 0.0
    %2079 = vmatprep.subr.mxu0 0.0
    %2080 = vmatpush1.msra.mxu0 0.0
    %2081 = vmatprep.subr.mxu0 0.0
    %2082 = vmatpush1.msra.mxu0 0.0
    %2083 = vmatprep.subr.mxu0 0.0
    %2084 = vmatpush1.msra.mxu0 0.0
    %2085 = vmatprep.subr.mxu0 0.0
    %2086 = vmatpush1.msra.mxu0 0.0
    %2087 = vmatprep.subr.mxu0 0.0
    %2088 = vmatpush1.msra.mxu0 0.0
    %2089 = vmatprep.subr.mxu0 0.0
    %2090 = vmatpush1.msra.mxu0 0.0
    %2091 = vmatprep.subr.mxu0 0.0
    %2092 = vmatpush1.msra.mxu0 0.0
    %2093 = vmatprep.subr.mxu0 0.0
    %2094 = vmatpush1.msra.mxu0 0.0
    %2095 = vmatprep.subr.mxu0 0.0
    %2096 = vmatpush1.msra.mxu0 0.0
    %2097 = vmatprep.subr.mxu0 0.0
    %2098 = vmatpush1.msra.mxu0 0.0
    %2099 = vmatprep.subr.mxu0 0.0
    %2100 = vmatpush1.msra.mxu0 0.0
    %2101 = vmatprep.subr.mxu0 0.0
    %2102 = vmatpush1.msra.mxu0 0.0
    %2103 = vmatprep.subr.mxu0 0.0
    %2104 = vmatpush1.msra.mxu0 0.0
    %2105 = vmatprep.subr.mxu0 0.0
    %2106 = vmatpush1.msra.mxu0 0.0
    %2107 = vmatprep.subr.mxu0 0.0
    %2108 = vmatpush1.msra.mxu0 0.0
    %2109 = vmatprep.subr.mxu0 0.0
    %2110 = vmatpush1.msra.mxu0 0.0
    %2111 = vmatprep.subr.mxu0 0.0
    %2112 = vmatpush1.msra.mxu0 0.0
    %2113 = vmatprep.subr.mxu0 0.0
    %2114 = vmatpush1.msra.mxu0 0.0
    %2115 = vmatprep.mubr.f32.mxu0 0.0
    %2116 = vmatmul.mubr.f32.gmra.mrb[0].mxu0 %v2049
    %v2117 = vpop.f32.mrb[0].mxu0
    %v2118 = vadd.f32 0.0, %v2117
    %v2119 = vpop.f32.mrb[0].mxu0
    %v2120 = vadd.f32 0.0, %v2119
    %2121 = vdwg.mxu0
    %v2123 = vrot.slane %v2118, 2
    %v2125 = vadd.f32 %v2045, %v2123
    %v2126 = vxor.u32 %v2125, 2147483648
    %v2127 = vmul.f32 %v2126, 1.442695
    %v2128 = vpow.pop %v2127
    %v2129 = vadd.f32 %v2128, 1.0
    %v2130 = vrcp.pop %v2129
    %v2131 = vmul.f32 1.0, %v2130
    %v2132 = vadd.f32 %v2120, %v1289
    %v2134 = vrot.slane %v2132, 2
    %v2136 = vmul.f32 %v2131, %v2134
    %v2137 = vadd.f32 %v2046, %v2136
    %v2138 = vtanh.pop %v2137
    %v2139 = vsub.f32 1.0, %v2131
    %2141 = vrot.lane.b32.xlu0 %v2138, 64
    %v2142 = vpop.permute.xlu0 %2141
    %v2144 = vmul.f32 %v2139, %v2142
    %v2145 = vrot.slane %v2039, 6
    %v2147 = vmul.f32 %v2131, %v2145
    %v2148 = vadd.f32 %v2144, %v2147
    %v2150 = vrot.slane %v2148, 6
    %v2152 = vadd.f32 %v2043, %v2150
    %v2153 = vmax.f32 %v2044, %v2150
    %2154 = vrot.lane.b32.xlu0 %v2148, 64
    %v2155 = vpop.permute.xlu0 %2154
    %v2157 = vrot.slane %v2148, 1
    %2158 = vrot.lane.b32.xlu0 %v2157, 96
    %v2159 = vpop.permute.xlu0 %2158
    %vm2161 = vcmask 261120
    %v2162 = vsel %vm2161, %v2155, %v2159
    %2163 = vrot.lane.b32.xlu0 %v2148, 32
    %v2164 = vpop.permute.xlu0 %2163
    %2166 = vrot.lane.b32.xlu0 %v2157, 64
    %v2167 = vpop.permute.xlu0 %2166
    %v2169 = vsel %vm2161, %v2164, %v2167
    %v2171 = vrot.slane %v2162, 6
    %v2174 = vrot.slane %v2169, 5
    %vm2176 = vcmask 1040384
    %v2177 = vsel %vm2176, %v2171, %v2174
    %v2178 = vmul.f32 %v2152, 0.125
    %2180 = vrot.lane.b32.xlu0 %v2153, 64
    %v2181 = vpop.permute.xlu0 %2180
    %v2182 = vsel %vm72, %v2177, %v2178
    %v2183 = vld [vmem:[%s8] sm:$0xff]
    %v2184 = vld [vmem:[%s8 + $0x8] sm:$0xff]
    %v2185 = vld [vmem:[%s8 + $0x10] sm:$0xff]
    %v2186 = vld [vmem:[%s8 + $0x18] sm:$0xff]
    %v2187 = vld [vmem:[%s8 + $0x20] sm:$0xff]
    %v2188 = vld [vmem:[%s8 + $0x28] sm:$0xff]
    %v2189 = vld [vmem:[%s8 + $0x30] sm:$0xff]
    %v2190 = vld [vmem:[%s8 + $0x38] sm:$0xff]
    %v2191 = vld [vmem:[%s8 + $0x40] sm:$0xff]
    %v2192 = vld [vmem:[%s8 + $0x48] sm:$0xff]
    %v2193 = vld [vmem:[%s8 + $0x50] sm:$0xff]
    %v2194 = vld [vmem:[%s8 + $0x58] sm:$0xff]
    %v2195 = vld [vmem:[%s8 + $0x60] sm:$0xff]
    %v2196 = vld [vmem:[%s8 + $0x68] sm:$0xff]
    %v2197 = vld [vmem:[%s8 + $0x70] sm:$0xff]
    %v2198 = vld [vmem:[%s8 + $0x78] sm:$0xff]
    %v2199 = vld [vmem:[%s8 + $0x80] sm:$0xff]
    %v2200 = vld [vmem:[%s8 + $0x88] sm:$0xff]
    %v2201 = vld [vmem:[%s8 + $0x90] sm:$0xff]
    %v2202 = vld [vmem:[%s8 + $0x98] sm:$0xff]
    %v2203 = vld [vmem:[%s8 + $0xa0] sm:$0xff]
    %v2204 = vld [vmem:[%s8 + $0xa8] sm:$0xff]
    %v2205 = vld [vmem:[%s8 + $0xb0] sm:$0xff]
    %v2206 = vld [vmem:[%s8 + $0xb8] sm:$0xff]
    %v2207 = vld [vmem:[%s9] sm:$0x1]
    %v2209 = vlaneseq
    %v2210 = vshrl.u32 %v2209, 7
    %v2211 = vsub.s32 0, %v2210
    %v2212 = vrot.slane %v2207, %v2211
    %v2214 = vsel %vm72, %v2181, 0
    %2216 = vmatprep.subr.mxu0 0.0
    %2217 = vmatpush1.msra.mxu0 %v2183
    %2218 = vmatprep.subr.mxu0 0.0
    %2219 = vmatpush1.msra.mxu0 %v2184
    %2220 = vmatprep.subr.mxu0 0.0
    %2221 = vmatpush1.msra.mxu0 %v2185
    %2222 = vmatprep.subr.mxu0 0.0
    %2223 = vmatpush1.msra.mxu0 %v2186
    %2224 = vmatprep.subr.mxu0 0.0
    %2225 = vmatpush1.msra.mxu0 %v2187
    %2226 = vmatprep.subr.mxu0 0.0
    %2227 = vmatpush1.msra.mxu0 %v2188
    %2228 = vmatprep.subr.mxu0 0.0
    %2229 = vmatpush1.msra.mxu0 %v2189
    %2230 = vmatprep.subr.mxu0 0.0
    %2231 = vmatpush1.msra.mxu0 %v2190
    %2232 = vmatprep.subr.mxu0 0.0
    %2233 = vmatpush1.msra.mxu0 %v2191
    %2234 = vmatprep.subr.mxu0 0.0
    %2235 = vmatpush1.msra.mxu0 %v2192
    %2236 = vmatprep.subr.mxu0 0.0
    %2237 = vmatpush1.msra.mxu0 %v2193
    %2238 = vmatprep.subr.mxu0 0.0
    %2239 = vmatpush1.msra.mxu0 %v2194
    %2240 = vmatprep.subr.mxu0 0.0
    %2241 = vmatpush1.msra.mxu0 %v2195
    %2242 = vmatprep.subr.mxu0 0.0
    %2243 = vmatpush1.msra.mxu0 %v2196
    %2244 = vmatprep.subr.mxu0 0.0
    %2245 = vmatpush1.msra.mxu0 %v2197
    %2246 = vmatprep.subr.mxu0 0.0
    %2247 = vmatpush1.msra.mxu0 %v2198
    %2248 = vmatprep.subr.mxu0 0.0
    %2249 = vmatpush1.msra.mxu0 %v2199
    %2250 = vmatprep.subr.mxu0 0.0
    %2251 = vmatpush1.msra.mxu0 %v2200
    %2252 = vmatprep.subr.mxu0 0.0
    %2253 = vmatpush1.msra.mxu0 %v2201
    %2254 = vmatprep.subr.mxu0 0.0
    %2255 = vmatpush1.msra.mxu0 %v2202
    %2256 = vmatprep.subr.mxu0 0.0
    %2257 = vmatpush1.msra.mxu0 %v2203
    %2258 = vmatprep.subr.mxu0 0.0
    %2259 = vmatpush1.msra.mxu0 %v2204
    %2260 = vmatprep.subr.mxu0 0.0
    %2261 = vmatpush1.msra.mxu0 %v2205
    %2262 = vmatprep.subr.mxu0 0.0
    %2263 = vmatpush1.msra.mxu0 %v2206
    %2264 = vmatprep.subr.mxu0 0.0
    %2265 = vmatpush1.msra.mxu0 0.0
    %2266 = vmatprep.subr.mxu0 0.0
    %2267 = vmatpush1.msra.mxu0 0.0
    %2268 = vmatprep.subr.mxu0 0.0
    %2269 = vmatpush1.msra.mxu0 0.0
    %2270 = vmatprep.subr.mxu0 0.0
    %2271 = vmatpush1.msra.mxu0 0.0
    %2272 = vmatprep.subr.mxu0 0.0
    %2273 = vmatpush1.msra.mxu0 0.0
    %2274 = vmatprep.subr.mxu0 0.0
    %2275 = vmatpush1.msra.mxu0 0.0
    %2276 = vmatprep.subr.mxu0 0.0
    %2277 = vmatpush1.msra.mxu0 0.0
    %2278 = vmatprep.subr.mxu0 0.0
    %2279 = vmatpush1.msra.mxu0 0.0
    %2280 = vmatprep.mubr.f32.mxu0 %v2214
    %2281 = vmatmul.mubr.f32.gmra.mrb[0].mxu0 %v2182
    %v2282 = vpop.f32.mrb[0].mxu0
    %v2283 = vadd.f32 %v2212, %v2282
    %v2284 = vpop.f32.mrb[0].mxu0
    %2285 = vdwg.mxu0
    %v2286 = vmax.f32 %v2283, 0.0
    %v2287 = vld [vmem:[%s10] sm:$0xff]
    %v2288 = vld [vmem:[%s10 + $0x8] sm:$0xff]
    %v2289 = vld [vmem:[%s10 + $0x10] sm:$0xff]
    %v2290 = vld [vmem:[%s10 + $0x18] sm:$0xff]
    %v2291 = vld [vmem:[%s11] sm:$0x1]
    %v2293 = vlaneseq
    %v2294 = vshrl.u32 %v2293, 7
    %v2295 = vsub.s32 0, %v2294
    %v2296 = vrot.slane %v2291, %v2295
    %v2299 = vsel %vm2161, %v2286, 0
    %2301 = vmatprep.subr.mxu0 0.0
    %2302 = vmatpush1.msra.mxu0 %v2287
    %2303 = vmatprep.subr.mxu0 0.0
    %2304 = vmatpush1.msra.mxu0 %v2288
    %2305 = vmatprep.subr.mxu0 0.0
    %2306 = vmatpush1.msra.mxu0 %v2289
    %2307 = vmatprep.subr.mxu0 0.0
    %2308 = vmatpush1.msra.mxu0 %v2290
    %2309 = vmatprep.subr.mxu0 0.0
    %2310 = vmatpush1.msra.mxu0 0.0
    %2311 = vmatprep.subr.mxu0 0.0
    %2312 = vmatpush1.msra.mxu0 0.0
    %2313 = vmatprep.subr.mxu0 0.0
    %2314 = vmatpush1.msra.mxu0 0.0
    %2315 = vmatprep.subr.mxu0 0.0
    %2316 = vmatpush1.msra.mxu0 0.0
    %2317 = vmatprep.subr.mxu0 0.0
    %2318 = vmatpush1.msra.mxu0 0.0
    %2319 = vmatprep.subr.mxu0 0.0
    %2320 = vmatpush1.msra.mxu0 0.0
    %2321 = vmatprep.subr.mxu0 0.0
    %2322 = vmatpush1.msra.mxu0 0.0
    %2323 = vmatprep.subr.mxu0 0.0
    %2324 = vmatpush1.msra.mxu0 0.0
    %2325 = vmatprep.subr.mxu0 0.0
    %2326 = vmatpush1.msra.mxu0 0.0
    %2327 = vmatprep.subr.mxu0 0.0
    %2328 = vmatpush1.msra.mxu0 0.0
    %2329 = vmatprep.subr.mxu0 0.0
    %2330 = vmatpush1.msra.mxu0 0.0
    %2331 = vmatprep.subr.mxu0 0.0
    %2332 = vmatpush1.msra.mxu0 0.0
    %2333 = vmatprep.subr.mxu0 0.0
    %2334 = vmatpush1.msra.mxu0 0.0
    %2335 = vmatprep.subr.mxu0 0.0
    %2336 = vmatpush1.msra.mxu0 0.0
    %2337 = vmatprep.subr.mxu0 0.0
    %2338 = vmatpush1.msra.mxu0 0.0
    %2339 = vmatprep.subr.mxu0 0.0
    %2340 = vmatpush1.msra.mxu0 0.0
    %2341 = vmatprep.subr.mxu0 0.0
    %2342 = vmatpush1.msra.mxu0 0.0
    %2343 = vmatprep.subr.mxu0 0.0
    %2344 = vmatpush1.msra.mxu0 0.0
    %2345 = vmatprep.subr.mxu0 0.0
    %2346 = vmatpush1.msra.mxu0 0.0
    %2347 = vmatprep.subr.mxu0 0.0
    %2348 = vmatpush1.msra.mxu0 0.0
    %2349 = vmatprep.subr.mxu0 0.0
    %2350 = vmatpush1.msra.mxu0 0.0
    %2351 = vmatprep.subr.mxu0 0.0
    %2352 = vmatpush1.msra.mxu0 0.0
    %2353 = vmatprep.subr.mxu0 0.0
    %2354 = vmatpush1.msra.mxu0 0.0
    %2355 = vmatprep.subr.mxu0 0.0
    %2356 = vmatpush1.msra.mxu0 0.0
    %2357 = vmatprep.subr.mxu0 0.0
    %2358 = vmatpush1.msra.mxu0 0.0
    %2359 = vmatprep.subr.mxu0 0.0
    %2360 = vmatpush1.msra.mxu0 0.0
    %2361 = vmatprep.subr.mxu0 0.0
    %2362 = vmatpush1.msra.mxu0 0.0
    %2363 = vmatprep.subr.mxu0 0.0
    %2364 = vmatpush1.msra.mxu0 0.0
    %2365 = vmatprep.mubr.f32.mxu0 0.0
    %2366 = vmatmul.mubr.f32.gmra.mrb[0].mxu0 %v2299
    %v2367 = vpop.f32.mrb[0].mxu0
    %v2368 = vadd.f32 %v2296, %v2367
    %v2369 = vpop.f32.mrb[0].mxu0
    %2370 = vdwg.mxu0
    %vm2371 = vcmask 50176
    %2372 = vst.msk [vmem:[#allocation4] sm:$0x3] %vm2371, %v2368
    // Predicated region
    $region50: #{lstm_gru_forward.1} parent=1 // pred_check
      _
    $region51: #{lstm_gru_forward.1} parent=1 // pred_check_branch
      %2374 = sbr.rel (0) target = $region53
    $region52: #{lstm_gru_forward.1} parent=1 // pred_region
      %s2376 = ssub.s32 32, 32
      %2377 = vsyncadd [#allocation5], %s2376
      %s2379 = sshll.u32 [#allocation4], 4
      %s2380 = int_to_ptr.vmem [resolvable:$true] %s2379
      %2382 = dma.vmem_to_hbm [thread:$0]  %s2380, 32, %s12, [#allocation5]
    $region53: #{lstm_gru_forward.1} parent=1 // pred_fallthru
      _
    // Predicated region
    $region54: #{lstm_gru_forward.1} parent=1 // pred_check
      _
    $region55: #{lstm_gru_forward.1} parent=1 // pred_check_branch
      %2384 = sbr.rel (0) target = $region57
    $region56: #{lstm_gru_forward.1} parent=1 // pred_region
      %2385 = dma.done [#allocation5], 32
    $region57: #{lstm_gru_forward.1} parent=1 // pred_fallthru
      _
    %2386 = vsyncpa [#allocation5], 1

</llo_original>
